<compile_context>
chip_gen: v7x
topology: tpu7x:2x2x1
jax: 0.10.0
libtpu: 0.0.40
codegen_flags: <defaults>
</compile_context>

<pallas_src>
import functools
import math

import jax
import jax.numpy as jnp
from jax.experimental import pallas as pl
from jax.experimental.pallas import tpu as pltpu

LN_EPS = 1e-5  # PyTorch nn.LayerNorm default

# Fixed ordering of the per-block (stacked over n_blocks) parameter arrays.
PER_BLOCK = [
    "sa_wq", "sa_bq", "sa_wk", "sa_bk", "sa_wv", "sa_bv", "sa_wo", "sa_bo",
    "ca_wq", "ca_bq", "ca_wk", "ca_bk", "ca_wv", "ca_bv", "ca_wo", "ca_bo",
    "ff_w1", "ff_b1", "ff_w2", "ff_b2",
    "ln1_g", "ln1_b", "ln2_g", "ln2_b", "ln3_g", "ln3_b",
]
_BF16_KEYS = {"sa_wq", "sa_wk", "sa_wv", "sa_wo",
              "ca_wq", "ca_wk", "ca_wv", "ca_wo",
              "ff_w1", "ff_w2"}


# ----------------------------- in-kernel helpers ---------------------------- #

def _mha(xq_b, kv_b, wq, bq, wk, bk, wv, bv, wo, bo):
    """Multi-head attention for one batch element.

    xq_b / kv_b : (H, Sq, D) / (H, Skv, D) bf16 (query / key-value activations,
                  broadcast over heads).
    wq/wk/wv    : (H, D, hd) bf16 (1/sqrt(hd) already folded into wq/bq).
    wo          : (H, hd, D) bf16.  Biases are float32.  Returns (Sq, D) float32.
    """
    q = jnp.einsum('hsd,hdk->hsk', xq_b, wq, preferred_element_type=jnp.float32) + bq
    k = jnp.einsum('hsd,hdk->hsk', kv_b, wk, preferred_element_type=jnp.float32) + bk
    v = jnp.einsum('hsd,hdk->hsk', kv_b, wv, preferred_element_type=jnp.float32) + bv

    s = jnp.einsum('hqd,hkd->hqk', q.astype(jnp.bfloat16), k.astype(jnp.bfloat16),
                   preferred_element_type=jnp.float32)
    s = s - jnp.max(s, axis=-1, keepdims=True)
    p = jnp.exp(s)
    p = p * pl.reciprocal(jnp.sum(p, axis=-1, keepdims=True), approx=True)

    ctx = jnp.einsum('hqk,hkd->hqd', p.astype(jnp.bfloat16), v.astype(jnp.bfloat16),
                     preferred_element_type=jnp.float32)
    out = jnp.einsum('hqd,hdo->hqo', ctx.astype(jnp.bfloat16), wo,
                     preferred_element_type=jnp.float32)
    return jnp.sum(out, axis=0) + bo                       # (Sq, D) f32


def _add_ln(x, y, g, b):
    """LayerNorm(x + y) over the last (d_model) axis, float32."""
    z = x + y
    mean = jnp.mean(z, axis=-1, keepdims=True)
    zc = z - mean
    var = jnp.mean(zc * zc, axis=-1, keepdims=True)
    return zc * jax.lax.rsqrt(var + LN_EPS) * g + b


def _ffn(x16, w1, b1, w2, b2):
    """Position-wise feed forward: Linear -> ReLU -> Linear (bf16 matmuls, f32 accum)."""
    h = jnp.dot(x16, w1, preferred_element_type=jnp.float32) + b1
    h = jnp.maximum(h, 0.0)
    return jnp.dot(h.astype(jnp.bfloat16), w2, preferred_element_type=jnp.float32) + b2


# ----------------------- kernel 1: streamed decoder stack ------------------- #

def _decoder_block_kernel(*refs, num_heads):
    """One decoder block for one batch element; grid = (batch, block)."""
    npb = len(PER_BLOCK)
    x_emb_ref, enc_ref = refs[0], refs[1]
    p = dict(zip(PER_BLOCK, refs[2:2 + npb]))
    o_ref = refs[2 + npb]
    x_sc, encb_sc = refs[3 + npb], refs[4 + npb]

    H = num_heads
    blk = pl.program_id(1)

    @pl.when(blk == 0)
    def _():
        # Start of this batch element's block loop: seed the carried activation and
        # hoist the (per-head broadcast) cross-attention K/V source for all blocks.
        x_sc[...] = x_emb_ref[0]
        enc = enc_ref[0]                                    # (S_src, D) bf16
        encb_sc[...] = jnp.broadcast_to(enc[None], (H,) + enc.shape)

    x = x_sc[...]                                           # (S, D) f32
    enc_b = encb_sc[...]                                    # (H, S_src, D) bf16

    # --- self-attention + add & norm ---
    x16 = x.astype(jnp.bfloat16)
    xb = jnp.broadcast_to(x16[None], (H,) + x16.shape)
    h = _mha(xb, xb,
             p["sa_wq"][0], p["sa_bq"][0], p["sa_wk"][0], p["sa_bk"][0],
             p["sa_wv"][0], p["sa_bv"][0], p["sa_wo"][0], p["sa_bo"][0])
    x = _add_ln(x, h, p["ln1_g"][0], p["ln1_b"][0])

    # --- cross-attention + add & norm ---
    x16 = x.astype(jnp.bfloat16)
    xb = jnp.broadcast_to(x16[None], (H,) + x16.shape)
    h = _mha(xb, enc_b,
             p["ca_wq"][0], p["ca_bq"][0], p["ca_wk"][0], p["ca_bk"][0],
             p["ca_wv"][0], p["ca_bv"][0], p["ca_wo"][0], p["ca_bo"][0])
    x = _add_ln(x, h, p["ln2_g"][0], p["ln2_b"][0])

    # --- feed forward + add & norm ---
    h = _ffn(x.astype(jnp.bfloat16),
             p["ff_w1"][0], p["ff_b1"][0], p["ff_w2"][0], p["ff_b2"][0])
    x = _add_ln(x, h, p["ln3_g"][0], p["ln3_b"][0])

    x_sc[...] = x                                           # carry to the next block

    @pl.when(blk == pl.num_programs(1) - 1)
    def _():
        o_ref[0] = x.astype(o_ref.dtype)                    # bf16 intermediate out


# ----------------------- kernel 2: tiled vocab projection ------------------- #

def _logits_kernel(x_ref, w_ref, b_ref, o_ref):
    o_ref[...] = (jnp.dot(x_ref[...], w_ref[...], preferred_element_type=jnp.float32)
                  + b_ref[...]).astype(o_ref.dtype)


# ------------------------------ Pallas wrappers ------------------------------ #

def _carry_spec(shape, buffer_count=None):
    """Block over the batch axis only; invariant along the inner (block) grid axis."""
    nz = len(shape) - 1
    kwargs = {}
    if buffer_count is not None:
        kwargs["pipeline_mode"] = pl.Buffered(buffer_count)
    return pl.BlockSpec((1,) + tuple(shape[1:]),
                        lambda b, blk, _nz=nz: (b,) + (0,) * _nz, **kwargs)


def _block_param_spec(shape):
    """Stream one decoder block's slice of a stacked (n_blocks, ...) parameter."""
    nz = len(shape) - 1
    return pl.BlockSpec((1,) + tuple(shape[1:]),
                        lambda b, blk, _nz=nz: (blk,) + (0,) * _nz)


def _block_nbytes(a):
    return math.prod(a.shape[1:]) * a.dtype.itemsize


def _vmem_limit(block_bytes, scratch_bytes=0):
    need = 2 * block_bytes + scratch_bytes + (4 << 20)      # x2 for double buffering
    return int(min(64 << 20, max(32 << 20, need)))          # valid on v5e/v6e/v7x


def _pick_tile(n, align, max_tile):
    """Largest multiple of `align` dividing n and <= max_tile; else n (single tile)."""
    if n % align != 0 or n <= max_tile:
        return n
    t = (max_tile // align) * align
    while t >= align:
        if n % t == 0:
            return t
        t -= align
    return n


def _decoder_stack(x, enc16, packed, num_heads):
    """Run all decoder blocks; weights streamed per block, x carried in VMEM scratch."""
    B, S, D = x.shape
    S_src = enc16.shape[1]
    n_blocks = packed[0].shape[0]
    H = num_heads

    kern = functools.partial(_decoder_block_kernel, num_heads=num_heads)

    in_specs = [_carry_spec(x.shape, buffer_count=1),        # embedded tokens
                _carry_spec(enc16.shape, buffer_count=1)]    # encoder output (bf16)
    in_specs += [_block_param_spec(a.shape) for a in packed]
    out_spec = _carry_spec((B, S, D))                        # written at the last block

    block_bytes = (_block_nbytes(x) + _block_nbytes(enc16)
                   + sum(_block_nbytes(a) for a in packed)
                   + S * D * 2)
    scratch_bytes = S * D * 4 + H * S_src * D * 2

    return pl.pallas_call(
        kern,
        out_shape=jax.ShapeDtypeStruct((B, S, D), jnp.bfloat16),
        grid=(B, n_blocks),
        in_specs=in_specs,
        out_specs=out_spec,
        scratch_shapes=[pltpu.VMEM((S, D), jnp.float32),            # carried x
                        pltpu.VMEM((H, S_src, D), jnp.bfloat16)],   # broadcast enc
        compiler_params=pltpu.CompilerParams(
            dimension_semantics=("parallel", "arbitrary"),
            vmem_limit_bytes=_vmem_limit(block_bytes, scratch_bytes)),
    )(x, enc16, *packed)


def _project_logits(x2, out_w, out_b):
    """Tiled (rows, vocab) matmul: logits = x2 @ out_w + out_b."""
    M, D = x2.shape
    V = out_w.shape[1]
    tm = _pick_tile(M, 8, 512)
    tv = _pick_tile(V, 128, 512)
    block_bytes = tm * D * 2 + D * tv * 2 + tv * 4 + tm * tv * 4
    return pl.pallas_call(
        _logits_kernel,
        out_shape=jax.ShapeDtypeStruct((M, V), jnp.float32),
        grid=(M // tm, V // tv),
        in_specs=[
            pl.BlockSpec((tm, D), lambda i, j: (i, 0), pipeline_mode=pl.Buffered(1)),
            pl.BlockSpec((D, tv), lambda i, j: (0, j)),
            pl.BlockSpec((1, tv), lambda i, j: (0, j)),
        ],
        out_specs=pl.BlockSpec((tm, tv), lambda i, j: (i, j)),
        compiler_params=pltpu.CompilerParams(
            dimension_semantics=("parallel", "parallel"),
            vmem_limit_bytes=_vmem_limit(block_bytes)),
    )(x2, out_w, out_b)


# ------------------------------ Plain-JAX glue ------------------------------ #

def sinusoidal_pos_encoding(context_size, d_model):
    pos = jnp.arange(context_size, dtype=jnp.float32)[:, None]
    i = jnp.arange(0, d_model, 2, dtype=jnp.float32)
    div = jnp.exp(-jnp.log(10000.0) * i / d_model)
    pe = jnp.zeros((context_size, d_model), jnp.float32)
    pe = pe.at[:, 0::2].set(jnp.sin(pos * div))
    pe = pe.at[:, 1::2].set(jnp.cos(pos * div))
    return pe


def _pack_block(blk, num_heads):
    """Split attention weights per head, fold the 1/sqrt(hd) scale into Wq/bq."""
    d_model = blk["norm1"]["gamma"].shape[-1]
    hd = d_model // num_heads
    scale = 1.0 / jnp.sqrt(jnp.float32(hd))

    def split_w(w):     # (D, D) -> (H, D, hd)
        return jnp.transpose(w.reshape(d_model, num_heads, hd), (1, 0, 2))

    def split_b(b):     # (1, D) -> (H, 1, hd)
        return b.reshape(num_heads, hd)[:, None, :]

    out = {}
    for pfx, att in (("sa", blk["self_attn"]), ("ca", blk["cross_attn"])):
        out[f"{pfx}_wq"] = split_w(att["wq"]) * scale
        out[f"{pfx}_bq"] = split_b(att["bq"]) * scale
        out[f"{pfx}_wk"] = split_w(att["wk"])
        out[f"{pfx}_bk"] = split_b(att["bk"])
        out[f"{pfx}_wv"] = split_w(att["wv"])
        out[f"{pfx}_bv"] = split_b(att["bv"])
        out[f"{pfx}_wo"] = att["wo"].reshape(num_heads, hd, d_model)
        out[f"{pfx}_bo"] = att["bo"]
    out["ff_w1"], out["ff_b1"] = blk["ffn"]["w1"], blk["ffn"]["b1"]
    out["ff_w2"], out["ff_b2"] = blk["ffn"]["w2"], blk["ffn"]["b2"]
    out["ln1_g"], out["ln1_b"] = blk["norm1"]["gamma"], blk["norm1"]["beta"]
    out["ln2_g"], out["ln2_b"] = blk["norm2"]["gamma"], blk["norm2"]["beta"]
    out["ln3_g"], out["ln3_b"] = blk["norm3"]["gamma"], blk["norm3"]["beta"]
    return out


def _pack_params(params, num_heads):
    """Stack per-block params along a leading n_blocks axis; bf16 for matmul weights."""
    per_block = [_pack_block(b, num_heads) for b in params["blocks"]]
    packed = []
    for name in PER_BLOCK:
        arr = jnp.stack([pb[name] for pb in per_block], axis=0)
        if name in _BF16_KEYS:
            arr = arr.astype(jnp.bfloat16)
        packed.append(arr)
    return packed, params["out_w"].astype(jnp.bfloat16), params["out_b"]


def decoder_forward(tokens, enc_output, params, num_heads):
    B, S = tokens.shape
    x = jnp.take(params["embedding"], tokens, axis=0)         # (B, S, D) gather (glue)
    x = x + params["pos_encoding"][:S][None, :, :]            # x += pos_embedding(x)
    packed, out_w, out_b = _pack_params(params, num_heads)
    x_final = _decoder_stack(x, enc_output.astype(jnp.bfloat16), packed, num_heads)
    D = x_final.shape[-1]
    V = out_w.shape[1]
    logits = _project_logits(x_final.reshape(B * S, D), out_w, out_b)
    return logits.reshape(B, S, V)


# ------------------------------ Parameter init ------------------------------ #

def _dense(key, fan_in, fan_out):
    kw, kb = jax.random.split(key)
    lim = 1.0 / jnp.sqrt(jnp.float32(fan_in))
    w = jax.random.uniform(kw, (fan_in, fan_out), jnp.float32, -lim, lim)
    b = jax.random.uniform(kb, (1, fan_out), jnp.float32, -lim, lim)
    return w, b


def _attn_params(key, d_model):
    ks = jax.random.split(key, 4)
    wq, bq = _dense(ks[0], d_model, d_model)
    wk, bk = _dense(ks[1], d_model, d_model)
    wv, bv = _dense(ks[2], d_model, d_model)
    wo, bo = _dense(ks[3], d_model, d_model)
    return dict(wq=wq, wk=wk, wv=wv, bq=bq, bk=bk, bv=bv, wo=wo, bo=bo)


def _ln_params(d_model):
    return dict(gamma=jnp.ones((1, d_model), jnp.float32),
                beta=jnp.zeros((1, d_model), jnp.float32))


def init_params(key, output_size, context_size, d_model, d_ff, num_heads, n_blocks):
    keys = jax.random.split(key, 2 + n_blocks)
    params = {
        "embedding": 0.1 * jax.random.normal(keys[0], (output_size, d_model), jnp.float32),
        "pos_encoding": sinusoidal_pos_encoding(context_size, d_model),
        "blocks": [],
    }
    ow, ob = _dense(keys[1], d_model, output_size)
    params["out_w"], params["out_b"] = ow, ob
    for i in range(n_blocks):
        bk = jax.random.split(keys[2 + i], 4)
        w1, b1 = _dense(bk[2], d_model, d_ff)
        w2, b2 = _dense(bk[3], d_ff, d_model)
        params["blocks"].append(dict(
            self_attn=_attn_params(bk[0], d_model),
            cross_attn=_attn_params(bk[1], d_model),
            ffn=dict(w1=w1, b1=b1, w2=w2, b2=b2),
            norm1=_ln_params(d_model),
            norm2=_ln_params(d_model),
            norm3=_ln_params(d_model),
        ))
    return params


# ----------------------------------- Main ----------------------------------- #

if __name__ == "__main__":
    B, S_tgt, S_src = 2, 8, 8
    d_model, d_ff, num_heads, n_blocks = 32, 64, 4, 2
    output_size, context_size = 16, 16

    key = jax.random.PRNGKey(0)
    k_tok, k_enc, k_par = jax.random.split(key, 3)

    tokens = jax.random.randint(k_tok, (B, S_tgt), 0, output_size, dtype=jnp.int32)
    enc_output = jax.random.normal(k_enc, (B, S_src, d_model), jnp.float32)
    params = init_params(k_par, output_size, context_size, d_model, d_ff,
                         num_heads, n_blocks)

    logits = decoder_forward(tokens, enc_output, params, num_heads)
    logits = jax.block_until_ready(logits)
    assert logits.shape == (B, S_tgt, output_size)
    assert bool(jnp.all(jnp.isfinite(logits)))
    print("KERNEL_OK")
</pallas_src>

<mosaic_0001>
module attributes {stable_mosaic.version = 11 : i64} {
  func.func @_decoder_block_kernel(%arg0: i32, %arg1: i32, %arg2: memref<1x8x32xf32, #tpu.memory_space<vmem>>, %arg3: memref<1x8x32xbf16, #tpu.memory_space<vmem>>, %arg4: memref<1x4x32x8xbf16, #tpu.memory_space<vmem>>, %arg5: memref<1x4x1x8xf32, #tpu.memory_space<vmem>>, %arg6: memref<1x4x32x8xbf16, #tpu.memory_space<vmem>>, %arg7: memref<1x4x1x8xf32, #tpu.memory_space<vmem>>, %arg8: memref<1x4x32x8xbf16, #tpu.memory_space<vmem>>, %arg9: memref<1x4x1x8xf32, #tpu.memory_space<vmem>>, %arg10: memref<1x4x8x32xbf16, #tpu.memory_space<vmem>>, %arg11: memref<1x1x32xf32, #tpu.memory_space<vmem>>, %arg12: memref<1x4x32x8xbf16, #tpu.memory_space<vmem>>, %arg13: memref<1x4x1x8xf32, #tpu.memory_space<vmem>>, %arg14: memref<1x4x32x8xbf16, #tpu.memory_space<vmem>>, %arg15: memref<1x4x1x8xf32, #tpu.memory_space<vmem>>, %arg16: memref<1x4x32x8xbf16, #tpu.memory_space<vmem>>, %arg17: memref<1x4x1x8xf32, #tpu.memory_space<vmem>>, %arg18: memref<1x4x8x32xbf16, #tpu.memory_space<vmem>>, %arg19: memref<1x1x32xf32, #tpu.memory_space<vmem>>, %arg20: memref<1x32x64xbf16, #tpu.memory_space<vmem>>, %arg21: memref<1x1x64xf32, #tpu.memory_space<vmem>>, %arg22: memref<1x64x32xbf16, #tpu.memory_space<vmem>>, %arg23: memref<1x1x32xf32, #tpu.memory_space<vmem>>, %arg24: memref<1x1x32xf32, #tpu.memory_space<vmem>>, %arg25: memref<1x1x32xf32, #tpu.memory_space<vmem>>, %arg26: memref<1x1x32xf32, #tpu.memory_space<vmem>>, %arg27: memref<1x1x32xf32, #tpu.memory_space<vmem>>, %arg28: memref<1x1x32xf32, #tpu.memory_space<vmem>>, %arg29: memref<1x1x32xf32, #tpu.memory_space<vmem>>, %arg30: memref<1x8x32xbf16, #tpu.memory_space<vmem>>, %arg31: memref<8x32xf32, #tpu.memory_space<vmem>>, %arg32: memref<4x8x32xbf16, #tpu.memory_space<vmem>>) attributes {dimension_semantics = [#tpu.dimension_semantics<parallel>, #tpu.dimension_semantics<arbitrary>], iteration_bounds = array<i64: 2, 2>, scalar_prefetch = 0 : i64, scratch_operands = 2 : i64, tpu.core_type = #tpu.core_type<tc>, window_params = [{pipeline_mode = #tpu.pipeline_mode<synchronous>, transform_indices = @transform_0, window_bounds = array<i64: 1, 8, 32>}, {pipeline_mode = #tpu.pipeline_mode<synchronous>, transform_indices = @transform_1, window_bounds = array<i64: 1, 8, 32>}, {transform_indices = @transform_2, window_bounds = array<i64: 1, 4, 32, 8>}, {transform_indices = @transform_3, window_bounds = array<i64: 1, 4, 1, 8>}, {transform_indices = @transform_4, window_bounds = array<i64: 1, 4, 32, 8>}, {transform_indices = @transform_5, window_bounds = array<i64: 1, 4, 1, 8>}, {transform_indices = @transform_6, window_bounds = array<i64: 1, 4, 32, 8>}, {transform_indices = @transform_7, window_bounds = array<i64: 1, 4, 1, 8>}, {transform_indices = @transform_8, window_bounds = array<i64: 1, 4, 8, 32>}, {transform_indices = @transform_9, window_bounds = array<i64: 1, 1, 32>}, {transform_indices = @transform_10, window_bounds = array<i64: 1, 4, 32, 8>}, {transform_indices = @transform_11, window_bounds = array<i64: 1, 4, 1, 8>}, {transform_indices = @transform_12, window_bounds = array<i64: 1, 4, 32, 8>}, {transform_indices = @transform_13, window_bounds = array<i64: 1, 4, 1, 8>}, {transform_indices = @transform_14, window_bounds = array<i64: 1, 4, 32, 8>}, {transform_indices = @transform_15, window_bounds = array<i64: 1, 4, 1, 8>}, {transform_indices = @transform_16, window_bounds = array<i64: 1, 4, 8, 32>}, {transform_indices = @transform_17, window_bounds = array<i64: 1, 1, 32>}, {transform_indices = @transform_18, window_bounds = array<i64: 1, 32, 64>}, {transform_indices = @transform_19, window_bounds = array<i64: 1, 1, 64>}, {transform_indices = @transform_20, window_bounds = array<i64: 1, 64, 32>}, {transform_indices = @transform_21, window_bounds = array<i64: 1, 1, 32>}, {transform_indices = @transform_22, window_bounds = array<i64: 1, 1, 32>}, {transform_indices = @transform_23, window_bounds = array<i64: 1, 1, 32>}, {transform_indices = @transform_24, window_bounds = array<i64: 1, 1, 32>}, {transform_indices = @transform_25, window_bounds = array<i64: 1, 1, 32>}, {transform_indices = @transform_26, window_bounds = array<i64: 1, 1, 32>}, {transform_indices = @transform_27, window_bounds = array<i64: 1, 1, 32>}, {transform_indices = @transform_28, window_bounds = array<i64: 1, 8, 32>}]} {
    %c0_i32 = arith.constant 0 : i32
    %0 = arith.cmpi eq, %arg1, %c0_i32 : i32
    %1 = arith.extui %0 : i1 to i32
    %c0_i32_0 = arith.constant 0 : i32
    %2 = arith.cmpi ne, %1, %c0_i32_0 : i32
    scf.if %2 {
      %c0_135 = arith.constant 0 : index
      %c0_136 = arith.constant 0 : index
      %c0_137 = arith.constant 0 : index
      %202 = vector.load %arg2[%c0_135, %c0_136, %c0_137] : memref<1x8x32xf32, #tpu.memory_space<vmem>>, vector<1x8x32xf32>
      %203 = vector.shape_cast %202 : vector<1x8x32xf32> to vector<8x32xf32>
      %c0_138 = arith.constant 0 : index
      %c0_139 = arith.constant 0 : index
      %204 = vector.load %arg31[%c0_138, %c0_139] : memref<8x32xf32, #tpu.memory_space<vmem>>, vector<8x32xf32>
      tpu.vector_store %arg31[%c0_138, %c0_139], %203 {strides = array<i32>} : memref<8x32xf32, #tpu.memory_space<vmem>>, vector<8x32xf32>,
      %c0_140 = arith.constant 0 : index
      %c0_141 = arith.constant 0 : index
      %c0_142 = arith.constant 0 : index
      %205 = vector.load %arg3[%c0_140, %c0_141, %c0_142] : memref<1x8x32xbf16, #tpu.memory_space<vmem>>, vector<1x8x32xbf16>
      %206 = vector.shape_cast %205 : vector<1x8x32xbf16> to vector<8x32xbf16>
      %207 = vector.shape_cast %206 : vector<8x32xbf16> to vector<1x8x32xbf16>
      %208 = vector.shape_cast %207 : vector<1x8x32xbf16> to vector<1x8x32xbf16>
      %209 = vector.broadcast %208 : vector<1x8x32xbf16> to vector<4x8x32xbf16>
      %c0_143 = arith.constant 0 : index
      %c0_144 = arith.constant 0 : index
      %c0_145 = arith.constant 0 : index
      %210 = vector.load %arg32[%c0_143, %c0_144, %c0_145] : memref<4x8x32xbf16, #tpu.memory_space<vmem>>, vector<4x8x32xbf16>
      tpu.vector_store %arg32[%c0_143, %c0_144, %c0_145], %209 {strides = array<i32>} : memref<4x8x32xbf16, #tpu.memory_space<vmem>>, vector<4x8x32xbf16>,
    } else {
    }
    %c0 = arith.constant 0 : index
    %c0_1 = arith.constant 0 : index
    %3 = vector.load %arg31[%c0, %c0_1] : memref<8x32xf32, #tpu.memory_space<vmem>>, vector<8x32xf32>
    %c0_2 = arith.constant 0 : index
    %c0_3 = arith.constant 0 : index
    %c0_4 = arith.constant 0 : index
    %4 = vector.load %arg32[%c0_2, %c0_3, %c0_4] : memref<4x8x32xbf16, #tpu.memory_space<vmem>>, vector<4x8x32xbf16>
    %5 = arith.truncf %3 : vector<8x32xf32> to vector<8x32xbf16>
    %6 = vector.shape_cast %5 : vector<8x32xbf16> to vector<1x8x32xbf16>
    %7 = vector.shape_cast %6 : vector<1x8x32xbf16> to vector<1x8x32xbf16>
    %8 = vector.broadcast %7 : vector<1x8x32xbf16> to vector<4x8x32xbf16>
    %c0_5 = arith.constant 0 : index
    %c0_6 = arith.constant 0 : index
    %c0_7 = arith.constant 0 : index
    %c0_8 = arith.constant 0 : index
    %9 = vector.load %arg4[%c0_5, %c0_6, %c0_7, %c0_8] : memref<1x4x32x8xbf16, #tpu.memory_space<vmem>>, vector<1x4x32x8xbf16>
    %10 = vector.shape_cast %9 : vector<1x4x32x8xbf16> to vector<4x32x8xbf16>
    %c0_9 = arith.constant 0 : index
    %c0_10 = arith.constant 0 : index
    %c0_11 = arith.constant 0 : index
    %c0_12 = arith.constant 0 : index
    %11 = vector.load %arg5[%c0_9, %c0_10, %c0_11, %c0_12] : memref<1x4x1x8xf32, #tpu.memory_space<vmem>>, vector<1x4x1x8xf32>
    %12 = vector.shape_cast %11 : vector<1x4x1x8xf32> to vector<4x1x8xf32>
    %c0_13 = arith.constant 0 : index
    %c0_14 = arith.constant 0 : index
    %c0_15 = arith.constant 0 : index
    %c0_16 = arith.constant 0 : index
    %13 = vector.load %arg6[%c0_13, %c0_14, %c0_15, %c0_16] : memref<1x4x32x8xbf16, #tpu.memory_space<vmem>>, vector<1x4x32x8xbf16>
    %14 = vector.shape_cast %13 : vector<1x4x32x8xbf16> to vector<4x32x8xbf16>
    %c0_17 = arith.constant 0 : index
    %c0_18 = arith.constant 0 : index
    %c0_19 = arith.constant 0 : index
    %c0_20 = arith.constant 0 : index
    %15 = vector.load %arg7[%c0_17, %c0_18, %c0_19, %c0_20] : memref<1x4x1x8xf32, #tpu.memory_space<vmem>>, vector<1x4x1x8xf32>
    %16 = vector.shape_cast %15 : vector<1x4x1x8xf32> to vector<4x1x8xf32>
    %c0_21 = arith.constant 0 : index
    %c0_22 = arith.constant 0 : index
    %c0_23 = arith.constant 0 : index
    %c0_24 = arith.constant 0 : index
    %17 = vector.load %arg8[%c0_21, %c0_22, %c0_23, %c0_24] : memref<1x4x32x8xbf16, #tpu.memory_space<vmem>>, vector<1x4x32x8xbf16>
    %18 = vector.shape_cast %17 : vector<1x4x32x8xbf16> to vector<4x32x8xbf16>
    %c0_25 = arith.constant 0 : index
    %c0_26 = arith.constant 0 : index
    %c0_27 = arith.constant 0 : index
    %c0_28 = arith.constant 0 : index
    %19 = vector.load %arg9[%c0_25, %c0_26, %c0_27, %c0_28] : memref<1x4x1x8xf32, #tpu.memory_space<vmem>>, vector<1x4x1x8xf32>
    %20 = vector.shape_cast %19 : vector<1x4x1x8xf32> to vector<4x1x8xf32>
    %c0_29 = arith.constant 0 : index
    %c0_30 = arith.constant 0 : index
    %c0_31 = arith.constant 0 : index
    %c0_32 = arith.constant 0 : index
    %21 = vector.load %arg10[%c0_29, %c0_30, %c0_31, %c0_32] : memref<1x4x8x32xbf16, #tpu.memory_space<vmem>>, vector<1x4x8x32xbf16>
    %22 = vector.shape_cast %21 : vector<1x4x8x32xbf16> to vector<4x8x32xbf16>
    %c0_33 = arith.constant 0 : index
    %c0_34 = arith.constant 0 : index
    %c0_35 = arith.constant 0 : index
    %23 = vector.load %arg11[%c0_33, %c0_34, %c0_35] : memref<1x1x32xf32, #tpu.memory_space<vmem>>, vector<1x1x32xf32>
    %24 = vector.shape_cast %23 : vector<1x1x32xf32> to vector<1x32xf32>
    "tpu.trace_start"() <{level = 10 : i32, message = "hsd,hdk->hsk"}> : () -> ()
    %cst = arith.constant dense<0.000000e+00> : vector<4x8x8xf32>
    %25 = tpu.matmul %8, %10, %cst {dimension_numbers = #tpu.dot_dimension_numbers<[2], [1], [1], [2], [0, 0, 0, 1, 1, 2], [0], [0]>} : vector<4x8x32xbf16>, vector<4x32x8xbf16>, vector<4x8x8xf32> -> vector<4x8x8xf32>
    "tpu.trace_stop"() : () -> ()
    %26 = vector.broadcast %12 : vector<4x1x8xf32> to vector<4x8x8xf32>
    %27 = arith.addf %25, %26 : vector<4x8x8xf32>
    "tpu.trace_start"() <{level = 10 : i32, message = "hsd,hdk->hsk"}> : () -> ()
    %cst_36 = arith.constant dense<0.000000e+00> : vector<4x8x8xf32>
    %28 = tpu.matmul %8, %14, %cst_36 {dimension_numbers = #tpu.dot_dimension_numbers<[2], [1], [1], [2], [0, 0, 0, 1, 1, 2], [0], [0]>} : vector<4x8x32xbf16>, vector<4x32x8xbf16>, vector<4x8x8xf32> -> vector<4x8x8xf32>
    "tpu.trace_stop"() : () -> ()
    %29 = vector.broadcast %16 : vector<4x1x8xf32> to vector<4x8x8xf32>
    %30 = arith.addf %28, %29 : vector<4x8x8xf32>
    "tpu.trace_start"() <{level = 10 : i32, message = "hsd,hdk->hsk"}> : () -> ()
    %cst_37 = arith.constant dense<0.000000e+00> : vector<4x8x8xf32>
    %31 = tpu.matmul %8, %18, %cst_37 {dimension_numbers = #tpu.dot_dimension_numbers<[2], [1], [1], [2], [0, 0, 0, 1, 1, 2], [0], [0]>} : vector<4x8x32xbf16>, vector<4x32x8xbf16>, vector<4x8x8xf32> -> vector<4x8x8xf32>
    "tpu.trace_stop"() : () -> ()
    %32 = vector.broadcast %20 : vector<4x1x8xf32> to vector<4x8x8xf32>
    %33 = arith.addf %31, %32 : vector<4x8x8xf32>
    %34 = arith.truncf %27 : vector<4x8x8xf32> to vector<4x8x8xbf16>
    %35 = arith.truncf %30 : vector<4x8x8xf32> to vector<4x8x8xbf16>
    "tpu.trace_start"() <{level = 10 : i32, message = "hqd,hkd->hqk"}> : () -> ()
    %cst_38 = arith.constant dense<0.000000e+00> : vector<4x8x8xf32>
    %36 = tpu.matmul %34, %35, %cst_38 {dimension_numbers = #tpu.dot_dimension_numbers<[2], [2], [1], [1], [0, 0, 0, 1, 1, 1], [0], [0]>} : vector<4x8x8xbf16>, vector<4x8x8xbf16>, vector<4x8x8xf32> -> vector<4x8x8xf32>
    "tpu.trace_stop"() : () -> ()
    %cst_39 = arith.constant dense<0xFF800000> : vector<4x8xf32>
    %37 = vector.multi_reduction <maximumf>, %36, %cst_39 [2] : vector<4x8x8xf32> to vector<4x8xf32>
    %38 = vector.shape_cast %37 : vector<4x8xf32> to vector<4x8x1xf32>
    %39 = vector.broadcast %38 : vector<4x8x1xf32> to vector<4x8x8xf32>
    %40 = arith.subf %36, %39 : vector<4x8x8xf32>
    %41 = math.exp %40 : vector<4x8x8xf32>
    %cst_40 = arith.constant dense<0.000000e+00> : vector<4x8xf32>
    %42 = vector.multi_reduction <add>, %41, %cst_40 [2] : vector<4x8x8xf32> to vector<4x8xf32>
    %43 = vector.shape_cast %42 : vector<4x8xf32> to vector<4x8x1xf32>
    %44 = tpu.reciprocal %43 {approx = true} : vector<4x8x1xf32> -> vector<4x8x1xf32>
    %45 = vector.broadcast %44 : vector<4x8x1xf32> to vector<4x8x8xf32>
    %46 = arith.mulf %41, %45 : vector<4x8x8xf32>
    %47 = arith.truncf %46 : vector<4x8x8xf32> to vector<4x8x8xbf16>
    %48 = arith.truncf %33 : vector<4x8x8xf32> to vector<4x8x8xbf16>
    "tpu.trace_start"() <{level = 10 : i32, message = "hqk,hkd->hqd"}> : () -> ()
    %cst_41 = arith.constant dense<0.000000e+00> : vector<4x8x8xf32>
    %49 = tpu.matmul %47, %48, %cst_41 {dimension_numbers = #tpu.dot_dimension_numbers<[2], [1], [1], [2], [0, 0, 0, 1, 1, 2], [0], [0]>} : vector<4x8x8xbf16>, vector<4x8x8xbf16>, vector<4x8x8xf32> -> vector<4x8x8xf32>
    "tpu.trace_stop"() : () -> ()
    %50 = arith.truncf %49 : vector<4x8x8xf32> to vector<4x8x8xbf16>
    "tpu.trace_start"() <{level = 10 : i32, message = "hqd,hdo->hqo"}> : () -> ()
    %cst_42 = arith.constant dense<0.000000e+00> : vector<4x8x32xf32>
    %51 = tpu.matmul %50, %22, %cst_42 {dimension_numbers = #tpu.dot_dimension_numbers<[2], [1], [1], [2], [0, 0, 0, 1, 1, 2], [0], [0]>} : vector<4x8x8xbf16>, vector<4x8x32xbf16>, vector<4x8x32xf32> -> vector<4x8x32xf32>
    "tpu.trace_stop"() : () -> ()
    %cst_43 = arith.constant dense<0.000000e+00> : vector<8x32xf32>
    %52 = vector.multi_reduction <add>, %51, %cst_43 [0] : vector<4x8x32xf32> to vector<8x32xf32>
    %53 = vector.broadcast %24 : vector<1x32xf32> to vector<8x32xf32>
    %54 = arith.addf %52, %53 : vector<8x32xf32>
    %c0_44 = arith.constant 0 : index
    %c0_45 = arith.constant 0 : index
    %c0_46 = arith.constant 0 : index
    %55 = vector.load %arg24[%c0_44, %c0_45, %c0_46] : memref<1x1x32xf32, #tpu.memory_space<vmem>>, vector<1x1x32xf32>
    %56 = vector.shape_cast %55 : vector<1x1x32xf32> to vector<1x32xf32>
    %c0_47 = arith.constant 0 : index
    %c0_48 = arith.constant 0 : index
    %c0_49 = arith.constant 0 : index
    %57 = vector.load %arg25[%c0_47, %c0_48, %c0_49] : memref<1x1x32xf32, #tpu.memory_space<vmem>>, vector<1x1x32xf32>
    %58 = vector.shape_cast %57 : vector<1x1x32xf32> to vector<1x32xf32>
    %59 = arith.addf %3, %54 : vector<8x32xf32>
    %cst_50 = arith.constant dense<0.000000e+00> : vector<8xf32>
    %60 = vector.multi_reduction <add>, %59, %cst_50 [1] : vector<8x32xf32> to vector<8xf32>
    %61 = vector.shape_cast %60 : vector<8xf32> to vector<8x1xf32>
    %cst_51 = arith.constant 3.200000e+01 : f32
    %62 = vector.broadcast %cst_51 : f32 to vector<8x1xf32>
    %63 = arith.divf %61, %62 : vector<8x1xf32>
    %64 = vector.broadcast %63 : vector<8x1xf32> to vector<8x32xf32>
    %65 = arith.subf %59, %64 : vector<8x32xf32>
    %66 = arith.mulf %65, %65 : vector<8x32xf32>
    %cst_52 = arith.constant dense<0.000000e+00> : vector<8xf32>
    %67 = vector.multi_reduction <add>, %66, %cst_52 [1] : vector<8x32xf32> to vector<8xf32>
    %68 = vector.shape_cast %67 : vector<8xf32> to vector<8x1xf32>
    %cst_53 = arith.constant 3.200000e+01 : f32
    %69 = vector.broadcast %cst_53 : f32 to vector<8x1xf32>
    %70 = arith.divf %68, %69 : vector<8x1xf32>
    %cst_54 = arith.constant 9.99999974E-6 : f32
    %71 = vector.broadcast %cst_54 : f32 to vector<8x1xf32>
    %72 = arith.addf %70, %71 : vector<8x1xf32>
    %73 = math.rsqrt %72 : vector<8x1xf32>
    %74 = vector.broadcast %73 : vector<8x1xf32> to vector<8x32xf32>
    %75 = arith.mulf %65, %74 : vector<8x32xf32>
    %76 = vector.broadcast %56 : vector<1x32xf32> to vector<8x32xf32>
    %77 = arith.mulf %75, %76 : vector<8x32xf32>
    %78 = vector.broadcast %58 : vector<1x32xf32> to vector<8x32xf32>
    %79 = arith.addf %77, %78 : vector<8x32xf32>
    %80 = arith.truncf %79 : vector<8x32xf32> to vector<8x32xbf16>
    %81 = vector.shape_cast %80 : vector<8x32xbf16> to vector<1x8x32xbf16>
    %82 = vector.shape_cast %81 : vector<1x8x32xbf16> to vector<1x8x32xbf16>
    %83 = vector.broadcast %82 : vector<1x8x32xbf16> to vector<4x8x32xbf16>
    %c0_55 = arith.constant 0 : index
    %c0_56 = arith.constant 0 : index
    %c0_57 = arith.constant 0 : index
    %c0_58 = arith.constant 0 : index
    %84 = vector.load %arg12[%c0_55, %c0_56, %c0_57, %c0_58] : memref<1x4x32x8xbf16, #tpu.memory_space<vmem>>, vector<1x4x32x8xbf16>
    %85 = vector.shape_cast %84 : vector<1x4x32x8xbf16> to vector<4x32x8xbf16>
    %c0_59 = arith.constant 0 : index
    %c0_60 = arith.constant 0 : index
    %c0_61 = arith.constant 0 : index
    %c0_62 = arith.constant 0 : index
    %86 = vector.load %arg13[%c0_59, %c0_60, %c0_61, %c0_62] : memref<1x4x1x8xf32, #tpu.memory_space<vmem>>, vector<1x4x1x8xf32>
    %87 = vector.shape_cast %86 : vector<1x4x1x8xf32> to vector<4x1x8xf32>
    %c0_63 = arith.constant 0 : index
    %c0_64 = arith.constant 0 : index
    %c0_65 = arith.constant 0 : index
    %c0_66 = arith.constant 0 : index
    %88 = vector.load %arg14[%c0_63, %c0_64, %c0_65, %c0_66] : memref<1x4x32x8xbf16, #tpu.memory_space<vmem>>, vector<1x4x32x8xbf16>
    %89 = vector.shape_cast %88 : vector<1x4x32x8xbf16> to vector<4x32x8xbf16>
    %c0_67 = arith.constant 0 : index
    %c0_68 = arith.constant 0 : index
    %c0_69 = arith.constant 0 : index
    %c0_70 = arith.constant 0 : index
    %90 = vector.load %arg15[%c0_67, %c0_68, %c0_69, %c0_70] : memref<1x4x1x8xf32, #tpu.memory_space<vmem>>, vector<1x4x1x8xf32>
    %91 = vector.shape_cast %90 : vector<1x4x1x8xf32> to vector<4x1x8xf32>
    %c0_71 = arith.constant 0 : index
    %c0_72 = arith.constant 0 : index
    %c0_73 = arith.constant 0 : index
    %c0_74 = arith.constant 0 : index
    %92 = vector.load %arg16[%c0_71, %c0_72, %c0_73, %c0_74] : memref<1x4x32x8xbf16, #tpu.memory_space<vmem>>, vector<1x4x32x8xbf16>
    %93 = vector.shape_cast %92 : vector<1x4x32x8xbf16> to vector<4x32x8xbf16>
    %c0_75 = arith.constant 0 : index
    %c0_76 = arith.constant 0 : index
    %c0_77 = arith.constant 0 : index
    %c0_78 = arith.constant 0 : index
    %94 = vector.load %arg17[%c0_75, %c0_76, %c0_77, %c0_78] : memref<1x4x1x8xf32, #tpu.memory_space<vmem>>, vector<1x4x1x8xf32>
    %95 = vector.shape_cast %94 : vector<1x4x1x8xf32> to vector<4x1x8xf32>
    %c0_79 = arith.constant 0 : index
    %c0_80 = arith.constant 0 : index
    %c0_81 = arith.constant 0 : index
    %c0_82 = arith.constant 0 : index
    %96 = vector.load %arg18[%c0_79, %c0_80, %c0_81, %c0_82] : memref<1x4x8x32xbf16, #tpu.memory_space<vmem>>, vector<1x4x8x32xbf16>
    %97 = vector.shape_cast %96 : vector<1x4x8x32xbf16> to vector<4x8x32xbf16>
    %c0_83 = arith.constant 0 : index
    %c0_84 = arith.constant 0 : index
    %c0_85 = arith.constant 0 : index
    %98 = vector.load %arg19[%c0_83, %c0_84, %c0_85] : memref<1x1x32xf32, #tpu.memory_space<vmem>>, vector<1x1x32xf32>
    %99 = vector.shape_cast %98 : vector<1x1x32xf32> to vector<1x32xf32>
    "tpu.trace_start"() <{level = 10 : i32, message = "hsd,hdk->hsk"}> : () -> ()
    %cst_86 = arith.constant dense<0.000000e+00> : vector<4x8x8xf32>
    %100 = tpu.matmul %83, %85, %cst_86 {dimension_numbers = #tpu.dot_dimension_numbers<[2], [1], [1], [2], [0, 0, 0, 1, 1, 2], [0], [0]>} : vector<4x8x32xbf16>, vector<4x32x8xbf16>, vector<4x8x8xf32> -> vector<4x8x8xf32>
    "tpu.trace_stop"() : () -> ()
    %101 = vector.broadcast %87 : vector<4x1x8xf32> to vector<4x8x8xf32>
    %102 = arith.addf %100, %101 : vector<4x8x8xf32>
    "tpu.trace_start"() <{level = 10 : i32, message = "hsd,hdk->hsk"}> : () -> ()
    %cst_87 = arith.constant dense<0.000000e+00> : vector<4x8x8xf32>
    %103 = tpu.matmul %4, %89, %cst_87 {dimension_numbers = #tpu.dot_dimension_numbers<[2], [1], [1], [2], [0, 0, 0, 1, 1, 2], [0], [0]>} : vector<4x8x32xbf16>, vector<4x32x8xbf16>, vector<4x8x8xf32> -> vector<4x8x8xf32>
    "tpu.trace_stop"() : () -> ()
    %104 = vector.broadcast %91 : vector<4x1x8xf32> to vector<4x8x8xf32>
    %105 = arith.addf %103, %104 : vector<4x8x8xf32>
    "tpu.trace_start"() <{level = 10 : i32, message = "hsd,hdk->hsk"}> : () -> ()
    %cst_88 = arith.constant dense<0.000000e+00> : vector<4x8x8xf32>
    %106 = tpu.matmul %4, %93, %cst_88 {dimension_numbers = #tpu.dot_dimension_numbers<[2], [1], [1], [2], [0, 0, 0, 1, 1, 2], [0], [0]>} : vector<4x8x32xbf16>, vector<4x32x8xbf16>, vector<4x8x8xf32> -> vector<4x8x8xf32>
    "tpu.trace_stop"() : () -> ()
    %107 = vector.broadcast %95 : vector<4x1x8xf32> to vector<4x8x8xf32>
    %108 = arith.addf %106, %107 : vector<4x8x8xf32>
    %109 = arith.truncf %102 : vector<4x8x8xf32> to vector<4x8x8xbf16>
    %110 = arith.truncf %105 : vector<4x8x8xf32> to vector<4x8x8xbf16>
    "tpu.trace_start"() <{level = 10 : i32, message = "hqd,hkd->hqk"}> : () -> ()
    %cst_89 = arith.constant dense<0.000000e+00> : vector<4x8x8xf32>
    %111 = tpu.matmul %109, %110, %cst_89 {dimension_numbers = #tpu.dot_dimension_numbers<[2], [2], [1], [1], [0, 0, 0, 1, 1, 1], [0], [0]>} : vector<4x8x8xbf16>, vector<4x8x8xbf16>, vector<4x8x8xf32> -> vector<4x8x8xf32>
    "tpu.trace_stop"() : () -> ()
    %cst_90 = arith.constant dense<0xFF800000> : vector<4x8xf32>
    %112 = vector.multi_reduction <maximumf>, %111, %cst_90 [2] : vector<4x8x8xf32> to vector<4x8xf32>
    %113 = vector.shape_cast %112 : vector<4x8xf32> to vector<4x8x1xf32>
    %114 = vector.broadcast %113 : vector<4x8x1xf32> to vector<4x8x8xf32>
    %115 = arith.subf %111, %114 : vector<4x8x8xf32>
    %116 = math.exp %115 : vector<4x8x8xf32>
    %cst_91 = arith.constant dense<0.000000e+00> : vector<4x8xf32>
    %117 = vector.multi_reduction <add>, %116, %cst_91 [2] : vector<4x8x8xf32> to vector<4x8xf32>
    %118 = vector.shape_cast %117 : vector<4x8xf32> to vector<4x8x1xf32>
    %119 = tpu.reciprocal %118 {approx = true} : vector<4x8x1xf32> -> vector<4x8x1xf32>
    %120 = vector.broadcast %119 : vector<4x8x1xf32> to vector<4x8x8xf32>
    %121 = arith.mulf %116, %120 : vector<4x8x8xf32>
    %122 = arith.truncf %121 : vector<4x8x8xf32> to vector<4x8x8xbf16>
    %123 = arith.truncf %108 : vector<4x8x8xf32> to vector<4x8x8xbf16>
    "tpu.trace_start"() <{level = 10 : i32, message = "hqk,hkd->hqd"}> : () -> ()
    %cst_92 = arith.constant dense<0.000000e+00> : vector<4x8x8xf32>
    %124 = tpu.matmul %122, %123, %cst_92 {dimension_numbers = #tpu.dot_dimension_numbers<[2], [1], [1], [2], [0, 0, 0, 1, 1, 2], [0], [0]>} : vector<4x8x8xbf16>, vector<4x8x8xbf16>, vector<4x8x8xf32> -> vector<4x8x8xf32>
    "tpu.trace_stop"() : () -> ()
    %125 = arith.truncf %124 : vector<4x8x8xf32> to vector<4x8x8xbf16>
    "tpu.trace_start"() <{level = 10 : i32, message = "hqd,hdo->hqo"}> : () -> ()
    %cst_93 = arith.constant dense<0.000000e+00> : vector<4x8x32xf32>
    %126 = tpu.matmul %125, %97, %cst_93 {dimension_numbers = #tpu.dot_dimension_numbers<[2], [1], [1], [2], [0, 0, 0, 1, 1, 2], [0], [0]>} : vector<4x8x8xbf16>, vector<4x8x32xbf16>, vector<4x8x32xf32> -> vector<4x8x32xf32>
    "tpu.trace_stop"() : () -> ()
    %cst_94 = arith.constant dense<0.000000e+00> : vector<8x32xf32>
    %127 = vector.multi_reduction <add>, %126, %cst_94 [0] : vector<4x8x32xf32> to vector<8x32xf32>
    %128 = vector.broadcast %99 : vector<1x32xf32> to vector<8x32xf32>
    %129 = arith.addf %127, %128 : vector<8x32xf32>
    %c0_95 = arith.constant 0 : index
    %c0_96 = arith.constant 0 : index
    %c0_97 = arith.constant 0 : index
    %130 = vector.load %arg26[%c0_95, %c0_96, %c0_97] : memref<1x1x32xf32, #tpu.memory_space<vmem>>, vector<1x1x32xf32>
    %131 = vector.shape_cast %130 : vector<1x1x32xf32> to vector<1x32xf32>
    %c0_98 = arith.constant 0 : index
    %c0_99 = arith.constant 0 : index
    %c0_100 = arith.constant 0 : index
    %132 = vector.load %arg27[%c0_98, %c0_99, %c0_100] : memref<1x1x32xf32, #tpu.memory_space<vmem>>, vector<1x1x32xf32>
    %133 = vector.shape_cast %132 : vector<1x1x32xf32> to vector<1x32xf32>
    %134 = arith.addf %79, %129 : vector<8x32xf32>
    %cst_101 = arith.constant dense<0.000000e+00> : vector<8xf32>
    %135 = vector.multi_reduction <add>, %134, %cst_101 [1] : vector<8x32xf32> to vector<8xf32>
    %136 = vector.shape_cast %135 : vector<8xf32> to vector<8x1xf32>
    %cst_102 = arith.constant 3.200000e+01 : f32
    %137 = vector.broadcast %cst_102 : f32 to vector<8x1xf32>
    %138 = arith.divf %136, %137 : vector<8x1xf32>
    %139 = vector.broadcast %138 : vector<8x1xf32> to vector<8x32xf32>
    %140 = arith.subf %134, %139 : vector<8x32xf32>
    %141 = arith.mulf %140, %140 : vector<8x32xf32>
    %cst_103 = arith.constant dense<0.000000e+00> : vector<8xf32>
    %142 = vector.multi_reduction <add>, %141, %cst_103 [1] : vector<8x32xf32> to vector<8xf32>
    %143 = vector.shape_cast %142 : vector<8xf32> to vector<8x1xf32>
    %cst_104 = arith.constant 3.200000e+01 : f32
    %144 = vector.broadcast %cst_104 : f32 to vector<8x1xf32>
    %145 = arith.divf %143, %144 : vector<8x1xf32>
    %cst_105 = arith.constant 9.99999974E-6 : f32
    %146 = vector.broadcast %cst_105 : f32 to vector<8x1xf32>
    %147 = arith.addf %145, %146 : vector<8x1xf32>
    %148 = math.rsqrt %147 : vector<8x1xf32>
    %149 = vector.broadcast %148 : vector<8x1xf32> to vector<8x32xf32>
    %150 = arith.mulf %140, %149 : vector<8x32xf32>
    %151 = vector.broadcast %131 : vector<1x32xf32> to vector<8x32xf32>
    %152 = arith.mulf %150, %151 : vector<8x32xf32>
    %153 = vector.broadcast %133 : vector<1x32xf32> to vector<8x32xf32>
    %154 = arith.addf %152, %153 : vector<8x32xf32>
    %155 = arith.truncf %154 : vector<8x32xf32> to vector<8x32xbf16>
    %c0_106 = arith.constant 0 : index
    %c0_107 = arith.constant 0 : index
    %c0_108 = arith.constant 0 : index
    %156 = vector.load %arg20[%c0_106, %c0_107, %c0_108] : memref<1x32x64xbf16, #tpu.memory_space<vmem>>, vector<1x32x64xbf16>
    %157 = vector.shape_cast %156 : vector<1x32x64xbf16> to vector<32x64xbf16>
    %c0_109 = arith.constant 0 : index
    %c0_110 = arith.constant 0 : index
    %c0_111 = arith.constant 0 : index
    %158 = vector.load %arg21[%c0_109, %c0_110, %c0_111] : memref<1x1x64xf32, #tpu.memory_space<vmem>>, vector<1x1x64xf32>
    %159 = vector.shape_cast %158 : vector<1x1x64xf32> to vector<1x64xf32>
    %c0_112 = arith.constant 0 : index
    %c0_113 = arith.constant 0 : index
    %c0_114 = arith.constant 0 : index
    %160 = vector.load %arg22[%c0_112, %c0_113, %c0_114] : memref<1x64x32xbf16, #tpu.memory_space<vmem>>, vector<1x64x32xbf16>
    %161 = vector.shape_cast %160 : vector<1x64x32xbf16> to vector<64x32xbf16>
    %c0_115 = arith.constant 0 : index
    %c0_116 = arith.constant 0 : index
    %c0_117 = arith.constant 0 : index
    %162 = vector.load %arg23[%c0_115, %c0_116, %c0_117] : memref<1x1x32xf32, #tpu.memory_space<vmem>>, vector<1x1x32xf32>
    %163 = vector.shape_cast %162 : vector<1x1x32xf32> to vector<1x32xf32>
    %cst_118 = arith.constant dense<0.000000e+00> : vector<8x64xf32>
    %164 = tpu.matmul %155, %157, %cst_118 {dimension_numbers = #tpu.dot_dimension_numbers<[1], [0], [0], [1], [0, 0, 1, 1], [], []>} : vector<8x32xbf16>, vector<32x64xbf16>, vector<8x64xf32> -> vector<8x64xf32>
    %165 = vector.broadcast %159 : vector<1x64xf32> to vector<8x64xf32>
    %166 = arith.addf %164, %165 : vector<8x64xf32>
    %cst_119 = arith.constant 0.000000e+00 : f32
    %167 = vector.broadcast %cst_119 : f32 to vector<8x64xf32>
    %168 = arith.maximumf %166, %167 : vector<8x64xf32>
    %169 = arith.truncf %168 : vector<8x64xf32> to vector<8x64xbf16>
    %cst_120 = arith.constant dense<0.000000e+00> : vector<8x32xf32>
    %170 = tpu.matmul %169, %161, %cst_120 {dimension_numbers = #tpu.dot_dimension_numbers<[1], [0], [0], [1], [0, 0, 1, 1], [], []>} : vector<8x64xbf16>, vector<64x32xbf16>, vector<8x32xf32> -> vector<8x32xf32>
    %171 = vector.broadcast %163 : vector<1x32xf32> to vector<8x32xf32>
    %172 = arith.addf %170, %171 : vector<8x32xf32>
    %c0_121 = arith.constant 0 : index
    %c0_122 = arith.constant 0 : index
    %c0_123 = arith.constant 0 : index
    %173 = vector.load %arg28[%c0_121, %c0_122, %c0_123] : memref<1x1x32xf32, #tpu.memory_space<vmem>>, vector<1x1x32xf32>
    %174 = vector.shape_cast %173 : vector<1x1x32xf32> to vector<1x32xf32>
    %c0_124 = arith.constant 0 : index
    %c0_125 = arith.constant 0 : index
    %c0_126 = arith.constant 0 : index
    %175 = vector.load %arg29[%c0_124, %c0_125, %c0_126] : memref<1x1x32xf32, #tpu.memory_space<vmem>>, vector<1x1x32xf32>
    %176 = vector.shape_cast %175 : vector<1x1x32xf32> to vector<1x32xf32>
    %177 = arith.addf %154, %172 : vector<8x32xf32>
    %cst_127 = arith.constant dense<0.000000e+00> : vector<8xf32>
    %178 = vector.multi_reduction <add>, %177, %cst_127 [1] : vector<8x32xf32> to vector<8xf32>
    %179 = vector.shape_cast %178 : vector<8xf32> to vector<8x1xf32>
    %cst_128 = arith.constant 3.200000e+01 : f32
    %180 = vector.broadcast %cst_128 : f32 to vector<8x1xf32>
    %181 = arith.divf %179, %180 : vector<8x1xf32>
    %182 = vector.broadcast %181 : vector<8x1xf32> to vector<8x32xf32>
    %183 = arith.subf %177, %182 : vector<8x32xf32>
    %184 = arith.mulf %183, %183 : vector<8x32xf32>
    %cst_129 = arith.constant dense<0.000000e+00> : vector<8xf32>
    %185 = vector.multi_reduction <add>, %184, %cst_129 [1] : vector<8x32xf32> to vector<8xf32>
    %186 = vector.shape_cast %185 : vector<8xf32> to vector<8x1xf32>
    %cst_130 = arith.constant 3.200000e+01 : f32
    %187 = vector.broadcast %cst_130 : f32 to vector<8x1xf32>
    %188 = arith.divf %186, %187 : vector<8x1xf32>
    %cst_131 = arith.constant 9.99999974E-6 : f32
    %189 = vector.broadcast %cst_131 : f32 to vector<8x1xf32>
    %190 = arith.addf %188, %189 : vector<8x1xf32>
    %191 = math.rsqrt %190 : vector<8x1xf32>
    %192 = vector.broadcast %191 : vector<8x1xf32> to vector<8x32xf32>
    %193 = arith.mulf %183, %192 : vector<8x32xf32>
    %194 = vector.broadcast %174 : vector<1x32xf32> to vector<8x32xf32>
    %195 = arith.mulf %193, %194 : vector<8x32xf32>
    %196 = vector.broadcast %176 : vector<1x32xf32> to vector<8x32xf32>
    %197 = arith.addf %195, %196 : vector<8x32xf32>
    %c0_132 = arith.constant 0 : index
    %c0_133 = arith.constant 0 : index
    %198 = vector.load %arg31[%c0_132, %c0_133] : memref<8x32xf32, #tpu.memory_space<vmem>>, vector<8x32xf32>
    tpu.vector_store %arg31[%c0_132, %c0_133], %197 {strides = array<i32>} : memref<8x32xf32, #tpu.memory_space<vmem>>, vector<8x32xf32>,
    %c1_i32 = arith.constant 1 : i32
    %199 = arith.cmpi eq, %arg1, %c1_i32 : i32
    %200 = arith.extui %199 : i1 to i32
    %c0_i32_134 = arith.constant 0 : i32
    %201 = arith.cmpi ne, %200, %c0_i32_134 : i32
    scf.if %201 {
      %202 = arith.truncf %197 : vector<8x32xf32> to vector<8x32xbf16>
      %c0_135 = arith.constant 0 : index
      %c0_136 = arith.constant 0 : index
      %c0_137 = arith.constant 0 : index
      %203 = vector.load %arg30[%c0_135, %c0_136, %c0_137] : memref<1x8x32xbf16, #tpu.memory_space<vmem>>, vector<1x8x32xbf16>
      %204 = vector.shape_cast %203 : vector<1x8x32xbf16> to vector<8x32xbf16>
      %205 = vector.shape_cast %202 : vector<8x32xbf16> to vector<1x8x32xbf16>
      tpu.vector_store %arg30[%c0_135, %c0_136, %c0_137], %205 {strides = array<i32>} : memref<1x8x32xbf16, #tpu.memory_space<vmem>>, vector<1x8x32xbf16>,
    } else {
    }
    return
  }
  func.func @transform_0(%arg0: i32, %arg1: i32) -> (i32, i32, i32) {
    %c0_i32 = arith.constant 0 : i32
    %c0_i32_0 = arith.constant 0 : i32
    %c0_i32_1 = arith.constant 0 : i32
    return %arg0, %c0_i32, %c0_i32_0 : i32, i32, i32
  }
  func.func @transform_1(%arg0: i32, %arg1: i32) -> (i32, i32, i32) {
    %c0_i32 = arith.constant 0 : i32
    %c0_i32_0 = arith.constant 0 : i32
    %c0_i32_1 = arith.constant 0 : i32
    return %arg0, %c0_i32, %c0_i32_0 : i32, i32, i32
  }
  func.func @transform_2(%arg0: i32, %arg1: i32) -> (i32, i32, i32, i32) {
    %c0_i32 = arith.constant 0 : i32
    %c0_i32_0 = arith.constant 0 : i32
    %c0_i32_1 = arith.constant 0 : i32
    %c0_i32_2 = arith.constant 0 : i32
    return %arg1, %c0_i32, %c0_i32_0, %c0_i32_1 : i32, i32, i32, i32
  }
  func.func @transform_3(%arg0: i32, %arg1: i32) -> (i32, i32, i32, i32) {
    %c0_i32 = arith.constant 0 : i32
    %c0_i32_0 = arith.constant 0 : i32
    %c0_i32_1 = arith.constant 0 : i32
    %c0_i32_2 = arith.constant 0 : i32
    return %arg1, %c0_i32, %c0_i32_0, %c0_i32_1 : i32, i32, i32, i32
  }
  func.func @transform_4(%arg0: i32, %arg1: i32) -> (i32, i32, i32, i32) {
    %c0_i32 = arith.constant 0 : i32
    %c0_i32_0 = arith.constant 0 : i32
    %c0_i32_1 = arith.constant 0 : i32
    %c0_i32_2 = arith.constant 0 : i32
    return %arg1, %c0_i32, %c0_i32_0, %c0_i32_1 : i32, i32, i32, i32
  }
  func.func @transform_5(%arg0: i32, %arg1: i32) -> (i32, i32, i32, i32) {
    %c0_i32 = arith.constant 0 : i32
    %c0_i32_0 = arith.constant 0 : i32
    %c0_i32_1 = arith.constant 0 : i32
    %c0_i32_2 = arith.constant 0 : i32
    return %arg1, %c0_i32, %c0_i32_0, %c0_i32_1 : i32, i32, i32, i32
  }
  func.func @transform_6(%arg0: i32, %arg1: i32) -> (i32, i32, i32, i32) {
    %c0_i32 = arith.constant 0 : i32
    %c0_i32_0 = arith.constant 0 : i32
    %c0_i32_1 = arith.constant 0 : i32
    %c0_i32_2 = arith.constant 0 : i32
    return %arg1, %c0_i32, %c0_i32_0, %c0_i32_1 : i32, i32, i32, i32
  }
  func.func @transform_7(%arg0: i32, %arg1: i32) -> (i32, i32, i32, i32) {
    %c0_i32 = arith.constant 0 : i32
    %c0_i32_0 = arith.constant 0 : i32
    %c0_i32_1 = arith.constant 0 : i32
    %c0_i32_2 = arith.constant 0 : i32
    return %arg1, %c0_i32, %c0_i32_0, %c0_i32_1 : i32, i32, i32, i32
  }
  func.func @transform_8(%arg0: i32, %arg1: i32) -> (i32, i32, i32, i32) {
    %c0_i32 = arith.constant 0 : i32
    %c0_i32_0 = arith.constant 0 : i32
    %c0_i32_1 = arith.constant 0 : i32
    %c0_i32_2 = arith.constant 0 : i32
    return %arg1, %c0_i32, %c0_i32_0, %c0_i32_1 : i32, i32, i32, i32
  }
  func.func @transform_9(%arg0: i32, %arg1: i32) -> (i32, i32, i32) {
    %c0_i32 = arith.constant 0 : i32
    %c0_i32_0 = arith.constant 0 : i32
    %c0_i32_1 = arith.constant 0 : i32
    return %arg1, %c0_i32, %c0_i32_0 : i32, i32, i32
  }
  func.func @transform_10(%arg0: i32, %arg1: i32) -> (i32, i32, i32, i32) {
    %c0_i32 = arith.constant 0 : i32
    %c0_i32_0 = arith.constant 0 : i32
    %c0_i32_1 = arith.constant 0 : i32
    %c0_i32_2 = arith.constant 0 : i32
    return %arg1, %c0_i32, %c0_i32_0, %c0_i32_1 : i32, i32, i32, i32
  }
  func.func @transform_11(%arg0: i32, %arg1: i32) -> (i32, i32, i32, i32) {
    %c0_i32 = arith.constant 0 : i32
    %c0_i32_0 = arith.constant 0 : i32
    %c0_i32_1 = arith.constant 0 : i32
    %c0_i32_2 = arith.constant 0 : i32
    return %arg1, %c0_i32, %c0_i32_0, %c0_i32_1 : i32, i32, i32, i32
  }
  func.func @transform_12(%arg0: i32, %arg1: i32) -> (i32, i32, i32, i32) {
    %c0_i32 = arith.constant 0 : i32
    %c0_i32_0 = arith.constant 0 : i32
    %c0_i32_1 = arith.constant 0 : i32
    %c0_i32_2 = arith.constant 0 : i32
    return %arg1, %c0_i32, %c0_i32_0, %c0_i32_1 : i32, i32, i32, i32
  }
  func.func @transform_13(%arg0: i32, %arg1: i32) -> (i32, i32, i32, i32) {
    %c0_i32 = arith.constant 0 : i32
    %c0_i32_0 = arith.constant 0 : i32
    %c0_i32_1 = arith.constant 0 : i32
    %c0_i32_2 = arith.constant 0 : i32
    return %arg1, %c0_i32, %c0_i32_0, %c0_i32_1 : i32, i32, i32, i32
  }
  func.func @transform_14(%arg0: i32, %arg1: i32) -> (i32, i32, i32, i32) {
    %c0_i32 = arith.constant 0 : i32
    %c0_i32_0 = arith.constant 0 : i32
    %c0_i32_1 = arith.constant 0 : i32
    %c0_i32_2 = arith.constant 0 : i32
    return %arg1, %c0_i32, %c0_i32_0, %c0_i32_1 : i32, i32, i32, i32
  }
  func.func @transform_15(%arg0: i32, %arg1: i32) -> (i32, i32, i32, i32) {
    %c0_i32 = arith.constant 0 : i32
    %c0_i32_0 = arith.constant 0 : i32
    %c0_i32_1 = arith.constant 0 : i32
    %c0_i32_2 = arith.constant 0 : i32
    return %arg1, %c0_i32, %c0_i32_0, %c0_i32_1 : i32, i32, i32, i32
  }
  func.func @transform_16(%arg0: i32, %arg1: i32) -> (i32, i32, i32, i32) {
    %c0_i32 = arith.constant 0 : i32
    %c0_i32_0 = arith.constant 0 : i32
    %c0_i32_1 = arith.constant 0 : i32
    %c0_i32_2 = arith.constant 0 : i32
    return %arg1, %c0_i32, %c0_i32_0, %c0_i32_1 : i32, i32, i32, i32
  }
  func.func @transform_17(%arg0: i32, %arg1: i32) -> (i32, i32, i32) {
    %c0_i32 = arith.constant 0 : i32
    %c0_i32_0 = arith.constant 0 : i32
    %c0_i32_1 = arith.constant 0 : i32
    return %arg1, %c0_i32, %c0_i32_0 : i32, i32, i32
  }
  func.func @transform_18(%arg0: i32, %arg1: i32) -> (i32, i32, i32) {
    %c0_i32 = arith.constant 0 : i32
    %c0_i32_0 = arith.constant 0 : i32
    %c0_i32_1 = arith.constant 0 : i32
    return %arg1, %c0_i32, %c0_i32_0 : i32, i32, i32
  }
  func.func @transform_19(%arg0: i32, %arg1: i32) -> (i32, i32, i32) {
    %c0_i32 = arith.constant 0 : i32
    %c0_i32_0 = arith.constant 0 : i32
    %c0_i32_1 = arith.constant 0 : i32
    return %arg1, %c0_i32, %c0_i32_0 : i32, i32, i32
  }
  func.func @transform_20(%arg0: i32, %arg1: i32) -> (i32, i32, i32) {
    %c0_i32 = arith.constant 0 : i32
    %c0_i32_0 = arith.constant 0 : i32
    %c0_i32_1 = arith.constant 0 : i32
    return %arg1, %c0_i32, %c0_i32_0 : i32, i32, i32
  }
  func.func @transform_21(%arg0: i32, %arg1: i32) -> (i32, i32, i32) {
    %c0_i32 = arith.constant 0 : i32
    %c0_i32_0 = arith.constant 0 : i32
    %c0_i32_1 = arith.constant 0 : i32
    return %arg1, %c0_i32, %c0_i32_0 : i32, i32, i32
  }
  func.func @transform_22(%arg0: i32, %arg1: i32) -> (i32, i32, i32) {
    %c0_i32 = arith.constant 0 : i32
    %c0_i32_0 = arith.constant 0 : i32
    %c0_i32_1 = arith.constant 0 : i32
    return %arg1, %c0_i32, %c0_i32_0 : i32, i32, i32
  }
  func.func @transform_23(%arg0: i32, %arg1: i32) -> (i32, i32, i32) {
    %c0_i32 = arith.constant 0 : i32
    %c0_i32_0 = arith.constant 0 : i32
    %c0_i32_1 = arith.constant 0 : i32
    return %arg1, %c0_i32, %c0_i32_0 : i32, i32, i32
  }
  func.func @transform_24(%arg0: i32, %arg1: i32) -> (i32, i32, i32) {
    %c0_i32 = arith.constant 0 : i32
    %c0_i32_0 = arith.constant 0 : i32
    %c0_i32_1 = arith.constant 0 : i32
    return %arg1, %c0_i32, %c0_i32_0 : i32, i32, i32
  }
  func.func @transform_25(%arg0: i32, %arg1: i32) -> (i32, i32, i32) {
    %c0_i32 = arith.constant 0 : i32
    %c0_i32_0 = arith.constant 0 : i32
    %c0_i32_1 = arith.constant 0 : i32
    return %arg1, %c0_i32, %c0_i32_0 : i32, i32, i32
  }
  func.func @transform_26(%arg0: i32, %arg1: i32) -> (i32, i32, i32) {
    %c0_i32 = arith.constant 0 : i32
    %c0_i32_0 = arith.constant 0 : i32
    %c0_i32_1 = arith.constant 0 : i32
    return %arg1, %c0_i32, %c0_i32_0 : i32, i32, i32
  }
  func.func @transform_27(%arg0: i32, %arg1: i32) -> (i32, i32, i32) {
    %c0_i32 = arith.constant 0 : i32
    %c0_i32_0 = arith.constant 0 : i32
    %c0_i32_1 = arith.constant 0 : i32
    return %arg1, %c0_i32, %c0_i32_0 : i32, i32, i32
  }
  func.func @transform_28(%arg0: i32, %arg1: i32) -> (i32, i32, i32) {
    %c0_i32 = arith.constant 0 : i32
    %c0_i32_0 = arith.constant 0 : i32
    %c0_i32_1 = arith.constant 0 : i32
    return %arg0, %c0_i32, %c0_i32_0 : i32, i32, i32
  }
}

</mosaic_0001>

<llo_original>
// kernel: tpu_custom_call.1
$region0: #{tpu_custom_call.1}
  #allocation0 [shape = 'u32[]', space=smem, size = 0x4, offset = 0x4, fixed_abs, tag = 'smem constant byte address 0x4 - core index']
  #allocation1 [shape = 'u32[144,128]{1,0:T(1,128)}', space=vmem, size = 0x12000, scoped, tag = 'internal scratch']
  #allocation2 [shape = 'f32[8,32]{1,0:T(8,128)}', space=vmem, size = 0x1000, scoped, tag = 'scratch operand']
  #allocation3 [shape = 'bf16[4,8,32]{2,1,0:T(8,128)(2,1)}', space=vmem, size = 0x2000, scoped, tag = 'scratch operand']
  %s0 = inlined_call_operand.vmem [shape: f32[2,8,32], index: 0, kind: input, shape index: {}]
  %s1 = inlined_call_operand.vmem [shape: bf16[2,8,32], index: 1, kind: input, shape index: {}]
  %s2 = inlined_call_operand.vmem [shape: bf16[2,4,32,8], index: 2, kind: input, shape index: {}]
  %s3 = inlined_call_operand.vmem [shape: f32[2,4,1,8], index: 3, kind: input, shape index: {}]
  %s4 = inlined_call_operand.vmem [shape: bf16[2,4,32,8], index: 4, kind: input, shape index: {}]
  %s5 = inlined_call_operand.vmem [shape: f32[2,4,1,8], index: 5, kind: input, shape index: {}]
  %s6 = inlined_call_operand.vmem [shape: bf16[2,4,32,8], index: 6, kind: input, shape index: {}]
  %s7 = inlined_call_operand.vmem [shape: f32[2,4,1,8], index: 7, kind: input, shape index: {}]
  %s8 = inlined_call_operand.vmem [shape: bf16[2,4,8,32], index: 8, kind: input, shape index: {}]
  %s9 = inlined_call_operand.vmem [shape: f32[2,1,32], index: 9, kind: input, shape index: {}]
  %s10 = inlined_call_operand.vmem [shape: bf16[2,4,32,8], index: 10, kind: input, shape index: {}]
  %s11 = inlined_call_operand.vmem [shape: f32[2,4,1,8], index: 11, kind: input, shape index: {}]
  %s12 = inlined_call_operand.vmem [shape: bf16[2,4,32,8], index: 12, kind: input, shape index: {}]
  %s13 = inlined_call_operand.vmem [shape: f32[2,4,1,8], index: 13, kind: input, shape index: {}]
  %s14 = inlined_call_operand.vmem [shape: bf16[2,4,32,8], index: 14, kind: input, shape index: {}]
  %s15 = inlined_call_operand.vmem [shape: f32[2,4,1,8], index: 15, kind: input, shape index: {}]
  %s16 = inlined_call_operand.vmem [shape: bf16[2,4,8,32], index: 16, kind: input, shape index: {}]
  %s17 = inlined_call_operand.vmem [shape: f32[2,1,32], index: 17, kind: input, shape index: {}]
  %s18 = inlined_call_operand.vmem [shape: bf16[2,32,64], index: 18, kind: input, shape index: {}]
  %s19 = inlined_call_operand.vmem [shape: f32[2,1,64], index: 19, kind: input, shape index: {}]
  %s20 = inlined_call_operand.vmem [shape: bf16[2,64,32], index: 20, kind: input, shape index: {}]
  %s21 = inlined_call_operand.vmem [shape: f32[2,1,32], index: 21, kind: input, shape index: {}]
  %s22 = inlined_call_operand.vmem [shape: f32[2,1,32], index: 22, kind: input, shape index: {}]
  %s23 = inlined_call_operand.vmem [shape: f32[2,1,32], index: 23, kind: input, shape index: {}]
  %s24 = inlined_call_operand.vmem [shape: f32[2,1,32], index: 24, kind: input, shape index: {}]
  %s25 = inlined_call_operand.vmem [shape: f32[2,1,32], index: 25, kind: input, shape index: {}]
  %s26 = inlined_call_operand.vmem [shape: f32[2,1,32], index: 26, kind: input, shape index: {}]
  %s27 = inlined_call_operand.vmem [shape: f32[2,1,32], index: 27, kind: input, shape index: {}]
  %s28 = inlined_call_operand.hbm [shape: bf16[2,8,32], index: 28, kind: output, shape index: {}]
  %s29 = sld [smem:[#allocation0]]
  $region153: #{tpu_custom_call.1} parent=0
    _
  %s31 = ssub.s32 1, %s29
  %s32 = scalar_select 0, %s31, %s29
  $region1: #{tpu_custom_call.1} parent=0
    #allocation4 [shape = 'u8[4096]{0}', space=vmem, size = 0x1000, scoped, tag = 'output window, operand 0']
    #allocation5 [shape = 's32[2]{0}', space=sflag, size = 0x8, scoped, tag = 'scoped memory for tpu_custom_call.1']
    %33 = vsyncpa [#allocation5], 0
    %s34 = scalar_lea.sflag [#allocation5], 1
    %35 = vsyncpa %s34, 0
    loop: start=0, step=1, limit=6
    $region2: #{tpu_custom_call.1} parent=1 // loop_pre_header
      _
    $region3: #{tpu_custom_call.1} parent=1 // loop_header
      %s37 = sphi 0, %s41
      %p38 = scmp.ge.s32.totalorder %s37, 6
      %s44 = sphi 0, %s56
      %s45 = sphi 0, %s52
      %s46 = sphi 0, %s44
      %s47 = sphi 0, %s45
      %s48 = sphi 0, %s46
      %s49 = sphi 0, %s47
      %s59 = sphi 0, %s61
      %s62 = sphi 0, %s59
      %s63 = sphi 0, %s62
      %s79 = sphi 0, %s63
      %s85 = sphi 0, %s87
      %s88 = sphi 0, %s85
      %s89 = sphi 0, %s88
      %s105 = sphi 0, %s89
      %s111 = sphi 0, %s113
      %s114 = sphi 0, %s111
      %s115 = sphi 0, %s114
      %s131 = sphi 0, %s115
      %s137 = sphi 0, %s139
      %s140 = sphi 0, %s137
      %s141 = sphi 0, %s140
      %s157 = sphi 0, %s141
      %s163 = sphi 0, %s165
      %s166 = sphi 0, %s163
      %s167 = sphi 0, %s166
      %s183 = sphi 0, %s167
      %s189 = sphi 0, %s191
      %s192 = sphi 0, %s189
      %s193 = sphi 0, %s192
      %s209 = sphi 0, %s193
      %s215 = sphi 0, %s217
      %s218 = sphi 0, %s215
      %s219 = sphi 0, %s218
      %s235 = sphi 0, %s219
      %s241 = sphi 0, %s243
      %s244 = sphi 0, %s241
      %s245 = sphi 0, %s244
      %s261 = sphi 0, %s245
      %s267 = sphi 0, %s269
      %s270 = sphi 0, %s267
      %s271 = sphi 0, %s270
      %s287 = sphi 0, %s271
      %s293 = sphi 0, %s295
      %s296 = sphi 0, %s293
      %s297 = sphi 0, %s296
      %s313 = sphi 0, %s297
      %s319 = sphi 0, %s321
      %s322 = sphi 0, %s319
      %s323 = sphi 0, %s322
      %s339 = sphi 0, %s323
      %s345 = sphi 0, %s347
      %s348 = sphi 0, %s345
      %s349 = sphi 0, %s348
      %s365 = sphi 0, %s349
      %s371 = sphi 0, %s373
      %s374 = sphi 0, %s371
      %s375 = sphi 0, %s374
      %s391 = sphi 0, %s375
      %s397 = sphi 0, %s399
      %s400 = sphi 0, %s397
      %s401 = sphi 0, %s400
      %s417 = sphi 0, %s401
      %s423 = sphi 0, %s425
      %s426 = sphi 0, %s423
      %s427 = sphi 0, %s426
      %s443 = sphi 0, %s427
      %s449 = sphi 0, %s451
      %s452 = sphi 0, %s449
      %s453 = sphi 0, %s452
      %s469 = sphi 0, %s453
      %s475 = sphi 0, %s477
      %s478 = sphi 0, %s475
      %s479 = sphi 0, %s478
      %s495 = sphi 0, %s479
      %s501 = sphi 0, %s503
      %s504 = sphi 0, %s501
      %s505 = sphi 0, %s504
      %s521 = sphi 0, %s505
      %s527 = sphi 0, %s529
      %s530 = sphi 0, %s527
      %s531 = sphi 0, %s530
      %s547 = sphi 0, %s531
      %s553 = sphi 0, %s555
      %s556 = sphi 0, %s553
      %s557 = sphi 0, %s556
      %s573 = sphi 0, %s557
      %s579 = sphi 0, %s581
      %s582 = sphi 0, %s579
      %s583 = sphi 0, %s582
      %s599 = sphi 0, %s583
      %s605 = sphi 0, %s607
      %s608 = sphi 0, %s605
      %s609 = sphi 0, %s608
      %s625 = sphi 0, %s609
      %s631 = sphi 0, %s633
      %s634 = sphi 0, %s631
      %s635 = sphi 0, %s634
      %s651 = sphi 0, %s635
      %s657 = sphi 0, %s659
      %s660 = sphi 0, %s657
      %s661 = sphi 0, %s660
      %s677 = sphi 0, %s661
      %s683 = sphi 0, %s685
      %s686 = sphi 0, %s683
      %s687 = sphi 0, %s686
      %s703 = sphi 0, %s687
      %s709 = sphi 0, %s711
      %s712 = sphi 0, %s709
      %s713 = sphi 0, %s712
      %s729 = sphi 0, %s713
      %s735 = sphi 0, %s737
      %s738 = sphi 0, %s735
      %s739 = sphi 0, %s738
      %s755 = sphi 0, %s739
      %s761 = sphi 0, %s763
      %s764 = sphi 0, %s761
      %s765 = sphi 0, %s764
      %s781 = sphi 0, %s765
      %s787 = sphi 0, %s789
      %s790 = sphi 0, %s787
      %s791 = sphi 0, %s790
      %s807 = sphi 0, %s791
    $region4: #{tpu_custom_call.1} parent=1 // loop_header_branch
      %40 = sbr.rel (%p38) target = $region8
    $region5: #{tpu_custom_call.1} parent=1 // loop_body
      %s42 = ssub.s32 %s37, 1
      %s43 = ssub.s32 %s37, 2
      %s50 = sadd.s32 1, %s45
      %p51 = scmp.ge.s32.totalorder %s50, 2
      %s52 = scalar_select %p51, 0, %s50
      %s53 = sadd.s32 1, %s44
      %s54 = scalar_select %p51, %s53, %s44
      %p55 = scmp.ge.s32.totalorder %s54, 2
      %s56 = scalar_select %p55, 0, %s54
      %s57 = ssub.s32 %s44, %s56
      %p58 = scmp.eq.s32.totalorder %s57, 0
      %s60 = sadd.s32 %s59, 1
      %s61 = scalar_select %p58, %s59, %s60
      %p64 = pneg %p58
      %p65 = scmp.eq.s32.totalorder %s37, 3
      %p66 = por %p64, %p65
      %p67 = scmp.ne.s32.totalorder %s59, %s62
      %p68 = scmp.eq.s32.totalorder %s37, 0
      %p69 = por %p67, %p68
      %p70 = scmp.ne.s32.totalorder %s59, %s62
      %p71 = scmp.eq.s32.totalorder %s42, 3
      %p72 = por %p70, %p71
      %p73 = scmp.ne.s32.totalorder %s62, %s63
      %p74 = scmp.eq.s32.totalorder %s42, 0
      %p75 = por %p73, %p74
      %p76 = scmp.ne.s32.totalorder %s62, %s63
      %p77 = scmp.eq.s32.totalorder %s43, 3
      %p78 = por %p76, %p77
      %p80 = scmp.ne.s32.totalorder %s63, %s79
      %p81 = scmp.eq.s32.totalorder %s43, 0
      %p82 = por %p80, %p81
      %s83 = ssub.s32 %s44, %s56
      %p84 = scmp.eq.s32.totalorder %s83, 0
      %s86 = sadd.s32 %s85, 1
      %s87 = scalar_select %p84, %s85, %s86
      %p90 = pneg %p84
      %p91 = scmp.eq.s32.totalorder %s37, 3
      %p92 = por %p90, %p91
      %p93 = scmp.ne.s32.totalorder %s85, %s88
      %p94 = scmp.eq.s32.totalorder %s37, 0
      %p95 = por %p93, %p94
      %p96 = scmp.ne.s32.totalorder %s85, %s88
      %p97 = scmp.eq.s32.totalorder %s42, 3
      %p98 = por %p96, %p97
      %p99 = scmp.ne.s32.totalorder %s88, %s89
      %p100 = scmp.eq.s32.totalorder %s42, 0
      %p101 = por %p99, %p100
      %p102 = scmp.ne.s32.totalorder %s88, %s89
      %p103 = scmp.eq.s32.totalorder %s43, 3
      %p104 = por %p102, %p103
      %p106 = scmp.ne.s32.totalorder %s89, %s105
      %p107 = scmp.eq.s32.totalorder %s43, 0
      %p108 = por %p106, %p107
      %s109 = ssub.s32 %s45, %s52
      %p110 = scmp.eq.s32.totalorder %s109, 0
      %s112 = sadd.s32 %s111, 1
      %s113 = scalar_select %p110, %s111, %s112
      %p116 = pneg %p110
      %p117 = scmp.eq.s32.totalorder %s37, 3
      %p118 = por %p116, %p117
      %p119 = scmp.ne.s32.totalorder %s111, %s114
      %p120 = scmp.eq.s32.totalorder %s37, 0
      %p121 = por %p119, %p120
      %p122 = scmp.ne.s32.totalorder %s111, %s114
      %p123 = scmp.eq.s32.totalorder %s42, 3
      %p124 = por %p122, %p123
      %p125 = scmp.ne.s32.totalorder %s114, %s115
      %p126 = scmp.eq.s32.totalorder %s42, 0
      %p127 = por %p125, %p126
      %p128 = scmp.ne.s32.totalorder %s114, %s115
      %p129 = scmp.eq.s32.totalorder %s43, 3
      %p130 = por %p128, %p129
      %p132 = scmp.ne.s32.totalorder %s115, %s131
      %p133 = scmp.eq.s32.totalorder %s43, 0
      %p134 = por %p132, %p133
      %s135 = ssub.s32 %s45, %s52
      %p136 = scmp.eq.s32.totalorder %s135, 0
      %s138 = sadd.s32 %s137, 1
      %s139 = scalar_select %p136, %s137, %s138
      %p142 = pneg %p136
      %p143 = scmp.eq.s32.totalorder %s37, 3
      %p144 = por %p142, %p143
      %p145 = scmp.ne.s32.totalorder %s137, %s140
      %p146 = scmp.eq.s32.totalorder %s37, 0
      %p147 = por %p145, %p146
      %p148 = scmp.ne.s32.totalorder %s137, %s140
      %p149 = scmp.eq.s32.totalorder %s42, 3
      %p150 = por %p148, %p149
      %p151 = scmp.ne.s32.totalorder %s140, %s141
      %p152 = scmp.eq.s32.totalorder %s42, 0
      %p153 = por %p151, %p152
      %p154 = scmp.ne.s32.totalorder %s140, %s141
      %p155 = scmp.eq.s32.totalorder %s43, 3
      %p156 = por %p154, %p155
      %p158 = scmp.ne.s32.totalorder %s141, %s157
      %p159 = scmp.eq.s32.totalorder %s43, 0
      %p160 = por %p158, %p159
      %s161 = ssub.s32 %s45, %s52
      %p162 = scmp.eq.s32.totalorder %s161, 0
      %s164 = sadd.s32 %s163, 1
      %s165 = scalar_select %p162, %s163, %s164
      %p168 = pneg %p162
      %p169 = scmp.eq.s32.totalorder %s37, 3
      %p170 = por %p168, %p169
      %p171 = scmp.ne.s32.totalorder %s163, %s166
      %p172 = scmp.eq.s32.totalorder %s37, 0
      %p173 = por %p171, %p172
      %p174 = scmp.ne.s32.totalorder %s163, %s166
      %p175 = scmp.eq.s32.totalorder %s42, 3
      %p176 = por %p174, %p175
      %p177 = scmp.ne.s32.totalorder %s166, %s167
      %p178 = scmp.eq.s32.totalorder %s42, 0
      %p179 = por %p177, %p178
      %p180 = scmp.ne.s32.totalorder %s166, %s167
      %p181 = scmp.eq.s32.totalorder %s43, 3
      %p182 = por %p180, %p181
      %p184 = scmp.ne.s32.totalorder %s167, %s183
      %p185 = scmp.eq.s32.totalorder %s43, 0
      %p186 = por %p184, %p185
      %s187 = ssub.s32 %s45, %s52
      %p188 = scmp.eq.s32.totalorder %s187, 0
      %s190 = sadd.s32 %s189, 1
      %s191 = scalar_select %p188, %s189, %s190
      %p194 = pneg %p188
      %p195 = scmp.eq.s32.totalorder %s37, 3
      %p196 = por %p194, %p195
      %p197 = scmp.ne.s32.totalorder %s189, %s192
      %p198 = scmp.eq.s32.totalorder %s37, 0
      %p199 = por %p197, %p198
      %p200 = scmp.ne.s32.totalorder %s189, %s192
      %p201 = scmp.eq.s32.totalorder %s42, 3
      %p202 = por %p200, %p201
      %p203 = scmp.ne.s32.totalorder %s192, %s193
      %p204 = scmp.eq.s32.totalorder %s42, 0
      %p205 = por %p203, %p204
      %p206 = scmp.ne.s32.totalorder %s192, %s193
      %p207 = scmp.eq.s32.totalorder %s43, 3
      %p208 = por %p206, %p207
      %p210 = scmp.ne.s32.totalorder %s193, %s209
      %p211 = scmp.eq.s32.totalorder %s43, 0
      %p212 = por %p210, %p211
      %s213 = ssub.s32 %s45, %s52
      %p214 = scmp.eq.s32.totalorder %s213, 0
      %s216 = sadd.s32 %s215, 1
      %s217 = scalar_select %p214, %s215, %s216
      %p220 = pneg %p214
      %p221 = scmp.eq.s32.totalorder %s37, 3
      %p222 = por %p220, %p221
      %p223 = scmp.ne.s32.totalorder %s215, %s218
      %p224 = scmp.eq.s32.totalorder %s37, 0
      %p225 = por %p223, %p224
      %p226 = scmp.ne.s32.totalorder %s215, %s218
      %p227 = scmp.eq.s32.totalorder %s42, 3
      %p228 = por %p226, %p227
      %p229 = scmp.ne.s32.totalorder %s218, %s219
      %p230 = scmp.eq.s32.totalorder %s42, 0
      %p231 = por %p229, %p230
      %p232 = scmp.ne.s32.totalorder %s218, %s219
      %p233 = scmp.eq.s32.totalorder %s43, 3
      %p234 = por %p232, %p233
      %p236 = scmp.ne.s32.totalorder %s219, %s235
      %p237 = scmp.eq.s32.totalorder %s43, 0
      %p238 = por %p236, %p237
      %s239 = ssub.s32 %s45, %s52
      %p240 = scmp.eq.s32.totalorder %s239, 0
      %s242 = sadd.s32 %s241, 1
      %s243 = scalar_select %p240, %s241, %s242
      %p246 = pneg %p240
      %p247 = scmp.eq.s32.totalorder %s37, 3
      %p248 = por %p246, %p247
      %p249 = scmp.ne.s32.totalorder %s241, %s244
      %p250 = scmp.eq.s32.totalorder %s37, 0
      %p251 = por %p249, %p250
      %p252 = scmp.ne.s32.totalorder %s241, %s244
      %p253 = scmp.eq.s32.totalorder %s42, 3
      %p254 = por %p252, %p253
      %p255 = scmp.ne.s32.totalorder %s244, %s245
      %p256 = scmp.eq.s32.totalorder %s42, 0
      %p257 = por %p255, %p256
      %p258 = scmp.ne.s32.totalorder %s244, %s245
      %p259 = scmp.eq.s32.totalorder %s43, 3
      %p260 = por %p258, %p259
      %p262 = scmp.ne.s32.totalorder %s245, %s261
      %p263 = scmp.eq.s32.totalorder %s43, 0
      %p264 = por %p262, %p263
      %s265 = ssub.s32 %s45, %s52
      %p266 = scmp.eq.s32.totalorder %s265, 0
      %s268 = sadd.s32 %s267, 1
      %s269 = scalar_select %p266, %s267, %s268
      %p272 = pneg %p266
      %p273 = scmp.eq.s32.totalorder %s37, 3
      %p274 = por %p272, %p273
      %p275 = scmp.ne.s32.totalorder %s267, %s270
      %p276 = scmp.eq.s32.totalorder %s37, 0
      %p277 = por %p275, %p276
      %p278 = scmp.ne.s32.totalorder %s267, %s270
      %p279 = scmp.eq.s32.totalorder %s42, 3
      %p280 = por %p278, %p279
      %p281 = scmp.ne.s32.totalorder %s270, %s271
      %p282 = scmp.eq.s32.totalorder %s42, 0
      %p283 = por %p281, %p282
      %p284 = scmp.ne.s32.totalorder %s270, %s271
      %p285 = scmp.eq.s32.totalorder %s43, 3
      %p286 = por %p284, %p285
      %p288 = scmp.ne.s32.totalorder %s271, %s287
      %p289 = scmp.eq.s32.totalorder %s43, 0
      %p290 = por %p288, %p289
      %s291 = ssub.s32 %s45, %s52
      %p292 = scmp.eq.s32.totalorder %s291, 0
      %s294 = sadd.s32 %s293, 1
      %s295 = scalar_select %p292, %s293, %s294
      %p298 = pneg %p292
      %p299 = scmp.eq.s32.totalorder %s37, 3
      %p300 = por %p298, %p299
      %p301 = scmp.ne.s32.totalorder %s293, %s296
      %p302 = scmp.eq.s32.totalorder %s37, 0
      %p303 = por %p301, %p302
      %p304 = scmp.ne.s32.totalorder %s293, %s296
      %p305 = scmp.eq.s32.totalorder %s42, 3
      %p306 = por %p304, %p305
      %p307 = scmp.ne.s32.totalorder %s296, %s297
      %p308 = scmp.eq.s32.totalorder %s42, 0
      %p309 = por %p307, %p308
      %p310 = scmp.ne.s32.totalorder %s296, %s297
      %p311 = scmp.eq.s32.totalorder %s43, 3
      %p312 = por %p310, %p311
      %p314 = scmp.ne.s32.totalorder %s297, %s313
      %p315 = scmp.eq.s32.totalorder %s43, 0
      %p316 = por %p314, %p315
      %s317 = ssub.s32 %s45, %s52
      %p318 = scmp.eq.s32.totalorder %s317, 0
      %s320 = sadd.s32 %s319, 1
      %s321 = scalar_select %p318, %s319, %s320
      %p324 = pneg %p318
      %p325 = scmp.eq.s32.totalorder %s37, 3
      %p326 = por %p324, %p325
      %p327 = scmp.ne.s32.totalorder %s319, %s322
      %p328 = scmp.eq.s32.totalorder %s37, 0
      %p329 = por %p327, %p328
      %p330 = scmp.ne.s32.totalorder %s319, %s322
      %p331 = scmp.eq.s32.totalorder %s42, 3
      %p332 = por %p330, %p331
      %p333 = scmp.ne.s32.totalorder %s322, %s323
      %p334 = scmp.eq.s32.totalorder %s42, 0
      %p335 = por %p333, %p334
      %p336 = scmp.ne.s32.totalorder %s322, %s323
      %p337 = scmp.eq.s32.totalorder %s43, 3
      %p338 = por %p336, %p337
      %p340 = scmp.ne.s32.totalorder %s323, %s339
      %p341 = scmp.eq.s32.totalorder %s43, 0
      %p342 = por %p340, %p341
      %s343 = ssub.s32 %s45, %s52
      %p344 = scmp.eq.s32.totalorder %s343, 0
      %s346 = sadd.s32 %s345, 1
      %s347 = scalar_select %p344, %s345, %s346
      %p350 = pneg %p344
      %p351 = scmp.eq.s32.totalorder %s37, 3
      %p352 = por %p350, %p351
      %p353 = scmp.ne.s32.totalorder %s345, %s348
      %p354 = scmp.eq.s32.totalorder %s37, 0
      %p355 = por %p353, %p354
      %p356 = scmp.ne.s32.totalorder %s345, %s348
      %p357 = scmp.eq.s32.totalorder %s42, 3
      %p358 = por %p356, %p357
      %p359 = scmp.ne.s32.totalorder %s348, %s349
      %p360 = scmp.eq.s32.totalorder %s42, 0
      %p361 = por %p359, %p360
      %p362 = scmp.ne.s32.totalorder %s348, %s349
      %p363 = scmp.eq.s32.totalorder %s43, 3
      %p364 = por %p362, %p363
      %p366 = scmp.ne.s32.totalorder %s349, %s365
      %p367 = scmp.eq.s32.totalorder %s43, 0
      %p368 = por %p366, %p367
      %s369 = ssub.s32 %s45, %s52
      %p370 = scmp.eq.s32.totalorder %s369, 0
      %s372 = sadd.s32 %s371, 1
      %s373 = scalar_select %p370, %s371, %s372
      %p376 = pneg %p370
      %p377 = scmp.eq.s32.totalorder %s37, 3
      %p378 = por %p376, %p377
      %p379 = scmp.ne.s32.totalorder %s371, %s374
      %p380 = scmp.eq.s32.totalorder %s37, 0
      %p381 = por %p379, %p380
      %p382 = scmp.ne.s32.totalorder %s371, %s374
      %p383 = scmp.eq.s32.totalorder %s42, 3
      %p384 = por %p382, %p383
      %p385 = scmp.ne.s32.totalorder %s374, %s375
      %p386 = scmp.eq.s32.totalorder %s42, 0
      %p387 = por %p385, %p386
      %p388 = scmp.ne.s32.totalorder %s374, %s375
      %p389 = scmp.eq.s32.totalorder %s43, 3
      %p390 = por %p388, %p389
      %p392 = scmp.ne.s32.totalorder %s375, %s391
      %p393 = scmp.eq.s32.totalorder %s43, 0
      %p394 = por %p392, %p393
      %s395 = ssub.s32 %s45, %s52
      %p396 = scmp.eq.s32.totalorder %s395, 0
      %s398 = sadd.s32 %s397, 1
      %s399 = scalar_select %p396, %s397, %s398
      %p402 = pneg %p396
      %p403 = scmp.eq.s32.totalorder %s37, 3
      %p404 = por %p402, %p403
      %p405 = scmp.ne.s32.totalorder %s397, %s400
      %p406 = scmp.eq.s32.totalorder %s37, 0
      %p407 = por %p405, %p406
      %p408 = scmp.ne.s32.totalorder %s397, %s400
      %p409 = scmp.eq.s32.totalorder %s42, 3
      %p410 = por %p408, %p409
      %p411 = scmp.ne.s32.totalorder %s400, %s401
      %p412 = scmp.eq.s32.totalorder %s42, 0
      %p413 = por %p411, %p412
      %p414 = scmp.ne.s32.totalorder %s400, %s401
      %p415 = scmp.eq.s32.totalorder %s43, 3
      %p416 = por %p414, %p415
      %p418 = scmp.ne.s32.totalorder %s401, %s417
      %p419 = scmp.eq.s32.totalorder %s43, 0
      %p420 = por %p418, %p419
      %s421 = ssub.s32 %s45, %s52
      %p422 = scmp.eq.s32.totalorder %s421, 0
      %s424 = sadd.s32 %s423, 1
      %s425 = scalar_select %p422, %s423, %s424
      %p428 = pneg %p422
      %p429 = scmp.eq.s32.totalorder %s37, 3
      %p430 = por %p428, %p429
      %p431 = scmp.ne.s32.totalorder %s423, %s426
      %p432 = scmp.eq.s32.totalorder %s37, 0
      %p433 = por %p431, %p432
      %p434 = scmp.ne.s32.totalorder %s423, %s426
      %p435 = scmp.eq.s32.totalorder %s42, 3
      %p436 = por %p434, %p435
      %p437 = scmp.ne.s32.totalorder %s426, %s427
      %p438 = scmp.eq.s32.totalorder %s42, 0
      %p439 = por %p437, %p438
      %p440 = scmp.ne.s32.totalorder %s426, %s427
      %p441 = scmp.eq.s32.totalorder %s43, 3
      %p442 = por %p440, %p441
      %p444 = scmp.ne.s32.totalorder %s427, %s443
      %p445 = scmp.eq.s32.totalorder %s43, 0
      %p446 = por %p444, %p445
      %s447 = ssub.s32 %s45, %s52
      %p448 = scmp.eq.s32.totalorder %s447, 0
      %s450 = sadd.s32 %s449, 1
      %s451 = scalar_select %p448, %s449, %s450
      %p454 = pneg %p448
      %p455 = scmp.eq.s32.totalorder %s37, 3
      %p456 = por %p454, %p455
      %p457 = scmp.ne.s32.totalorder %s449, %s452
      %p458 = scmp.eq.s32.totalorder %s37, 0
      %p459 = por %p457, %p458
      %p460 = scmp.ne.s32.totalorder %s449, %s452
      %p461 = scmp.eq.s32.totalorder %s42, 3
      %p462 = por %p460, %p461
      %p463 = scmp.ne.s32.totalorder %s452, %s453
      %p464 = scmp.eq.s32.totalorder %s42, 0
      %p465 = por %p463, %p464
      %p466 = scmp.ne.s32.totalorder %s452, %s453
      %p467 = scmp.eq.s32.totalorder %s43, 3
      %p468 = por %p466, %p467
      %p470 = scmp.ne.s32.totalorder %s453, %s469
      %p471 = scmp.eq.s32.totalorder %s43, 0
      %p472 = por %p470, %p471
      %s473 = ssub.s32 %s45, %s52
      %p474 = scmp.eq.s32.totalorder %s473, 0
      %s476 = sadd.s32 %s475, 1
      %s477 = scalar_select %p474, %s475, %s476
      %p480 = pneg %p474
      %p481 = scmp.eq.s32.totalorder %s37, 3
      %p482 = por %p480, %p481
      %p483 = scmp.ne.s32.totalorder %s475, %s478
      %p484 = scmp.eq.s32.totalorder %s37, 0
      %p485 = por %p483, %p484
      %p486 = scmp.ne.s32.totalorder %s475, %s478
      %p487 = scmp.eq.s32.totalorder %s42, 3
      %p488 = por %p486, %p487
      %p489 = scmp.ne.s32.totalorder %s478, %s479
      %p490 = scmp.eq.s32.totalorder %s42, 0
      %p491 = por %p489, %p490
      %p492 = scmp.ne.s32.totalorder %s478, %s479
      %p493 = scmp.eq.s32.totalorder %s43, 3
      %p494 = por %p492, %p493
      %p496 = scmp.ne.s32.totalorder %s479, %s495
      %p497 = scmp.eq.s32.totalorder %s43, 0
      %p498 = por %p496, %p497
      %s499 = ssub.s32 %s45, %s52
      %p500 = scmp.eq.s32.totalorder %s499, 0
      %s502 = sadd.s32 %s501, 1
      %s503 = scalar_select %p500, %s501, %s502
      %p506 = pneg %p500
      %p507 = scmp.eq.s32.totalorder %s37, 3
      %p508 = por %p506, %p507
      %p509 = scmp.ne.s32.totalorder %s501, %s504
      %p510 = scmp.eq.s32.totalorder %s37, 0
      %p511 = por %p509, %p510
      %p512 = scmp.ne.s32.totalorder %s501, %s504
      %p513 = scmp.eq.s32.totalorder %s42, 3
      %p514 = por %p512, %p513
      %p515 = scmp.ne.s32.totalorder %s504, %s505
      %p516 = scmp.eq.s32.totalorder %s42, 0
      %p517 = por %p515, %p516
      %p518 = scmp.ne.s32.totalorder %s504, %s505
      %p519 = scmp.eq.s32.totalorder %s43, 3
      %p520 = por %p518, %p519
      %p522 = scmp.ne.s32.totalorder %s505, %s521
      %p523 = scmp.eq.s32.totalorder %s43, 0
      %p524 = por %p522, %p523
      %s525 = ssub.s32 %s45, %s52
      %p526 = scmp.eq.s32.totalorder %s525, 0
      %s528 = sadd.s32 %s527, 1
      %s529 = scalar_select %p526, %s527, %s528
      %p532 = pneg %p526
      %p533 = scmp.eq.s32.totalorder %s37, 3
      %p534 = por %p532, %p533
      %p535 = scmp.ne.s32.totalorder %s527, %s530
      %p536 = scmp.eq.s32.totalorder %s37, 0
      %p537 = por %p535, %p536
      %p538 = scmp.ne.s32.totalorder %s527, %s530
      %p539 = scmp.eq.s32.totalorder %s42, 3
      %p540 = por %p538, %p539
      %p541 = scmp.ne.s32.totalorder %s530, %s531
      %p542 = scmp.eq.s32.totalorder %s42, 0
      %p543 = por %p541, %p542
      %p544 = scmp.ne.s32.totalorder %s530, %s531
      %p545 = scmp.eq.s32.totalorder %s43, 3
      %p546 = por %p544, %p545
      %p548 = scmp.ne.s32.totalorder %s531, %s547
      %p549 = scmp.eq.s32.totalorder %s43, 0
      %p550 = por %p548, %p549
      %s551 = ssub.s32 %s45, %s52
      %p552 = scmp.eq.s32.totalorder %s551, 0
      %s554 = sadd.s32 %s553, 1
      %s555 = scalar_select %p552, %s553, %s554
      %p558 = pneg %p552
      %p559 = scmp.eq.s32.totalorder %s37, 3
      %p560 = por %p558, %p559
      %p561 = scmp.ne.s32.totalorder %s553, %s556
      %p562 = scmp.eq.s32.totalorder %s37, 0
      %p563 = por %p561, %p562
      %p564 = scmp.ne.s32.totalorder %s553, %s556
      %p565 = scmp.eq.s32.totalorder %s42, 3
      %p566 = por %p564, %p565
      %p567 = scmp.ne.s32.totalorder %s556, %s557
      %p568 = scmp.eq.s32.totalorder %s42, 0
      %p569 = por %p567, %p568
      %p570 = scmp.ne.s32.totalorder %s556, %s557
      %p571 = scmp.eq.s32.totalorder %s43, 3
      %p572 = por %p570, %p571
      %p574 = scmp.ne.s32.totalorder %s557, %s573
      %p575 = scmp.eq.s32.totalorder %s43, 0
      %p576 = por %p574, %p575
      %s577 = ssub.s32 %s45, %s52
      %p578 = scmp.eq.s32.totalorder %s577, 0
      %s580 = sadd.s32 %s579, 1
      %s581 = scalar_select %p578, %s579, %s580
      %p584 = pneg %p578
      %p585 = scmp.eq.s32.totalorder %s37, 3
      %p586 = por %p584, %p585
      %p587 = scmp.ne.s32.totalorder %s579, %s582
      %p588 = scmp.eq.s32.totalorder %s37, 0
      %p589 = por %p587, %p588
      %p590 = scmp.ne.s32.totalorder %s579, %s582
      %p591 = scmp.eq.s32.totalorder %s42, 3
      %p592 = por %p590, %p591
      %p593 = scmp.ne.s32.totalorder %s582, %s583
      %p594 = scmp.eq.s32.totalorder %s42, 0
      %p595 = por %p593, %p594
      %p596 = scmp.ne.s32.totalorder %s582, %s583
      %p597 = scmp.eq.s32.totalorder %s43, 3
      %p598 = por %p596, %p597
      %p600 = scmp.ne.s32.totalorder %s583, %s599
      %p601 = scmp.eq.s32.totalorder %s43, 0
      %p602 = por %p600, %p601
      %s603 = ssub.s32 %s45, %s52
      %p604 = scmp.eq.s32.totalorder %s603, 0
      %s606 = sadd.s32 %s605, 1
      %s607 = scalar_select %p604, %s605, %s606
      %p610 = pneg %p604
      %p611 = scmp.eq.s32.totalorder %s37, 3
      %p612 = por %p610, %p611
      %p613 = scmp.ne.s32.totalorder %s605, %s608
      %p614 = scmp.eq.s32.totalorder %s37, 0
      %p615 = por %p613, %p614
      %p616 = scmp.ne.s32.totalorder %s605, %s608
      %p617 = scmp.eq.s32.totalorder %s42, 3
      %p618 = por %p616, %p617
      %p619 = scmp.ne.s32.totalorder %s608, %s609
      %p620 = scmp.eq.s32.totalorder %s42, 0
      %p621 = por %p619, %p620
      %p622 = scmp.ne.s32.totalorder %s608, %s609
      %p623 = scmp.eq.s32.totalorder %s43, 3
      %p624 = por %p622, %p623
      %p626 = scmp.ne.s32.totalorder %s609, %s625
      %p627 = scmp.eq.s32.totalorder %s43, 0
      %p628 = por %p626, %p627
      %s629 = ssub.s32 %s45, %s52
      %p630 = scmp.eq.s32.totalorder %s629, 0
      %s632 = sadd.s32 %s631, 1
      %s633 = scalar_select %p630, %s631, %s632
      %p636 = pneg %p630
      %p637 = scmp.eq.s32.totalorder %s37, 3
      %p638 = por %p636, %p637
      %p639 = scmp.ne.s32.totalorder %s631, %s634
      %p640 = scmp.eq.s32.totalorder %s37, 0
      %p641 = por %p639, %p640
      %p642 = scmp.ne.s32.totalorder %s631, %s634
      %p643 = scmp.eq.s32.totalorder %s42, 3
      %p644 = por %p642, %p643
      %p645 = scmp.ne.s32.totalorder %s634, %s635
      %p646 = scmp.eq.s32.totalorder %s42, 0
      %p647 = por %p645, %p646
      %p648 = scmp.ne.s32.totalorder %s634, %s635
      %p649 = scmp.eq.s32.totalorder %s43, 3
      %p650 = por %p648, %p649
      %p652 = scmp.ne.s32.totalorder %s635, %s651
      %p653 = scmp.eq.s32.totalorder %s43, 0
      %p654 = por %p652, %p653
      %s655 = ssub.s32 %s45, %s52
      %p656 = scmp.eq.s32.totalorder %s655, 0
      %s658 = sadd.s32 %s657, 1
      %s659 = scalar_select %p656, %s657, %s658
      %p662 = pneg %p656
      %p663 = scmp.eq.s32.totalorder %s37, 3
      %p664 = por %p662, %p663
      %p665 = scmp.ne.s32.totalorder %s657, %s660
      %p666 = scmp.eq.s32.totalorder %s37, 0
      %p667 = por %p665, %p666
      %p668 = scmp.ne.s32.totalorder %s657, %s660
      %p669 = scmp.eq.s32.totalorder %s42, 3
      %p670 = por %p668, %p669
      %p671 = scmp.ne.s32.totalorder %s660, %s661
      %p672 = scmp.eq.s32.totalorder %s42, 0
      %p673 = por %p671, %p672
      %p674 = scmp.ne.s32.totalorder %s660, %s661
      %p675 = scmp.eq.s32.totalorder %s43, 3
      %p676 = por %p674, %p675
      %p678 = scmp.ne.s32.totalorder %s661, %s677
      %p679 = scmp.eq.s32.totalorder %s43, 0
      %p680 = por %p678, %p679
      %s681 = ssub.s32 %s45, %s52
      %p682 = scmp.eq.s32.totalorder %s681, 0
      %s684 = sadd.s32 %s683, 1
      %s685 = scalar_select %p682, %s683, %s684
      %p688 = pneg %p682
      %p689 = scmp.eq.s32.totalorder %s37, 3
      %p690 = por %p688, %p689
      %p691 = scmp.ne.s32.totalorder %s683, %s686
      %p692 = scmp.eq.s32.totalorder %s37, 0
      %p693 = por %p691, %p692
      %p694 = scmp.ne.s32.totalorder %s683, %s686
      %p695 = scmp.eq.s32.totalorder %s42, 3
      %p696 = por %p694, %p695
      %p697 = scmp.ne.s32.totalorder %s686, %s687
      %p698 = scmp.eq.s32.totalorder %s42, 0
      %p699 = por %p697, %p698
      %p700 = scmp.ne.s32.totalorder %s686, %s687
      %p701 = scmp.eq.s32.totalorder %s43, 3
      %p702 = por %p700, %p701
      %p704 = scmp.ne.s32.totalorder %s687, %s703
      %p705 = scmp.eq.s32.totalorder %s43, 0
      %p706 = por %p704, %p705
      %s707 = ssub.s32 %s45, %s52
      %p708 = scmp.eq.s32.totalorder %s707, 0
      %s710 = sadd.s32 %s709, 1
      %s711 = scalar_select %p708, %s709, %s710
      %p714 = pneg %p708
      %p715 = scmp.eq.s32.totalorder %s37, 3
      %p716 = por %p714, %p715
      %p717 = scmp.ne.s32.totalorder %s709, %s712
      %p718 = scmp.eq.s32.totalorder %s37, 0
      %p719 = por %p717, %p718
      %p720 = scmp.ne.s32.totalorder %s709, %s712
      %p721 = scmp.eq.s32.totalorder %s42, 3
      %p722 = por %p720, %p721
      %p723 = scmp.ne.s32.totalorder %s712, %s713
      %p724 = scmp.eq.s32.totalorder %s42, 0
      %p725 = por %p723, %p724
      %p726 = scmp.ne.s32.totalorder %s712, %s713
      %p727 = scmp.eq.s32.totalorder %s43, 3
      %p728 = por %p726, %p727
      %p730 = scmp.ne.s32.totalorder %s713, %s729
      %p731 = scmp.eq.s32.totalorder %s43, 0
      %p732 = por %p730, %p731
      %s733 = ssub.s32 %s45, %s52
      %p734 = scmp.eq.s32.totalorder %s733, 0
      %s736 = sadd.s32 %s735, 1
      %s737 = scalar_select %p734, %s735, %s736
      %p740 = pneg %p734
      %p741 = scmp.eq.s32.totalorder %s37, 3
      %p742 = por %p740, %p741
      %p743 = scmp.ne.s32.totalorder %s735, %s738
      %p744 = scmp.eq.s32.totalorder %s37, 0
      %p745 = por %p743, %p744
      %p746 = scmp.ne.s32.totalorder %s735, %s738
      %p747 = scmp.eq.s32.totalorder %s42, 3
      %p748 = por %p746, %p747
      %p749 = scmp.ne.s32.totalorder %s738, %s739
      %p750 = scmp.eq.s32.totalorder %s42, 0
      %p751 = por %p749, %p750
      %p752 = scmp.ne.s32.totalorder %s738, %s739
      %p753 = scmp.eq.s32.totalorder %s43, 3
      %p754 = por %p752, %p753
      %p756 = scmp.ne.s32.totalorder %s739, %s755
      %p757 = scmp.eq.s32.totalorder %s43, 0
      %p758 = por %p756, %p757
      %s759 = ssub.s32 %s45, %s52
      %p760 = scmp.eq.s32.totalorder %s759, 0
      %s762 = sadd.s32 %s761, 1
      %s763 = scalar_select %p760, %s761, %s762
      %p766 = pneg %p760
      %p767 = scmp.eq.s32.totalorder %s37, 3
      %p768 = por %p766, %p767
      %p769 = scmp.ne.s32.totalorder %s761, %s764
      %p770 = scmp.eq.s32.totalorder %s37, 0
      %p771 = por %p769, %p770
      %p772 = scmp.ne.s32.totalorder %s761, %s764
      %p773 = scmp.eq.s32.totalorder %s42, 3
      %p774 = por %p772, %p773
      %p775 = scmp.ne.s32.totalorder %s764, %s765
      %p776 = scmp.eq.s32.totalorder %s42, 0
      %p777 = por %p775, %p776
      %p778 = scmp.ne.s32.totalorder %s764, %s765
      %p779 = scmp.eq.s32.totalorder %s43, 3
      %p780 = por %p778, %p779
      %p782 = scmp.ne.s32.totalorder %s765, %s781
      %p783 = scmp.eq.s32.totalorder %s43, 0
      %p784 = por %p782, %p783
      %s785 = ssub.s32 %s44, %s56
      %p786 = scmp.eq.s32.totalorder %s785, 0
      %s788 = sadd.s32 %s787, 1
      %s789 = scalar_select %p786, %s787, %s788
      %p792 = pneg %p786
      %p793 = scmp.eq.s32.totalorder %s37, 3
      %p794 = por %p792, %p793
      %p795 = scmp.ne.s32.totalorder %s787, %s790
      %p796 = scmp.eq.s32.totalorder %s37, 0
      %p797 = por %p795, %p796
      %p798 = scmp.ne.s32.totalorder %s787, %s790
      %p799 = scmp.eq.s32.totalorder %s42, 3
      %p800 = por %p798, %p799
      %p801 = scmp.ne.s32.totalorder %s790, %s791
      %p802 = scmp.eq.s32.totalorder %s42, 0
      %p803 = por %p801, %p802
      %p804 = scmp.ne.s32.totalorder %s790, %s791
      %p805 = scmp.eq.s32.totalorder %s43, 3
      %p806 = por %p804, %p805
      %p808 = scmp.ne.s32.totalorder %s791, %s807
      %p809 = scmp.eq.s32.totalorder %s43, 0
      %p810 = por %p808, %p809
      %p811 = scmp.le.s32.totalorder 1, %s37
      %p812 = scmp.lt.s32.totalorder %s37, 5
      %p813 = pnand %p811, %p812
      %p814 = pneg %p813
      // Predicated region
      $region9: #{tpu_custom_call.1} parent=5 // pred_check
        _
      $region10: #{tpu_custom_call.1} parent=5 // pred_check_branch
        %816 = sbr.rel (%p813) target = $region12
      $region11: #{tpu_custom_call.1} parent=5 // pred_region
        %s817 = ssub.s32 %s37, 1
        // Predicated region
        $region13: #{tpu_custom_call.1} parent=11 // pred_check
          %p818 = pneg %p75
        $region14: #{tpu_custom_call.1} parent=11 // pred_check_branch
          %820 = sbr.rel (%p818) target = $region16
        $region15: #{tpu_custom_call.1} parent=11 // pred_region
          %p821 = scmp.lt.s32.totalorder %s46, 1
          %s822 = scalar_select %p821, %s46, 1
          %s823 = smul.addr %s822, 8
          %s824 = scalar_lea.vmem %s0, %s823
        $region16: #{tpu_custom_call.1} parent=11 // pred_fallthru
          _
        // Predicated region
        $region17: #{tpu_custom_call.1} parent=11 // pred_check
          %p825 = pneg %p101
        $region18: #{tpu_custom_call.1} parent=11 // pred_check_branch
          %827 = sbr.rel (%p825) target = $region20
        $region19: #{tpu_custom_call.1} parent=11 // pred_region
          %p828 = scmp.lt.s32.totalorder %s46, 1
          %s829 = scalar_select %p828, %s46, 1
          %s830 = smul.addr %s829, 4
          %s831 = scalar_lea.vmem %s1, %s830
        $region20: #{tpu_custom_call.1} parent=11 // pred_fallthru
          _
      $region12: #{tpu_custom_call.1} parent=5 // pred_fallthru
        _
      %p832 = scmp.lt.s32.totalorder %s37, 4
      // Predicated region
      $region21: #{tpu_custom_call.1} parent=5 // pred_check
        %p833 = pneg %p832
      $region22: #{tpu_custom_call.1} parent=5 // pred_check_branch
        %835 = sbr.rel (%p833) target = $region24
      $region23: #{tpu_custom_call.1} parent=5 // pred_region
        // Predicated region
        $region25: #{tpu_custom_call.1} parent=23 // pred_check
          %p836 = pneg %p121
        $region26: #{tpu_custom_call.1} parent=23 // pred_check_branch
          %838 = sbr.rel (%p836) target = $region28
        $region27: #{tpu_custom_call.1} parent=23 // pred_region
          %p839 = scmp.lt.s32.totalorder %s45, 1
          %s840 = scalar_select %p839, %s45, 1
          %s841 = smul.addr %s840, 16
          %s842 = smul.addr %s841, 4
          %s843 = scalar_lea.vmem %s2, %s842
        $region28: #{tpu_custom_call.1} parent=23 // pred_fallthru
          _
        // Predicated region
        $region29: #{tpu_custom_call.1} parent=23 // pred_check
          %p844 = pneg %p147
        $region30: #{tpu_custom_call.1} parent=23 // pred_check_branch
          %846 = sbr.rel (%p844) target = $region32
        $region31: #{tpu_custom_call.1} parent=23 // pred_region
          %p847 = scmp.lt.s32.totalorder %s45, 1
          %s848 = scalar_select %p847, %s45, 1
          %s849 = smul.addr %s848, 4
          %s850 = scalar_lea.vmem %s3, %s849
        $region32: #{tpu_custom_call.1} parent=23 // pred_fallthru
          _
        // Predicated region
        $region33: #{tpu_custom_call.1} parent=23 // pred_check
          %p851 = pneg %p173
        $region34: #{tpu_custom_call.1} parent=23 // pred_check_branch
          %853 = sbr.rel (%p851) target = $region36
        $region35: #{tpu_custom_call.1} parent=23 // pred_region
          %p854 = scmp.lt.s32.totalorder %s45, 1
          %s855 = scalar_select %p854, %s45, 1
          %s856 = smul.addr %s855, 16
          %s857 = smul.addr %s856, 4
          %s858 = scalar_lea.vmem %s4, %s857
        $region36: #{tpu_custom_call.1} parent=23 // pred_fallthru
          _
        // Predicated region
        $region37: #{tpu_custom_call.1} parent=23 // pred_check
          %p859 = pneg %p199
        $region38: #{tpu_custom_call.1} parent=23 // pred_check_branch
          %861 = sbr.rel (%p859) target = $region40
        $region39: #{tpu_custom_call.1} parent=23 // pred_region
          %p862 = scmp.lt.s32.totalorder %s45, 1
          %s863 = scalar_select %p862, %s45, 1
          %s864 = smul.addr %s863, 4
          %s865 = scalar_lea.vmem %s5, %s864
        $region40: #{tpu_custom_call.1} parent=23 // pred_fallthru
          _
        // Predicated region
        $region41: #{tpu_custom_call.1} parent=23 // pred_check
          %p866 = pneg %p225
        $region42: #{tpu_custom_call.1} parent=23 // pred_check_branch
          %868 = sbr.rel (%p866) target = $region44
        $region43: #{tpu_custom_call.1} parent=23 // pred_region
          %p869 = scmp.lt.s32.totalorder %s45, 1
          %s870 = scalar_select %p869, %s45, 1
          %s871 = smul.addr %s870, 16
          %s872 = smul.addr %s871, 4
          %s873 = scalar_lea.vmem %s6, %s872
        $region44: #{tpu_custom_call.1} parent=23 // pred_fallthru
          _
        // Predicated region
        $region45: #{tpu_custom_call.1} parent=23 // pred_check
          %p874 = pneg %p251
        $region46: #{tpu_custom_call.1} parent=23 // pred_check_branch
          %876 = sbr.rel (%p874) target = $region48
        $region47: #{tpu_custom_call.1} parent=23 // pred_region
          %p877 = scmp.lt.s32.totalorder %s45, 1
          %s878 = scalar_select %p877, %s45, 1
          %s879 = smul.addr %s878, 4
          %s880 = scalar_lea.vmem %s7, %s879
        $region48: #{tpu_custom_call.1} parent=23 // pred_fallthru
          _
        // Predicated region
        $region49: #{tpu_custom_call.1} parent=23 // pred_check
          %p881 = pneg %p277
        $region50: #{tpu_custom_call.1} parent=23 // pred_check_branch
          %883 = sbr.rel (%p881) target = $region52
        $region51: #{tpu_custom_call.1} parent=23 // pred_region
          %p884 = scmp.lt.s32.totalorder %s45, 1
          %s885 = scalar_select %p884, %s45, 1
          %s886 = smul.addr %s885, 4
          %s887 = smul.addr %s886, 4
          %s888 = scalar_lea.vmem %s8, %s887
        $region52: #{tpu_custom_call.1} parent=23 // pred_fallthru
          _
        // Predicated region
        $region53: #{tpu_custom_call.1} parent=23 // pred_check
          %p889 = pneg %p303
        $region54: #{tpu_custom_call.1} parent=23 // pred_check_branch
          %891 = sbr.rel (%p889) target = $region56
        $region55: #{tpu_custom_call.1} parent=23 // pred_region
          %p892 = scmp.lt.s32.totalorder %s45, 1
          %s893 = scalar_select %p892, %s45, 1
          %s894 = scalar_lea.vmem %s9, %s893
        $region56: #{tpu_custom_call.1} parent=23 // pred_fallthru
          _
        // Predicated region
        $region57: #{tpu_custom_call.1} parent=23 // pred_check
          %p895 = pneg %p329
        $region58: #{tpu_custom_call.1} parent=23 // pred_check_branch
          %897 = sbr.rel (%p895) target = $region60
        $region59: #{tpu_custom_call.1} parent=23 // pred_region
          %p898 = scmp.lt.s32.totalorder %s45, 1
          %s899 = scalar_select %p898, %s45, 1
          %s900 = smul.addr %s899, 16
          %s901 = smul.addr %s900, 4
          %s902 = scalar_lea.vmem %s10, %s901
        $region60: #{tpu_custom_call.1} parent=23 // pred_fallthru
          _
        // Predicated region
        $region61: #{tpu_custom_call.1} parent=23 // pred_check
          %p903 = pneg %p355
        $region62: #{tpu_custom_call.1} parent=23 // pred_check_branch
          %905 = sbr.rel (%p903) target = $region64
        $region63: #{tpu_custom_call.1} parent=23 // pred_region
          %p906 = scmp.lt.s32.totalorder %s45, 1
          %s907 = scalar_select %p906, %s45, 1
          %s908 = smul.addr %s907, 4
          %s909 = scalar_lea.vmem %s11, %s908
        $region64: #{tpu_custom_call.1} parent=23 // pred_fallthru
          _
        // Predicated region
        $region65: #{tpu_custom_call.1} parent=23 // pred_check
          %p910 = pneg %p381
        $region66: #{tpu_custom_call.1} parent=23 // pred_check_branch
          %912 = sbr.rel (%p910) target = $region68
        $region67: #{tpu_custom_call.1} parent=23 // pred_region
          %p913 = scmp.lt.s32.totalorder %s45, 1
          %s914 = scalar_select %p913, %s45, 1
          %s915 = smul.addr %s914, 16
          %s916 = smul.addr %s915, 4
          %s917 = scalar_lea.vmem %s12, %s916
        $region68: #{tpu_custom_call.1} parent=23 // pred_fallthru
          _
        // Predicated region
        $region69: #{tpu_custom_call.1} parent=23 // pred_check
          %p918 = pneg %p407
        $region70: #{tpu_custom_call.1} parent=23 // pred_check_branch
          %920 = sbr.rel (%p918) target = $region72
        $region71: #{tpu_custom_call.1} parent=23 // pred_region
          %p921 = scmp.lt.s32.totalorder %s45, 1
          %s922 = scalar_select %p921, %s45, 1
          %s923 = smul.addr %s922, 4
          %s924 = scalar_lea.vmem %s13, %s923
        $region72: #{tpu_custom_call.1} parent=23 // pred_fallthru
          _
        // Predicated region
        $region73: #{tpu_custom_call.1} parent=23 // pred_check
          %p925 = pneg %p433
        $region74: #{tpu_custom_call.1} parent=23 // pred_check_branch
          %927 = sbr.rel (%p925) target = $region76
        $region75: #{tpu_custom_call.1} parent=23 // pred_region
          %p928 = scmp.lt.s32.totalorder %s45, 1
          %s929 = scalar_select %p928, %s45, 1
          %s930 = smul.addr %s929, 16
          %s931 = smul.addr %s930, 4
          %s932 = scalar_lea.vmem %s14, %s931
        $region76: #{tpu_custom_call.1} parent=23 // pred_fallthru
          _
        // Predicated region
        $region77: #{tpu_custom_call.1} parent=23 // pred_check
          %p933 = pneg %p459
        $region78: #{tpu_custom_call.1} parent=23 // pred_check_branch
          %935 = sbr.rel (%p933) target = $region80
        $region79: #{tpu_custom_call.1} parent=23 // pred_region
          %p936 = scmp.lt.s32.totalorder %s45, 1
          %s937 = scalar_select %p936, %s45, 1
          %s938 = smul.addr %s937, 4
          %s939 = scalar_lea.vmem %s15, %s938
        $region80: #{tpu_custom_call.1} parent=23 // pred_fallthru
          _
        // Predicated region
        $region81: #{tpu_custom_call.1} parent=23 // pred_check
          %p940 = pneg %p485
        $region82: #{tpu_custom_call.1} parent=23 // pred_check_branch
          %942 = sbr.rel (%p940) target = $region84
        $region83: #{tpu_custom_call.1} parent=23 // pred_region
          %p943 = scmp.lt.s32.totalorder %s45, 1
          %s944 = scalar_select %p943, %s45, 1
          %s945 = smul.addr %s944, 4
          %s946 = smul.addr %s945, 4
          %s947 = scalar_lea.vmem %s16, %s946
        $region84: #{tpu_custom_call.1} parent=23 // pred_fallthru
          _
        // Predicated region
        $region85: #{tpu_custom_call.1} parent=23 // pred_check
          %p948 = pneg %p511
        $region86: #{tpu_custom_call.1} parent=23 // pred_check_branch
          %950 = sbr.rel (%p948) target = $region88
        $region87: #{tpu_custom_call.1} parent=23 // pred_region
          %p951 = scmp.lt.s32.totalorder %s45, 1
          %s952 = scalar_select %p951, %s45, 1
          %s953 = scalar_lea.vmem %s17, %s952
        $region88: #{tpu_custom_call.1} parent=23 // pred_fallthru
          _
        // Predicated region
        $region89: #{tpu_custom_call.1} parent=23 // pred_check
          %p954 = pneg %p537
        $region90: #{tpu_custom_call.1} parent=23 // pred_check_branch
          %956 = sbr.rel (%p954) target = $region92
        $region91: #{tpu_custom_call.1} parent=23 // pred_region
          %p957 = scmp.lt.s32.totalorder %s45, 1
          %s958 = scalar_select %p957, %s45, 1
          %s959 = smul.addr %s958, 4
          %s960 = smul.addr %s959, 4
          %s961 = scalar_lea.vmem %s18, %s960
        $region92: #{tpu_custom_call.1} parent=23 // pred_fallthru
          _
        // Predicated region
        $region93: #{tpu_custom_call.1} parent=23 // pred_check
          %p962 = pneg %p563
        $region94: #{tpu_custom_call.1} parent=23 // pred_check_branch
          %964 = sbr.rel (%p962) target = $region96
        $region95: #{tpu_custom_call.1} parent=23 // pred_region
          %p965 = scmp.lt.s32.totalorder %s45, 1
          %s966 = scalar_select %p965, %s45, 1
          %s967 = scalar_lea.vmem %s19, %s966
        $region96: #{tpu_custom_call.1} parent=23 // pred_fallthru
          _
        // Predicated region
        $region97: #{tpu_custom_call.1} parent=23 // pred_check
          %p968 = pneg %p589
        $region98: #{tpu_custom_call.1} parent=23 // pred_check_branch
          %970 = sbr.rel (%p968) target = $region100
        $region99: #{tpu_custom_call.1} parent=23 // pred_region
          %p971 = scmp.lt.s32.totalorder %s45, 1
          %s972 = scalar_select %p971, %s45, 1
          %s973 = smul.addr %s972, 8
          %s974 = smul.addr %s973, 4
          %s975 = scalar_lea.vmem %s20, %s974
        $region100: #{tpu_custom_call.1} parent=23 // pred_fallthru
          _
        // Predicated region
        $region101: #{tpu_custom_call.1} parent=23 // pred_check
          %p976 = pneg %p615
        $region102: #{tpu_custom_call.1} parent=23 // pred_check_branch
          %978 = sbr.rel (%p976) target = $region104
        $region103: #{tpu_custom_call.1} parent=23 // pred_region
          %p979 = scmp.lt.s32.totalorder %s45, 1
          %s980 = scalar_select %p979, %s45, 1
          %s981 = scalar_lea.vmem %s21, %s980
        $region104: #{tpu_custom_call.1} parent=23 // pred_fallthru
          _
        // Predicated region
        $region105: #{tpu_custom_call.1} parent=23 // pred_check
          %p982 = pneg %p641
        $region106: #{tpu_custom_call.1} parent=23 // pred_check_branch
          %984 = sbr.rel (%p982) target = $region108
        $region107: #{tpu_custom_call.1} parent=23 // pred_region
          %p985 = scmp.lt.s32.totalorder %s45, 1
          %s986 = scalar_select %p985, %s45, 1
          %s987 = scalar_lea.vmem %s22, %s986
        $region108: #{tpu_custom_call.1} parent=23 // pred_fallthru
          _
        // Predicated region
        $region109: #{tpu_custom_call.1} parent=23 // pred_check
          %p988 = pneg %p667
        $region110: #{tpu_custom_call.1} parent=23 // pred_check_branch
          %990 = sbr.rel (%p988) target = $region112
        $region111: #{tpu_custom_call.1} parent=23 // pred_region
          %p991 = scmp.lt.s32.totalorder %s45, 1
          %s992 = scalar_select %p991, %s45, 1
          %s993 = scalar_lea.vmem %s23, %s992
        $region112: #{tpu_custom_call.1} parent=23 // pred_fallthru
          _
        // Predicated region
        $region113: #{tpu_custom_call.1} parent=23 // pred_check
          %p994 = pneg %p693
        $region114: #{tpu_custom_call.1} parent=23 // pred_check_branch
          %996 = sbr.rel (%p994) target = $region116
        $region115: #{tpu_custom_call.1} parent=23 // pred_region
          %p997 = scmp.lt.s32.totalorder %s45, 1
          %s998 = scalar_select %p997, %s45, 1
          %s999 = scalar_lea.vmem %s24, %s998
        $region116: #{tpu_custom_call.1} parent=23 // pred_fallthru
          _
        // Predicated region
        $region117: #{tpu_custom_call.1} parent=23 // pred_check
          %p1000 = pneg %p719
        $region118: #{tpu_custom_call.1} parent=23 // pred_check_branch
          %1002 = sbr.rel (%p1000) target = $region120
        $region119: #{tpu_custom_call.1} parent=23 // pred_region
          %p1003 = scmp.lt.s32.totalorder %s45, 1
          %s1004 = scalar_select %p1003, %s45, 1
          %s1005 = scalar_lea.vmem %s25, %s1004
        $region120: #{tpu_custom_call.1} parent=23 // pred_fallthru
          _
        // Predicated region
        $region121: #{tpu_custom_call.1} parent=23 // pred_check
          %p1006 = pneg %p745
        $region122: #{tpu_custom_call.1} parent=23 // pred_check_branch
          %1008 = sbr.rel (%p1006) target = $region124
        $region123: #{tpu_custom_call.1} parent=23 // pred_region
          %p1009 = scmp.lt.s32.totalorder %s45, 1
          %s1010 = scalar_select %p1009, %s45, 1
          %s1011 = scalar_lea.vmem %s26, %s1010
        $region124: #{tpu_custom_call.1} parent=23 // pred_fallthru
          _
        // Predicated region
        $region125: #{tpu_custom_call.1} parent=23 // pred_check
          %p1012 = pneg %p771
        $region126: #{tpu_custom_call.1} parent=23 // pred_check_branch
          %1014 = sbr.rel (%p1012) target = $region128
        $region127: #{tpu_custom_call.1} parent=23 // pred_region
          %p1015 = scmp.lt.s32.totalorder %s45, 1
          %s1016 = scalar_select %p1015, %s45, 1
          %s1017 = scalar_lea.vmem %s27, %s1016
        $region128: #{tpu_custom_call.1} parent=23 // pred_fallthru
          _
      $region24: #{tpu_custom_call.1} parent=5 // pred_fallthru
        _
      %p1018 = scmp.le.s32.totalorder 1, %s37
      %p1019 = scmp.lt.s32.totalorder %s37, 5
      %p1020 = pnand %p1018, %p1019
      %p1021 = pneg %p1020
      // Predicated region
      $region129: #{tpu_custom_call.1} parent=5 // pred_check
        _
      $region130: #{tpu_custom_call.1} parent=5 // pred_check_branch
        %1023 = sbr.rel (%p1020) target = $region132
      $region131: #{tpu_custom_call.1} parent=5 // pred_region
        %s1024 = ssub.s32 %s37, 1
        %p1025 = scmp.lt.s32.totalorder %s46, 1
        %s1026 = scalar_select %p1025, %s46, 1
        %s1027 = smul.addr %s1026, 8
        %s1028 = scalar_lea.vmem %s0, %s1027
        %p1029 = pneg %p75
        %p1030 = pneg %p72
        %p1031 = scmp.lt.s32.totalorder %s46, 1
        %s1032 = scalar_select %p1031, %s46, 1
        %s1033 = smul.addr %s1032, 4
        %s1034 = scalar_lea.vmem %s1, %s1033
        %p1035 = pneg %p101
        %p1036 = pneg %p98
        %p1037 = scmp.lt.s32.totalorder %s47, 1
        %s1038 = scalar_select %p1037, %s47, 1
        %s1039 = smul.addr %s1038, 16
        %s1040 = smul.addr %s1039, 4
        %s1041 = scalar_lea.vmem %s2, %s1040
        %p1042 = pneg %p127
        %p1043 = pneg %p124
        %p1044 = scmp.lt.s32.totalorder %s47, 1
        %s1045 = scalar_select %p1044, %s47, 1
        %s1046 = smul.addr %s1045, 4
        %s1047 = scalar_lea.vmem %s3, %s1046
        %p1048 = pneg %p153
        %p1049 = pneg %p150
        %p1050 = scmp.lt.s32.totalorder %s47, 1
        %s1051 = scalar_select %p1050, %s47, 1
        %s1052 = smul.addr %s1051, 16
        %s1053 = smul.addr %s1052, 4
        %s1054 = scalar_lea.vmem %s4, %s1053
        %p1055 = pneg %p179
        %p1056 = pneg %p176
        %p1057 = scmp.lt.s32.totalorder %s47, 1
        %s1058 = scalar_select %p1057, %s47, 1
        %s1059 = smul.addr %s1058, 4
        %s1060 = scalar_lea.vmem %s5, %s1059
        %p1061 = pneg %p205
        %p1062 = pneg %p202
        %p1063 = scmp.lt.s32.totalorder %s47, 1
        %s1064 = scalar_select %p1063, %s47, 1
        %s1065 = smul.addr %s1064, 16
        %s1066 = smul.addr %s1065, 4
        %s1067 = scalar_lea.vmem %s6, %s1066
        %p1068 = pneg %p231
        %p1069 = pneg %p228
        %p1070 = scmp.lt.s32.totalorder %s47, 1
        %s1071 = scalar_select %p1070, %s47, 1
        %s1072 = smul.addr %s1071, 4
        %s1073 = scalar_lea.vmem %s7, %s1072
        %p1074 = pneg %p257
        %p1075 = pneg %p254
        %p1076 = scmp.lt.s32.totalorder %s47, 1
        %s1077 = scalar_select %p1076, %s47, 1
        %s1078 = smul.addr %s1077, 4
        %s1079 = smul.addr %s1078, 4
        %s1080 = scalar_lea.vmem %s8, %s1079
        %p1081 = pneg %p283
        %p1082 = pneg %p280
        %p1083 = scmp.lt.s32.totalorder %s47, 1
        %s1084 = scalar_select %p1083, %s47, 1
        %s1085 = scalar_lea.vmem %s9, %s1084
        %p1086 = pneg %p309
        %p1087 = pneg %p306
        %p1088 = scmp.lt.s32.totalorder %s47, 1
        %s1089 = scalar_select %p1088, %s47, 1
        %s1090 = smul.addr %s1089, 16
        %s1091 = smul.addr %s1090, 4
        %s1092 = scalar_lea.vmem %s10, %s1091
        %p1093 = pneg %p335
        %p1094 = pneg %p332
        %p1095 = scmp.lt.s32.totalorder %s47, 1
        %s1096 = scalar_select %p1095, %s47, 1
        %s1097 = smul.addr %s1096, 4
        %s1098 = scalar_lea.vmem %s11, %s1097
        %p1099 = pneg %p361
        %p1100 = pneg %p358
        %p1101 = scmp.lt.s32.totalorder %s47, 1
        %s1102 = scalar_select %p1101, %s47, 1
        %s1103 = smul.addr %s1102, 16
        %s1104 = smul.addr %s1103, 4
        %s1105 = scalar_lea.vmem %s12, %s1104
        %p1106 = pneg %p387
        %p1107 = pneg %p384
        %p1108 = scmp.lt.s32.totalorder %s47, 1
        %s1109 = scalar_select %p1108, %s47, 1
        %s1110 = smul.addr %s1109, 4
        %s1111 = scalar_lea.vmem %s13, %s1110
        %p1112 = pneg %p413
        %p1113 = pneg %p410
        %p1114 = scmp.lt.s32.totalorder %s47, 1
        %s1115 = scalar_select %p1114, %s47, 1
        %s1116 = smul.addr %s1115, 16
        %s1117 = smul.addr %s1116, 4
        %s1118 = scalar_lea.vmem %s14, %s1117
        %p1119 = pneg %p439
        %p1120 = pneg %p436
        %p1121 = scmp.lt.s32.totalorder %s47, 1
        %s1122 = scalar_select %p1121, %s47, 1
        %s1123 = smul.addr %s1122, 4
        %s1124 = scalar_lea.vmem %s15, %s1123
        %p1125 = pneg %p465
        %p1126 = pneg %p462
        %p1127 = scmp.lt.s32.totalorder %s47, 1
        %s1128 = scalar_select %p1127, %s47, 1
        %s1129 = smul.addr %s1128, 4
        %s1130 = smul.addr %s1129, 4
        %s1131 = scalar_lea.vmem %s16, %s1130
        %p1132 = pneg %p491
        %p1133 = pneg %p488
        %p1134 = scmp.lt.s32.totalorder %s47, 1
        %s1135 = scalar_select %p1134, %s47, 1
        %s1136 = scalar_lea.vmem %s17, %s1135
        %p1137 = pneg %p517
        %p1138 = pneg %p514
        %p1139 = scmp.lt.s32.totalorder %s47, 1
        %s1140 = scalar_select %p1139, %s47, 1
        %s1141 = smul.addr %s1140, 4
        %s1142 = smul.addr %s1141, 4
        %s1143 = scalar_lea.vmem %s18, %s1142
        %p1144 = pneg %p543
        %p1145 = pneg %p540
        %p1146 = scmp.lt.s32.totalorder %s47, 1
        %s1147 = scalar_select %p1146, %s47, 1
        %s1148 = scalar_lea.vmem %s19, %s1147
        %p1149 = pneg %p569
        %p1150 = pneg %p566
        %p1151 = scmp.lt.s32.totalorder %s47, 1
        %s1152 = scalar_select %p1151, %s47, 1
        %s1153 = smul.addr %s1152, 8
        %s1154 = smul.addr %s1153, 4
        %s1155 = scalar_lea.vmem %s20, %s1154
        %p1156 = pneg %p595
        %p1157 = pneg %p592
        %p1158 = scmp.lt.s32.totalorder %s47, 1
        %s1159 = scalar_select %p1158, %s47, 1
        %s1160 = scalar_lea.vmem %s21, %s1159
        %p1161 = pneg %p621
        %p1162 = pneg %p618
        %p1163 = scmp.lt.s32.totalorder %s47, 1
        %s1164 = scalar_select %p1163, %s47, 1
        %s1165 = scalar_lea.vmem %s22, %s1164
        %p1166 = pneg %p647
        %p1167 = pneg %p644
        %p1168 = scmp.lt.s32.totalorder %s47, 1
        %s1169 = scalar_select %p1168, %s47, 1
        %s1170 = scalar_lea.vmem %s23, %s1169
        %p1171 = pneg %p673
        %p1172 = pneg %p670
        %p1173 = scmp.lt.s32.totalorder %s47, 1
        %s1174 = scalar_select %p1173, %s47, 1
        %s1175 = scalar_lea.vmem %s24, %s1174
        %p1176 = pneg %p699
        %p1177 = pneg %p696
        %p1178 = scmp.lt.s32.totalorder %s47, 1
        %s1179 = scalar_select %p1178, %s47, 1
        %s1180 = scalar_lea.vmem %s25, %s1179
        %p1181 = pneg %p725
        %p1182 = pneg %p722
        %p1183 = scmp.lt.s32.totalorder %s47, 1
        %s1184 = scalar_select %p1183, %s47, 1
        %s1185 = scalar_lea.vmem %s26, %s1184
        %p1186 = pneg %p751
        %p1187 = pneg %p748
        %p1188 = scmp.lt.s32.totalorder %s47, 1
        %s1189 = scalar_select %p1188, %s47, 1
        %s1190 = scalar_lea.vmem %s27, %s1189
        %p1191 = pneg %p777
        %p1192 = pneg %p774
        %p1193 = pneg %p803
        %p1194 = pneg %p800
        %s1195 = sand.u32 %s790, 1
        %s1196 = scalar_lea.sflag [#allocation5], %s1195
        %s1197 = sand.u32 %s790, 1
        %s1198 = smul.addr %s1197, 4
        %s1199 = scalar_lea.vmem [#allocation4], %s1198
        %p1200 = scmp.lt.s32.totalorder %s46, 1
        %s1201 = scalar_select %p1200, %s46, 1
        %s1202 = smul.addr %s1201, 8
        %s1203 = scalar_lea.vmem %s0, %s1202
        %p1204 = scmp.lt.s32.totalorder %s46, 1
        %s1205 = scalar_select %p1204, %s46, 1
        %s1206 = smul.addr %s1205, 4
        %s1207 = scalar_lea.vmem %s1, %s1206
        %p1208 = scmp.lt.s32.totalorder %s47, 1
        %s1209 = scalar_select %p1208, %s47, 1
        %s1210 = smul.addr %s1209, 16
        %s1211 = smul.addr %s1210, 4
        %s1212 = scalar_lea.vmem %s2, %s1211
        %p1213 = scmp.lt.s32.totalorder %s47, 1
        %s1214 = scalar_select %p1213, %s47, 1
        %s1215 = smul.addr %s1214, 4
        %s1216 = scalar_lea.vmem %s3, %s1215
        %p1217 = scmp.lt.s32.totalorder %s47, 1
        %s1218 = scalar_select %p1217, %s47, 1
        %s1219 = smul.addr %s1218, 16
        %s1220 = smul.addr %s1219, 4
        %s1221 = scalar_lea.vmem %s4, %s1220
        %p1222 = scmp.lt.s32.totalorder %s47, 1
        %s1223 = scalar_select %p1222, %s47, 1
        %s1224 = smul.addr %s1223, 4
        %s1225 = scalar_lea.vmem %s5, %s1224
        %p1226 = scmp.lt.s32.totalorder %s47, 1
        %s1227 = scalar_select %p1226, %s47, 1
        %s1228 = smul.addr %s1227, 16
        %s1229 = smul.addr %s1228, 4
        %s1230 = scalar_lea.vmem %s6, %s1229
        %p1231 = scmp.lt.s32.totalorder %s47, 1
        %s1232 = scalar_select %p1231, %s47, 1
        %s1233 = smul.addr %s1232, 4
        %s1234 = scalar_lea.vmem %s7, %s1233
        %p1235 = scmp.lt.s32.totalorder %s47, 1
        %s1236 = scalar_select %p1235, %s47, 1
        %s1237 = smul.addr %s1236, 4
        %s1238 = smul.addr %s1237, 4
        %s1239 = scalar_lea.vmem %s8, %s1238
        %p1240 = scmp.lt.s32.totalorder %s47, 1
        %s1241 = scalar_select %p1240, %s47, 1
        %s1242 = scalar_lea.vmem %s9, %s1241
        %p1243 = scmp.lt.s32.totalorder %s47, 1
        %s1244 = scalar_select %p1243, %s47, 1
        %s1245 = smul.addr %s1244, 16
        %s1246 = smul.addr %s1245, 4
        %s1247 = scalar_lea.vmem %s10, %s1246
        %p1248 = scmp.lt.s32.totalorder %s47, 1
        %s1249 = scalar_select %p1248, %s47, 1
        %s1250 = smul.addr %s1249, 4
        %s1251 = scalar_lea.vmem %s11, %s1250
        %p1252 = scmp.lt.s32.totalorder %s47, 1
        %s1253 = scalar_select %p1252, %s47, 1
        %s1254 = smul.addr %s1253, 16
        %s1255 = smul.addr %s1254, 4
        %s1256 = scalar_lea.vmem %s12, %s1255
        %p1257 = scmp.lt.s32.totalorder %s47, 1
        %s1258 = scalar_select %p1257, %s47, 1
        %s1259 = smul.addr %s1258, 4
        %s1260 = scalar_lea.vmem %s13, %s1259
        %p1261 = scmp.lt.s32.totalorder %s47, 1
        %s1262 = scalar_select %p1261, %s47, 1
        %s1263 = smul.addr %s1262, 16
        %s1264 = smul.addr %s1263, 4
        %s1265 = scalar_lea.vmem %s14, %s1264
        %p1266 = scmp.lt.s32.totalorder %s47, 1
        %s1267 = scalar_select %p1266, %s47, 1
        %s1268 = smul.addr %s1267, 4
        %s1269 = scalar_lea.vmem %s15, %s1268
        %p1270 = scmp.lt.s32.totalorder %s47, 1
        %s1271 = scalar_select %p1270, %s47, 1
        %s1272 = smul.addr %s1271, 4
        %s1273 = smul.addr %s1272, 4
        %s1274 = scalar_lea.vmem %s16, %s1273
        %p1275 = scmp.lt.s32.totalorder %s47, 1
        %s1276 = scalar_select %p1275, %s47, 1
        %s1277 = scalar_lea.vmem %s17, %s1276
        %p1278 = scmp.lt.s32.totalorder %s47, 1
        %s1279 = scalar_select %p1278, %s47, 1
        %s1280 = smul.addr %s1279, 4
        %s1281 = smul.addr %s1280, 4
        %s1282 = scalar_lea.vmem %s18, %s1281
        %p1283 = scmp.lt.s32.totalorder %s47, 1
        %s1284 = scalar_select %p1283, %s47, 1
        %s1285 = scalar_lea.vmem %s19, %s1284
        %p1286 = scmp.lt.s32.totalorder %s47, 1
        %s1287 = scalar_select %p1286, %s47, 1
        %s1288 = smul.addr %s1287, 8
        %s1289 = smul.addr %s1288, 4
        %s1290 = scalar_lea.vmem %s20, %s1289
        %p1291 = scmp.lt.s32.totalorder %s47, 1
        %s1292 = scalar_select %p1291, %s47, 1
        %s1293 = scalar_lea.vmem %s21, %s1292
        %p1294 = scmp.lt.s32.totalorder %s47, 1
        %s1295 = scalar_select %p1294, %s47, 1
        %s1296 = scalar_lea.vmem %s22, %s1295
        %p1297 = scmp.lt.s32.totalorder %s47, 1
        %s1298 = scalar_select %p1297, %s47, 1
        %s1299 = scalar_lea.vmem %s23, %s1298
        %p1300 = scmp.lt.s32.totalorder %s47, 1
        %s1301 = scalar_select %p1300, %s47, 1
        %s1302 = scalar_lea.vmem %s24, %s1301
        %p1303 = scmp.lt.s32.totalorder %s47, 1
        %s1304 = scalar_select %p1303, %s47, 1
        %s1305 = scalar_lea.vmem %s25, %s1304
        %p1306 = scmp.lt.s32.totalorder %s47, 1
        %s1307 = scalar_select %p1306, %s47, 1
        %s1308 = scalar_lea.vmem %s26, %s1307
        %p1309 = scmp.lt.s32.totalorder %s47, 1
        %s1310 = scalar_select %p1309, %s47, 1
        %s1311 = scalar_lea.vmem %s27, %s1310
        %p1313 = scmp.eq.s32.totalorder %s47, 0
        // Predicated region
        $region133: #{tpu_custom_call.1} parent=131 // pred_check
          %p1314 = pneg %p1313
        $region134: #{tpu_custom_call.1} parent=131 // pred_check_branch
          %1316 = sbr.rel (%p1314) target = $region136
        $region135: #{tpu_custom_call.1} parent=131 // pred_region
          %v1317 = vld [vmem:[%s1203] sm:$0xff]
          %vm1318 = vcmask 261120
          %1319 = vst.msk [vmem:[#allocation2] sm:$0xff] %vm1318, %v1317
          %v1320 = vld [vmem:[%s1207] sm:$0xf]
          %vm1321 = vcmask 257024
          %1322 = vst.msk [vmem:[#allocation3] sm:$0xf] %vm1321, %v1320
          %1323 = vst.msk [vmem:[#allocation3 + $0x4] sm:$0xf] %vm1321, %v1320
          %1324 = vst.msk [vmem:[#allocation3 + $0x8] sm:$0xf] %vm1321, %v1320
          %1325 = vst.msk [vmem:[#allocation3 + $0xc] sm:$0xf] %vm1321, %v1320
        $region136: #{tpu_custom_call.1} parent=131 // pred_fallthru
          _
        %v1326 = vld [vmem:[#allocation2] sm:$0xff]
        %v1327 = vld [vmem:[#allocation3] sm:$0xf]
        %v1328 = vld [vmem:[#allocation3 + $0x4] sm:$0xf]
        %v1329 = vld [vmem:[#allocation3 + $0x8] sm:$0xf]
        %v1330 = vld [vmem:[#allocation3 + $0xc] sm:$0xf]
        %v1331 = vpack.c.bf16 %v1326, %v1326
        %v1332 = vld [vmem:[%s1212] sm:$0xf]
        %v1333 = vld [vmem:[%s1212 + $0x4] sm:$0xf]
        %v1334 = vld [vmem:[%s1212 + $0x8] sm:$0xf]
        %v1335 = vld [vmem:[%s1212 + $0xc] sm:$0xf]
        %v1336 = vld [vmem:[%s1212 + $0x10] sm:$0xf]
        %v1337 = vld [vmem:[%s1212 + $0x14] sm:$0xf]
        %v1338 = vld [vmem:[%s1212 + $0x18] sm:$0xf]
        %v1339 = vld [vmem:[%s1212 + $0x1c] sm:$0xf]
        %v1340 = vld [vmem:[%s1212 + $0x20] sm:$0xf]
        %v1341 = vld [vmem:[%s1212 + $0x24] sm:$0xf]
        %v1342 = vld [vmem:[%s1212 + $0x28] sm:$0xf]
        %v1343 = vld [vmem:[%s1212 + $0x2c] sm:$0xf]
        %v1344 = vld [vmem:[%s1212 + $0x30] sm:$0xf]
        %v1345 = vld [vmem:[%s1212 + $0x34] sm:$0xf]
        %v1346 = vld [vmem:[%s1212 + $0x38] sm:$0xf]
        %v1347 = vld [vmem:[%s1212 + $0x3c] sm:$0xf]
        %v1348 = vld [vmem:[%s1216] sm:$0x1]
        %v1349 = vld [vmem:[%s1216 + $0x1] sm:$0x1]
        %v1350 = vld [vmem:[%s1216 + $0x2] sm:$0x1]
        %v1351 = vld [vmem:[%s1216 + $0x3] sm:$0x1]
        %v1352 = vld [vmem:[%s1221] sm:$0xf]
        %v1353 = vld [vmem:[%s1221 + $0x4] sm:$0xf]
        %v1354 = vld [vmem:[%s1221 + $0x8] sm:$0xf]
        %v1355 = vld [vmem:[%s1221 + $0xc] sm:$0xf]
        %v1356 = vld [vmem:[%s1221 + $0x10] sm:$0xf]
        %v1357 = vld [vmem:[%s1221 + $0x14] sm:$0xf]
        %v1358 = vld [vmem:[%s1221 + $0x18] sm:$0xf]
        %v1359 = vld [vmem:[%s1221 + $0x1c] sm:$0xf]
        %v1360 = vld [vmem:[%s1221 + $0x20] sm:$0xf]
        %v1361 = vld [vmem:[%s1221 + $0x24] sm:$0xf]
        %v1362 = vld [vmem:[%s1221 + $0x28] sm:$0xf]
        %v1363 = vld [vmem:[%s1221 + $0x2c] sm:$0xf]
        %v1364 = vld [vmem:[%s1221 + $0x30] sm:$0xf]
        %v1365 = vld [vmem:[%s1221 + $0x34] sm:$0xf]
        %v1366 = vld [vmem:[%s1221 + $0x38] sm:$0xf]
        %v1367 = vld [vmem:[%s1221 + $0x3c] sm:$0xf]
        %v1368 = vld [vmem:[%s1225] sm:$0x1]
        %v1369 = vld [vmem:[%s1225 + $0x1] sm:$0x1]
        %v1370 = vld [vmem:[%s1225 + $0x2] sm:$0x1]
        %v1371 = vld [vmem:[%s1225 + $0x3] sm:$0x1]
        %v1372 = vld [vmem:[%s1230] sm:$0xf]
        %v1373 = vld [vmem:[%s1230 + $0x4] sm:$0xf]
        %v1374 = vld [vmem:[%s1230 + $0x8] sm:$0xf]
        %v1375 = vld [vmem:[%s1230 + $0xc] sm:$0xf]
        %v1376 = vld [vmem:[%s1230 + $0x10] sm:$0xf]
        %v1377 = vld [vmem:[%s1230 + $0x14] sm:$0xf]
        %v1378 = vld [vmem:[%s1230 + $0x18] sm:$0xf]
        %v1379 = vld [vmem:[%s1230 + $0x1c] sm:$0xf]
        %v1380 = vld [vmem:[%s1230 + $0x20] sm:$0xf]
        %v1381 = vld [vmem:[%s1230 + $0x24] sm:$0xf]
        %v1382 = vld [vmem:[%s1230 + $0x28] sm:$0xf]
        %v1383 = vld [vmem:[%s1230 + $0x2c] sm:$0xf]
        %v1384 = vld [vmem:[%s1230 + $0x30] sm:$0xf]
        %v1385 = vld [vmem:[%s1230 + $0x34] sm:$0xf]
        %v1386 = vld [vmem:[%s1230 + $0x38] sm:$0xf]
        %v1387 = vld [vmem:[%s1230 + $0x3c] sm:$0xf]
        %v1388 = vld [vmem:[%s1234] sm:$0x1]
        %v1389 = vld [vmem:[%s1234 + $0x1] sm:$0x1]
        %v1390 = vld [vmem:[%s1234 + $0x2] sm:$0x1]
        %v1391 = vld [vmem:[%s1234 + $0x3] sm:$0x1]
        %v1392 = vld [vmem:[%s1239] sm:$0xf]
        %v1393 = vld [vmem:[%s1239 + $0x4] sm:$0xf]
        %v1394 = vld [vmem:[%s1239 + $0x8] sm:$0xf]
        %v1395 = vld [vmem:[%s1239 + $0xc] sm:$0xf]
        %v1396 = vld [vmem:[%s1242] sm:$0x1]
        %v1401 = vlaneseq
        %v1402 = vshrl.u32 %v1401, 7
        %v1403 = vsub.s32 0, %v1402
        %v1404 = vrot.slane %v1348, %v1403
        %v1405 = vlaneseq
        %v1406 = vshrl.u32 %v1405, 7
        %v1407 = vsub.s32 0, %v1406
        %v1408 = vrot.slane %v1349, %v1407
        %v1409 = vlaneseq
        %v1410 = vshrl.u32 %v1409, 7
        %v1411 = vsub.s32 0, %v1410
        %v1412 = vrot.slane %v1350, %v1411
        %v1413 = vlaneseq
        %v1414 = vshrl.u32 %v1413, 7
        %v1415 = vsub.s32 0, %v1414
        %v1416 = vrot.slane %v1351, %v1415
        %v1425 = vunpack.c.l.b16 %v1332
        %v1426 = vunpack.c.l.b16 %v1333
        %v1427 = vunpack.c.l.b16 %v1334
        %v1428 = vunpack.c.l.b16 %v1335
        %v1429 = vpack.c.b16 %v1426, %v1425
        %v1430 = vpack.c.b16 %v1428, %v1427
        %vm1433 = vcmask 261120
        %v1435 = vsel %vm1433, %v1331, 0
        %1437 = vmatprep.subr.bf16.mxu0 0
        %1438 = vmatpush1.bf16.msra.mxu0 %v1429
        %1439 = vmatprep.subr.bf16.mxu0 0
        %1440 = vmatpush1.bf16.msra.mxu0 %v1430
        %1441 = vmatprep.subr.bf16.mxu0 0
        %1442 = vmatpush1.bf16.msra.mxu0 0
        %1443 = vmatprep.subr.bf16.mxu0 0
        %1444 = vmatpush1.bf16.msra.mxu0 0
        %1445 = vmatprep.subr.bf16.mxu0 0
        %1446 = vmatpush1.bf16.msra.mxu0 0
        %1447 = vmatprep.subr.bf16.mxu0 0
        %1448 = vmatpush1.bf16.msra.mxu0 0
        %1449 = vmatprep.subr.bf16.mxu0 0
        %1450 = vmatpush1.bf16.msra.mxu0 0
        %1451 = vmatprep.subr.bf16.mxu0 0
        %1452 = vmatpush1.bf16.msra.mxu0 0
        %1453 = vmatprep.subr.bf16.mxu0 0
        %1454 = vmatpush1.bf16.msra.mxu0 0
        %1455 = vmatprep.subr.bf16.mxu0 0
        %1456 = vmatpush1.bf16.msra.mxu0 0
        %1457 = vmatprep.subr.bf16.mxu0 0
        %1458 = vmatpush1.bf16.msra.mxu0 0
        %1459 = vmatprep.subr.bf16.mxu0 0
        %1460 = vmatpush1.bf16.msra.mxu0 0
        %1461 = vmatprep.subr.bf16.mxu0 0
        %1462 = vmatpush1.bf16.msra.mxu0 0
        %1463 = vmatprep.subr.bf16.mxu0 0
        %1464 = vmatpush1.bf16.msra.mxu0 0
        %1465 = vmatprep.subr.bf16.mxu0 0
        %1466 = vmatpush1.bf16.msra.mxu0 0
        %1467 = vmatprep.subr.bf16.mxu0 0
        %1468 = vmatpush1.bf16.msra.mxu0 0
        %1469 = vmatprep.mubr.bf16.mxu0 0
        %1470 = vmatmul.mubr.bf16.gmra.mrb[0].mxu0 %v1435
        %v1471 = vpop.f32.mrb[0].mxu0
        %v1472 = vadd.f32 %v1404, %v1471
        %v1473 = vpop.f32.mrb[0].mxu0
        %v1474 = vpop.f32.mrb[0].mxu0
        %v1475 = vpop.f32.mrb[0].mxu0
        %1476 = vdwg.mxu0
        %v1481 = vunpack.c.l.b16 %v1336
        %v1482 = vunpack.c.l.b16 %v1337
        %v1483 = vunpack.c.l.b16 %v1338
        %v1484 = vunpack.c.l.b16 %v1339
        %v1485 = vpack.c.b16 %v1482, %v1481
        %v1486 = vpack.c.b16 %v1484, %v1483
        %1489 = vmatprep.subr.bf16.mxu0 0
        %1490 = vmatpush1.bf16.msra.mxu0 %v1485
        %1491 = vmatprep.subr.bf16.mxu0 0
        %1492 = vmatpush1.bf16.msra.mxu0 %v1486
        %1493 = vmatprep.subr.bf16.mxu0 0
        %1494 = vmatpush1.bf16.msra.mxu0 0
        %1495 = vmatprep.subr.bf16.mxu0 0
        %1496 = vmatpush1.bf16.msra.mxu0 0
        %1497 = vmatprep.subr.bf16.mxu0 0
        %1498 = vmatpush1.bf16.msra.mxu0 0
        %1499 = vmatprep.subr.bf16.mxu0 0
        %1500 = vmatpush1.bf16.msra.mxu0 0
        %1501 = vmatprep.subr.bf16.mxu0 0
        %1502 = vmatpush1.bf16.msra.mxu0 0
        %1503 = vmatprep.subr.bf16.mxu0 0
        %1504 = vmatpush1.bf16.msra.mxu0 0
        %1505 = vmatprep.subr.bf16.mxu0 0
        %1506 = vmatpush1.bf16.msra.mxu0 0
        %1507 = vmatprep.subr.bf16.mxu0 0
        %1508 = vmatpush1.bf16.msra.mxu0 0
        %1509 = vmatprep.subr.bf16.mxu0 0
        %1510 = vmatpush1.bf16.msra.mxu0 0
        %1511 = vmatprep.subr.bf16.mxu0 0
        %1512 = vmatpush1.bf16.msra.mxu0 0
        %1513 = vmatprep.subr.bf16.mxu0 0
        %1514 = vmatpush1.bf16.msra.mxu0 0
        %1515 = vmatprep.subr.bf16.mxu0 0
        %1516 = vmatpush1.bf16.msra.mxu0 0
        %1517 = vmatprep.subr.bf16.mxu0 0
        %1518 = vmatpush1.bf16.msra.mxu0 0
        %1519 = vmatprep.subr.bf16.mxu0 0
        %1520 = vmatpush1.bf16.msra.mxu0 0
        %1521 = vmatprep.mubr.bf16.mxu0 0
        %1522 = vmatmul.mubr.bf16.gmra.mrb[0].mxu0 %v1435
        %v1523 = vpop.f32.mrb[0].mxu0
        %v1524 = vadd.f32 %v1408, %v1523
        %v1525 = vpop.f32.mrb[0].mxu0
        %v1526 = vpop.f32.mrb[0].mxu0
        %v1527 = vpop.f32.mrb[0].mxu0
        %1528 = vdwg.mxu0
        %v1533 = vunpack.c.l.b16 %v1340
        %v1534 = vunpack.c.l.b16 %v1341
        %v1535 = vunpack.c.l.b16 %v1342
        %v1536 = vunpack.c.l.b16 %v1343
        %v1537 = vpack.c.b16 %v1534, %v1533
        %v1538 = vpack.c.b16 %v1536, %v1535
        %1541 = vmatprep.subr.bf16.mxu0 0
        %1542 = vmatpush1.bf16.msra.mxu0 %v1537
        %1543 = vmatprep.subr.bf16.mxu0 0
        %1544 = vmatpush1.bf16.msra.mxu0 %v1538
        %1545 = vmatprep.subr.bf16.mxu0 0
        %1546 = vmatpush1.bf16.msra.mxu0 0
        %1547 = vmatprep.subr.bf16.mxu0 0
        %1548 = vmatpush1.bf16.msra.mxu0 0
        %1549 = vmatprep.subr.bf16.mxu0 0
        %1550 = vmatpush1.bf16.msra.mxu0 0
        %1551 = vmatprep.subr.bf16.mxu0 0
        %1552 = vmatpush1.bf16.msra.mxu0 0
        %1553 = vmatprep.subr.bf16.mxu0 0
        %1554 = vmatpush1.bf16.msra.mxu0 0
        %1555 = vmatprep.subr.bf16.mxu0 0
        %1556 = vmatpush1.bf16.msra.mxu0 0
        %1557 = vmatprep.subr.bf16.mxu0 0
        %1558 = vmatpush1.bf16.msra.mxu0 0
        %1559 = vmatprep.subr.bf16.mxu0 0
        %1560 = vmatpush1.bf16.msra.mxu0 0
        %1561 = vmatprep.subr.bf16.mxu0 0
        %1562 = vmatpush1.bf16.msra.mxu0 0
        %1563 = vmatprep.subr.bf16.mxu0 0
        %1564 = vmatpush1.bf16.msra.mxu0 0
        %1565 = vmatprep.subr.bf16.mxu0 0
        %1566 = vmatpush1.bf16.msra.mxu0 0
        %1567 = vmatprep.subr.bf16.mxu0 0
        %1568 = vmatpush1.bf16.msra.mxu0 0
        %1569 = vmatprep.subr.bf16.mxu0 0
        %1570 = vmatpush1.bf16.msra.mxu0 0
        %1571 = vmatprep.subr.bf16.mxu0 0
        %1572 = vmatpush1.bf16.msra.mxu0 0
        %1573 = vmatprep.mubr.bf16.mxu0 0
        %1574 = vmatmul.mubr.bf16.gmra.mrb[0].mxu0 %v1435
        %v1575 = vpop.f32.mrb[0].mxu0
        %v1576 = vadd.f32 %v1412, %v1575
        %v1577 = vpop.f32.mrb[0].mxu0
        %v1578 = vpop.f32.mrb[0].mxu0
        %v1579 = vpop.f32.mrb[0].mxu0
        %1580 = vdwg.mxu0
        %v1585 = vunpack.c.l.b16 %v1344
        %v1586 = vunpack.c.l.b16 %v1345
        %v1587 = vunpack.c.l.b16 %v1346
        %v1588 = vunpack.c.l.b16 %v1347
        %v1589 = vpack.c.b16 %v1586, %v1585
        %v1590 = vpack.c.b16 %v1588, %v1587
        %1593 = vmatprep.subr.bf16.mxu0 0
        %1594 = vmatpush1.bf16.msra.mxu0 %v1589
        %1595 = vmatprep.subr.bf16.mxu0 0
        %1596 = vmatpush1.bf16.msra.mxu0 %v1590
        %1597 = vmatprep.subr.bf16.mxu0 0
        %1598 = vmatpush1.bf16.msra.mxu0 0
        %1599 = vmatprep.subr.bf16.mxu0 0
        %1600 = vmatpush1.bf16.msra.mxu0 0
        %1601 = vmatprep.subr.bf16.mxu0 0
        %1602 = vmatpush1.bf16.msra.mxu0 0
        %1603 = vmatprep.subr.bf16.mxu0 0
        %1604 = vmatpush1.bf16.msra.mxu0 0
        %1605 = vmatprep.subr.bf16.mxu0 0
        %1606 = vmatpush1.bf16.msra.mxu0 0
        %1607 = vmatprep.subr.bf16.mxu0 0
        %1608 = vmatpush1.bf16.msra.mxu0 0
        %1609 = vmatprep.subr.bf16.mxu0 0
        %1610 = vmatpush1.bf16.msra.mxu0 0
        %1611 = vmatprep.subr.bf16.mxu0 0
        %1612 = vmatpush1.bf16.msra.mxu0 0
        %1613 = vmatprep.subr.bf16.mxu0 0
        %1614 = vmatpush1.bf16.msra.mxu0 0
        %1615 = vmatprep.subr.bf16.mxu0 0
        %1616 = vmatpush1.bf16.msra.mxu0 0
        %1617 = vmatprep.subr.bf16.mxu0 0
        %1618 = vmatpush1.bf16.msra.mxu0 0
        %1619 = vmatprep.subr.bf16.mxu0 0
        %1620 = vmatpush1.bf16.msra.mxu0 0
        %1621 = vmatprep.subr.bf16.mxu0 0
        %1622 = vmatpush1.bf16.msra.mxu0 0
        %1623 = vmatprep.subr.bf16.mxu0 0
        %1624 = vmatpush1.bf16.msra.mxu0 0
        %1625 = vmatprep.mubr.bf16.mxu0 0
        %1626 = vmatmul.mubr.bf16.gmra.mrb[0].mxu0 %v1435
        %v1627 = vpop.f32.mrb[0].mxu0
        %v1628 = vadd.f32 %v1416, %v1627
        %v1629 = vpop.f32.mrb[0].mxu0
        %v1630 = vpop.f32.mrb[0].mxu0
        %v1631 = vpop.f32.mrb[0].mxu0
        %1632 = vdwg.mxu0
        %v1637 = vlaneseq
        %v1638 = vshrl.u32 %v1637, 7
        %v1639 = vsub.s32 0, %v1638
        %v1640 = vrot.slane %v1368, %v1639
        %v1641 = vlaneseq
        %v1642 = vshrl.u32 %v1641, 7
        %v1643 = vsub.s32 0, %v1642
        %v1644 = vrot.slane %v1369, %v1643
        %v1645 = vlaneseq
        %v1646 = vshrl.u32 %v1645, 7
        %v1647 = vsub.s32 0, %v1646
        %v1648 = vrot.slane %v1370, %v1647
        %v1649 = vlaneseq
        %v1650 = vshrl.u32 %v1649, 7
        %v1651 = vsub.s32 0, %v1650
        %v1652 = vrot.slane %v1371, %v1651
        %v1661 = vunpack.c.l.b16 %v1352
        %v1662 = vunpack.c.l.b16 %v1353
        %v1663 = vunpack.c.l.b16 %v1354
        %v1664 = vunpack.c.l.b16 %v1355
        %v1665 = vpack.c.b16 %v1662, %v1661
        %v1666 = vpack.c.b16 %v1664, %v1663
        %1669 = vmatprep.subr.bf16.mxu0 0
        %1670 = vmatpush1.bf16.msra.mxu0 %v1665
        %1671 = vmatprep.subr.bf16.mxu0 0
        %1672 = vmatpush1.bf16.msra.mxu0 %v1666
        %1673 = vmatprep.subr.bf16.mxu0 0
        %1674 = vmatpush1.bf16.msra.mxu0 0
        %1675 = vmatprep.subr.bf16.mxu0 0
        %1676 = vmatpush1.bf16.msra.mxu0 0
        %1677 = vmatprep.subr.bf16.mxu0 0
        %1678 = vmatpush1.bf16.msra.mxu0 0
        %1679 = vmatprep.subr.bf16.mxu0 0
        %1680 = vmatpush1.bf16.msra.mxu0 0
        %1681 = vmatprep.subr.bf16.mxu0 0
        %1682 = vmatpush1.bf16.msra.mxu0 0
        %1683 = vmatprep.subr.bf16.mxu0 0
        %1684 = vmatpush1.bf16.msra.mxu0 0
        %1685 = vmatprep.subr.bf16.mxu0 0
        %1686 = vmatpush1.bf16.msra.mxu0 0
        %1687 = vmatprep.subr.bf16.mxu0 0
        %1688 = vmatpush1.bf16.msra.mxu0 0
        %1689 = vmatprep.subr.bf16.mxu0 0
        %1690 = vmatpush1.bf16.msra.mxu0 0
        %1691 = vmatprep.subr.bf16.mxu0 0
        %1692 = vmatpush1.bf16.msra.mxu0 0
        %1693 = vmatprep.subr.bf16.mxu0 0
        %1694 = vmatpush1.bf16.msra.mxu0 0
        %1695 = vmatprep.subr.bf16.mxu0 0
        %1696 = vmatpush1.bf16.msra.mxu0 0
        %1697 = vmatprep.subr.bf16.mxu0 0
        %1698 = vmatpush1.bf16.msra.mxu0 0
        %1699 = vmatprep.subr.bf16.mxu0 0
        %1700 = vmatpush1.bf16.msra.mxu0 0
        %1701 = vmatprep.mubr.bf16.mxu0 0
        %1702 = vmatmul.mubr.bf16.gmra.mrb[0].mxu0 %v1435
        %v1703 = vpop.f32.mrb[0].mxu0
        %v1704 = vadd.f32 %v1640, %v1703
        %v1705 = vpop.f32.mrb[0].mxu0
        %v1706 = vpop.f32.mrb[0].mxu0
        %v1707 = vpop.f32.mrb[0].mxu0
        %1708 = vdwg.mxu0
        %v1713 = vunpack.c.l.b16 %v1356
        %v1714 = vunpack.c.l.b16 %v1357
        %v1715 = vunpack.c.l.b16 %v1358
        %v1716 = vunpack.c.l.b16 %v1359
        %v1717 = vpack.c.b16 %v1714, %v1713
        %v1718 = vpack.c.b16 %v1716, %v1715
        %1721 = vmatprep.subr.bf16.mxu0 0
        %1722 = vmatpush1.bf16.msra.mxu0 %v1717
        %1723 = vmatprep.subr.bf16.mxu0 0
        %1724 = vmatpush1.bf16.msra.mxu0 %v1718
        %1725 = vmatprep.subr.bf16.mxu0 0
        %1726 = vmatpush1.bf16.msra.mxu0 0
        %1727 = vmatprep.subr.bf16.mxu0 0
        %1728 = vmatpush1.bf16.msra.mxu0 0
        %1729 = vmatprep.subr.bf16.mxu0 0
        %1730 = vmatpush1.bf16.msra.mxu0 0
        %1731 = vmatprep.subr.bf16.mxu0 0
        %1732 = vmatpush1.bf16.msra.mxu0 0
        %1733 = vmatprep.subr.bf16.mxu0 0
        %1734 = vmatpush1.bf16.msra.mxu0 0
        %1735 = vmatprep.subr.bf16.mxu0 0
        %1736 = vmatpush1.bf16.msra.mxu0 0
        %1737 = vmatprep.subr.bf16.mxu0 0
        %1738 = vmatpush1.bf16.msra.mxu0 0
        %1739 = vmatprep.subr.bf16.mxu0 0
        %1740 = vmatpush1.bf16.msra.mxu0 0
        %1741 = vmatprep.subr.bf16.mxu0 0
        %1742 = vmatpush1.bf16.msra.mxu0 0
        %1743 = vmatprep.subr.bf16.mxu0 0
        %1744 = vmatpush1.bf16.msra.mxu0 0
        %1745 = vmatprep.subr.bf16.mxu0 0
        %1746 = vmatpush1.bf16.msra.mxu0 0
        %1747 = vmatprep.subr.bf16.mxu0 0
        %1748 = vmatpush1.bf16.msra.mxu0 0
        %1749 = vmatprep.subr.bf16.mxu0 0
        %1750 = vmatpush1.bf16.msra.mxu0 0
        %1751 = vmatprep.subr.bf16.mxu0 0
        %1752 = vmatpush1.bf16.msra.mxu0 0
        %1753 = vmatprep.mubr.bf16.mxu0 0
        %1754 = vmatmul.mubr.bf16.gmra.mrb[0].mxu0 %v1435
        %v1755 = vpop.f32.mrb[0].mxu0
        %v1756 = vadd.f32 %v1644, %v1755
        %v1757 = vpop.f32.mrb[0].mxu0
        %v1758 = vpop.f32.mrb[0].mxu0
        %v1759 = vpop.f32.mrb[0].mxu0
        %1760 = vdwg.mxu0
        %v1765 = vunpack.c.l.b16 %v1360
        %v1766 = vunpack.c.l.b16 %v1361
        %v1767 = vunpack.c.l.b16 %v1362
        %v1768 = vunpack.c.l.b16 %v1363
        %v1769 = vpack.c.b16 %v1766, %v1765
        %v1770 = vpack.c.b16 %v1768, %v1767
        %1773 = vmatprep.subr.bf16.mxu0 0
        %1774 = vmatpush1.bf16.msra.mxu0 %v1769
        %1775 = vmatprep.subr.bf16.mxu0 0
        %1776 = vmatpush1.bf16.msra.mxu0 %v1770
        %1777 = vmatprep.subr.bf16.mxu0 0
        %1778 = vmatpush1.bf16.msra.mxu0 0
        %1779 = vmatprep.subr.bf16.mxu0 0
        %1780 = vmatpush1.bf16.msra.mxu0 0
        %1781 = vmatprep.subr.bf16.mxu0 0
        %1782 = vmatpush1.bf16.msra.mxu0 0
        %1783 = vmatprep.subr.bf16.mxu0 0
        %1784 = vmatpush1.bf16.msra.mxu0 0
        %1785 = vmatprep.subr.bf16.mxu0 0
        %1786 = vmatpush1.bf16.msra.mxu0 0
        %1787 = vmatprep.subr.bf16.mxu0 0
        %1788 = vmatpush1.bf16.msra.mxu0 0
        %1789 = vmatprep.subr.bf16.mxu0 0
        %1790 = vmatpush1.bf16.msra.mxu0 0
        %1791 = vmatprep.subr.bf16.mxu0 0
        %1792 = vmatpush1.bf16.msra.mxu0 0
        %1793 = vmatprep.subr.bf16.mxu0 0
        %1794 = vmatpush1.bf16.msra.mxu0 0
        %1795 = vmatprep.subr.bf16.mxu0 0
        %1796 = vmatpush1.bf16.msra.mxu0 0
        %1797 = vmatprep.subr.bf16.mxu0 0
        %1798 = vmatpush1.bf16.msra.mxu0 0
        %1799 = vmatprep.subr.bf16.mxu0 0
        %1800 = vmatpush1.bf16.msra.mxu0 0
        %1801 = vmatprep.subr.bf16.mxu0 0
        %1802 = vmatpush1.bf16.msra.mxu0 0
        %1803 = vmatprep.subr.bf16.mxu0 0
        %1804 = vmatpush1.bf16.msra.mxu0 0
        %1805 = vmatprep.mubr.bf16.mxu0 0
        %1806 = vmatmul.mubr.bf16.gmra.mrb[0].mxu0 %v1435
        %v1807 = vpop.f32.mrb[0].mxu0
        %v1808 = vadd.f32 %v1648, %v1807
        %v1809 = vpop.f32.mrb[0].mxu0
        %v1810 = vpop.f32.mrb[0].mxu0
        %v1811 = vpop.f32.mrb[0].mxu0
        %1812 = vdwg.mxu0
        %v1817 = vunpack.c.l.b16 %v1364
        %v1818 = vunpack.c.l.b16 %v1365
        %v1819 = vunpack.c.l.b16 %v1366
        %v1820 = vunpack.c.l.b16 %v1367
        %v1821 = vpack.c.b16 %v1818, %v1817
        %v1822 = vpack.c.b16 %v1820, %v1819
        %1825 = vmatprep.subr.bf16.mxu0 0
        %1826 = vmatpush1.bf16.msra.mxu0 %v1821
        %1827 = vmatprep.subr.bf16.mxu0 0
        %1828 = vmatpush1.bf16.msra.mxu0 %v1822
        %1829 = vmatprep.subr.bf16.mxu0 0
        %1830 = vmatpush1.bf16.msra.mxu0 0
        %1831 = vmatprep.subr.bf16.mxu0 0
        %1832 = vmatpush1.bf16.msra.mxu0 0
        %1833 = vmatprep.subr.bf16.mxu0 0
        %1834 = vmatpush1.bf16.msra.mxu0 0
        %1835 = vmatprep.subr.bf16.mxu0 0
        %1836 = vmatpush1.bf16.msra.mxu0 0
        %1837 = vmatprep.subr.bf16.mxu0 0
        %1838 = vmatpush1.bf16.msra.mxu0 0
        %1839 = vmatprep.subr.bf16.mxu0 0
        %1840 = vmatpush1.bf16.msra.mxu0 0
        %1841 = vmatprep.subr.bf16.mxu0 0
        %1842 = vmatpush1.bf16.msra.mxu0 0
        %1843 = vmatprep.subr.bf16.mxu0 0
        %1844 = vmatpush1.bf16.msra.mxu0 0
        %1845 = vmatprep.subr.bf16.mxu0 0
        %1846 = vmatpush1.bf16.msra.mxu0 0
        %1847 = vmatprep.subr.bf16.mxu0 0
        %1848 = vmatpush1.bf16.msra.mxu0 0
        %1849 = vmatprep.subr.bf16.mxu0 0
        %1850 = vmatpush1.bf16.msra.mxu0 0
        %1851 = vmatprep.subr.bf16.mxu0 0
        %1852 = vmatpush1.bf16.msra.mxu0 0
        %1853 = vmatprep.subr.bf16.mxu0 0
        %1854 = vmatpush1.bf16.msra.mxu0 0
        %1855 = vmatprep.subr.bf16.mxu0 0
        %1856 = vmatpush1.bf16.msra.mxu0 0
        %1857 = vmatprep.mubr.bf16.mxu0 0
        %1858 = vmatmul.mubr.bf16.gmra.mrb[0].mxu0 %v1435
        %v1859 = vpop.f32.mrb[0].mxu0
        %v1860 = vadd.f32 %v1652, %v1859
        %v1861 = vpop.f32.mrb[0].mxu0
        %v1862 = vpop.f32.mrb[0].mxu0
        %v1863 = vpop.f32.mrb[0].mxu0
        %1864 = vdwg.mxu0
        %v1869 = vlaneseq
        %v1870 = vshrl.u32 %v1869, 7
        %v1871 = vsub.s32 0, %v1870
        %v1872 = vrot.slane %v1388, %v1871
        %v1873 = vlaneseq
        %v1874 = vshrl.u32 %v1873, 7
        %v1875 = vsub.s32 0, %v1874
        %v1876 = vrot.slane %v1389, %v1875
        %v1877 = vlaneseq
        %v1878 = vshrl.u32 %v1877, 7
        %v1879 = vsub.s32 0, %v1878
        %v1880 = vrot.slane %v1390, %v1879
        %v1881 = vlaneseq
        %v1882 = vshrl.u32 %v1881, 7
        %v1883 = vsub.s32 0, %v1882
        %v1884 = vrot.slane %v1391, %v1883
        %v1893 = vunpack.c.l.b16 %v1372
        %v1894 = vunpack.c.l.b16 %v1373
        %v1895 = vunpack.c.l.b16 %v1374
        %v1896 = vunpack.c.l.b16 %v1375
        %v1897 = vpack.c.b16 %v1894, %v1893
        %v1898 = vpack.c.b16 %v1896, %v1895
        %1901 = vmatprep.subr.bf16.mxu0 0
        %1902 = vmatpush1.bf16.msra.mxu0 %v1897
        %1903 = vmatprep.subr.bf16.mxu0 0
        %1904 = vmatpush1.bf16.msra.mxu0 %v1898
        %1905 = vmatprep.subr.bf16.mxu0 0
        %1906 = vmatpush1.bf16.msra.mxu0 0
        %1907 = vmatprep.subr.bf16.mxu0 0
        %1908 = vmatpush1.bf16.msra.mxu0 0
        %1909 = vmatprep.subr.bf16.mxu0 0
        %1910 = vmatpush1.bf16.msra.mxu0 0
        %1911 = vmatprep.subr.bf16.mxu0 0
        %1912 = vmatpush1.bf16.msra.mxu0 0
        %1913 = vmatprep.subr.bf16.mxu0 0
        %1914 = vmatpush1.bf16.msra.mxu0 0
        %1915 = vmatprep.subr.bf16.mxu0 0
        %1916 = vmatpush1.bf16.msra.mxu0 0
        %1917 = vmatprep.subr.bf16.mxu0 0
        %1918 = vmatpush1.bf16.msra.mxu0 0
        %1919 = vmatprep.subr.bf16.mxu0 0
        %1920 = vmatpush1.bf16.msra.mxu0 0
        %1921 = vmatprep.subr.bf16.mxu0 0
        %1922 = vmatpush1.bf16.msra.mxu0 0
        %1923 = vmatprep.subr.bf16.mxu0 0
        %1924 = vmatpush1.bf16.msra.mxu0 0
        %1925 = vmatprep.subr.bf16.mxu0 0
        %1926 = vmatpush1.bf16.msra.mxu0 0
        %1927 = vmatprep.subr.bf16.mxu0 0
        %1928 = vmatpush1.bf16.msra.mxu0 0
        %1929 = vmatprep.subr.bf16.mxu0 0
        %1930 = vmatpush1.bf16.msra.mxu0 0
        %1931 = vmatprep.subr.bf16.mxu0 0
        %1932 = vmatpush1.bf16.msra.mxu0 0
        %1933 = vmatprep.mubr.bf16.mxu0 0
        %1934 = vmatmul.mubr.bf16.gmra.mrb[0].mxu0 %v1435
        %v1935 = vpop.f32.mrb[0].mxu0
        %v1936 = vadd.f32 %v1872, %v1935
        %v1937 = vpop.f32.mrb[0].mxu0
        %v1938 = vpop.f32.mrb[0].mxu0
        %v1939 = vpop.f32.mrb[0].mxu0
        %1940 = vdwg.mxu0
        %v1945 = vunpack.c.l.b16 %v1376
        %v1946 = vunpack.c.l.b16 %v1377
        %v1947 = vunpack.c.l.b16 %v1378
        %v1948 = vunpack.c.l.b16 %v1379
        %v1949 = vpack.c.b16 %v1946, %v1945
        %v1950 = vpack.c.b16 %v1948, %v1947
        %1953 = vmatprep.subr.bf16.mxu0 0
        %1954 = vmatpush1.bf16.msra.mxu0 %v1949
        %1955 = vmatprep.subr.bf16.mxu0 0
        %1956 = vmatpush1.bf16.msra.mxu0 %v1950
        %1957 = vmatprep.subr.bf16.mxu0 0
        %1958 = vmatpush1.bf16.msra.mxu0 0
        %1959 = vmatprep.subr.bf16.mxu0 0
        %1960 = vmatpush1.bf16.msra.mxu0 0
        %1961 = vmatprep.subr.bf16.mxu0 0
        %1962 = vmatpush1.bf16.msra.mxu0 0
        %1963 = vmatprep.subr.bf16.mxu0 0
        %1964 = vmatpush1.bf16.msra.mxu0 0
        %1965 = vmatprep.subr.bf16.mxu0 0
        %1966 = vmatpush1.bf16.msra.mxu0 0
        %1967 = vmatprep.subr.bf16.mxu0 0
        %1968 = vmatpush1.bf16.msra.mxu0 0
        %1969 = vmatprep.subr.bf16.mxu0 0
        %1970 = vmatpush1.bf16.msra.mxu0 0
        %1971 = vmatprep.subr.bf16.mxu0 0
        %1972 = vmatpush1.bf16.msra.mxu0 0
        %1973 = vmatprep.subr.bf16.mxu0 0
        %1974 = vmatpush1.bf16.msra.mxu0 0
        %1975 = vmatprep.subr.bf16.mxu0 0
        %1976 = vmatpush1.bf16.msra.mxu0 0
        %1977 = vmatprep.subr.bf16.mxu0 0
        %1978 = vmatpush1.bf16.msra.mxu0 0
        %1979 = vmatprep.subr.bf16.mxu0 0
        %1980 = vmatpush1.bf16.msra.mxu0 0
        %1981 = vmatprep.subr.bf16.mxu0 0
        %1982 = vmatpush1.bf16.msra.mxu0 0
        %1983 = vmatprep.subr.bf16.mxu0 0
        %1984 = vmatpush1.bf16.msra.mxu0 0
        %1985 = vmatprep.mubr.bf16.mxu0 0
        %1986 = vmatmul.mubr.bf16.gmra.mrb[0].mxu0 %v1435
        %v1987 = vpop.f32.mrb[0].mxu0
        %v1988 = vadd.f32 %v1876, %v1987
        %v1989 = vpop.f32.mrb[0].mxu0
        %v1990 = vpop.f32.mrb[0].mxu0
        %v1991 = vpop.f32.mrb[0].mxu0
        %1992 = vdwg.mxu0
        %v1997 = vunpack.c.l.b16 %v1380
        %v1998 = vunpack.c.l.b16 %v1381
        %v1999 = vunpack.c.l.b16 %v1382
        %v2000 = vunpack.c.l.b16 %v1383
        %v2001 = vpack.c.b16 %v1998, %v1997
        %v2002 = vpack.c.b16 %v2000, %v1999
        %2005 = vmatprep.subr.bf16.mxu0 0
        %2006 = vmatpush1.bf16.msra.mxu0 %v2001
        %2007 = vmatprep.subr.bf16.mxu0 0
        %2008 = vmatpush1.bf16.msra.mxu0 %v2002
        %2009 = vmatprep.subr.bf16.mxu0 0
        %2010 = vmatpush1.bf16.msra.mxu0 0
        %2011 = vmatprep.subr.bf16.mxu0 0
        %2012 = vmatpush1.bf16.msra.mxu0 0
        %2013 = vmatprep.subr.bf16.mxu0 0
        %2014 = vmatpush1.bf16.msra.mxu0 0
        %2015 = vmatprep.subr.bf16.mxu0 0
        %2016 = vmatpush1.bf16.msra.mxu0 0
        %2017 = vmatprep.subr.bf16.mxu0 0
        %2018 = vmatpush1.bf16.msra.mxu0 0
        %2019 = vmatprep.subr.bf16.mxu0 0
        %2020 = vmatpush1.bf16.msra.mxu0 0
        %2021 = vmatprep.subr.bf16.mxu0 0
        %2022 = vmatpush1.bf16.msra.mxu0 0
        %2023 = vmatprep.subr.bf16.mxu0 0
        %2024 = vmatpush1.bf16.msra.mxu0 0
        %2025 = vmatprep.subr.bf16.mxu0 0
        %2026 = vmatpush1.bf16.msra.mxu0 0
        %2027 = vmatprep.subr.bf16.mxu0 0
        %2028 = vmatpush1.bf16.msra.mxu0 0
        %2029 = vmatprep.subr.bf16.mxu0 0
        %2030 = vmatpush1.bf16.msra.mxu0 0
        %2031 = vmatprep.subr.bf16.mxu0 0
        %2032 = vmatpush1.bf16.msra.mxu0 0
        %2033 = vmatprep.subr.bf16.mxu0 0
        %2034 = vmatpush1.bf16.msra.mxu0 0
        %2035 = vmatprep.subr.bf16.mxu0 0
        %2036 = vmatpush1.bf16.msra.mxu0 0
        %2037 = vmatprep.mubr.bf16.mxu0 0
        %2038 = vmatmul.mubr.bf16.gmra.mrb[0].mxu0 %v1435
        %v2039 = vpop.f32.mrb[0].mxu0
        %v2040 = vadd.f32 %v1880, %v2039
        %v2041 = vpop.f32.mrb[0].mxu0
        %v2042 = vpop.f32.mrb[0].mxu0
        %v2043 = vpop.f32.mrb[0].mxu0
        %2044 = vdwg.mxu0
        %v2049 = vunpack.c.l.b16 %v1384
        %v2050 = vunpack.c.l.b16 %v1385
        %v2051 = vunpack.c.l.b16 %v1386
        %v2052 = vunpack.c.l.b16 %v1387
        %v2053 = vpack.c.b16 %v2050, %v2049
        %v2054 = vpack.c.b16 %v2052, %v2051
        %2057 = vmatprep.subr.bf16.mxu0 0
        %2058 = vmatpush1.bf16.msra.mxu0 %v2053
        %2059 = vmatprep.subr.bf16.mxu0 0
        %2060 = vmatpush1.bf16.msra.mxu0 %v2054
        %2061 = vmatprep.subr.bf16.mxu0 0
        %2062 = vmatpush1.bf16.msra.mxu0 0
        %2063 = vmatprep.subr.bf16.mxu0 0
        %2064 = vmatpush1.bf16.msra.mxu0 0
        %2065 = vmatprep.subr.bf16.mxu0 0
        %2066 = vmatpush1.bf16.msra.mxu0 0
        %2067 = vmatprep.subr.bf16.mxu0 0
        %2068 = vmatpush1.bf16.msra.mxu0 0
        %2069 = vmatprep.subr.bf16.mxu0 0
        %2070 = vmatpush1.bf16.msra.mxu0 0
        %2071 = vmatprep.subr.bf16.mxu0 0
        %2072 = vmatpush1.bf16.msra.mxu0 0
        %2073 = vmatprep.subr.bf16.mxu0 0
        %2074 = vmatpush1.bf16.msra.mxu0 0
        %2075 = vmatprep.subr.bf16.mxu0 0
        %2076 = vmatpush1.bf16.msra.mxu0 0
        %2077 = vmatprep.subr.bf16.mxu0 0
        %2078 = vmatpush1.bf16.msra.mxu0 0
        %2079 = vmatprep.subr.bf16.mxu0 0
        %2080 = vmatpush1.bf16.msra.mxu0 0
        %2081 = vmatprep.subr.bf16.mxu0 0
        %2082 = vmatpush1.bf16.msra.mxu0 0
        %2083 = vmatprep.subr.bf16.mxu0 0
        %2084 = vmatpush1.bf16.msra.mxu0 0
        %2085 = vmatprep.subr.bf16.mxu0 0
        %2086 = vmatpush1.bf16.msra.mxu0 0
        %2087 = vmatprep.subr.bf16.mxu0 0
        %2088 = vmatpush1.bf16.msra.mxu0 0
        %2089 = vmatprep.mubr.bf16.mxu0 0
        %2090 = vmatmul.mubr.bf16.gmra.mrb[0].mxu0 %v1435
        %v2091 = vpop.f32.mrb[0].mxu0
        %v2092 = vadd.f32 %v1884, %v2091
        %v2093 = vpop.f32.mrb[0].mxu0
        %v2094 = vpop.f32.mrb[0].mxu0
        %v2095 = vpop.f32.mrb[0].mxu0
        %2096 = vdwg.mxu0
        %v2097 = vpack.c.bf16 %v1472, %v1472
        %v2098 = vpack.c.bf16 %v1524, %v1524
        %v2099 = vpack.c.bf16 %v1576, %v1576
        %v2100 = vpack.c.bf16 %v1628, %v1628
        %v2101 = vpack.c.bf16 %v1704, %v1704
        %v2102 = vpack.c.bf16 %v1756, %v1756
        %v2103 = vpack.c.bf16 %v1808, %v1808
        %v2104 = vpack.c.bf16 %v1860, %v1860
        %vm2105 = vcmask 64512
        %v2107 = vsel %vm2105, %v2097, 0
        %v2110 = vsel %vm2105, %v2101, 0
        %2112 = vmatprep.subr.bf16.mxu0 0
        %2113 = vmatpush1.bf16.xpose.msra.mxu0 %v2110
        %2114 = vmatprep.subr.bf16.mxu0 0
        %2115 = vmatpush1.bf16.xpose.msra.mxu0 0
        %2116 = vmatprep.subr.bf16.mxu0 0
        %2117 = vmatpush1.bf16.xpose.msra.mxu0 0
        %2118 = vmatprep.subr.bf16.mxu0 0
        %2119 = vmatpush1.bf16.xpose.msra.mxu0 0
        %2120 = vmatprep.subr.bf16.mxu0 0
        %2121 = vmatpush1.bf16.xpose.msra.mxu0 0
        %2122 = vmatprep.subr.bf16.mxu0 0
        %2123 = vmatpush1.bf16.xpose.msra.mxu0 0
        %2124 = vmatprep.subr.bf16.mxu0 0
        %2125 = vmatpush1.bf16.xpose.msra.mxu0 0
        %2126 = vmatprep.subr.bf16.mxu0 0
        %2127 = vmatpush1.bf16.xpose.msra.mxu0 0
        %2128 = vmatprep.subr.bf16.mxu0 0
        %2129 = vmatpush1.bf16.xpose.msra.mxu0 0
        %2130 = vmatprep.subr.bf16.mxu0 0
        %2131 = vmatpush1.bf16.xpose.msra.mxu0 0
        %2132 = vmatprep.subr.bf16.mxu0 0
        %2133 = vmatpush1.bf16.xpose.msra.mxu0 0
        %2134 = vmatprep.subr.bf16.mxu0 0
        %2135 = vmatpush1.bf16.xpose.msra.mxu0 0
        %2136 = vmatprep.subr.bf16.mxu0 0
        %2137 = vmatpush1.bf16.xpose.msra.mxu0 0
        %2138 = vmatprep.subr.bf16.mxu0 0
        %2139 = vmatpush1.bf16.xpose.msra.mxu0 0
        %2140 = vmatprep.subr.bf16.mxu0 0
        %2141 = vmatpush1.bf16.xpose.msra.mxu0 0
        %2142 = vmatprep.subr.bf16.mxu0 0
        %2143 = vmatpush1.bf16.xpose.msra.mxu0 0
        %2144 = vmatprep.mubr.bf16.mxu0 0
        %2145 = vmatmul.mubr.bf16.gmra.mrb[0].mxu0 %v2107
        %v2146 = vpop.f32.mrb[0].mxu0
        %v2147 = vadd.f32 0.0, %v2146
        %v2148 = vpop.f32.mrb[0].mxu0
        %v2149 = vpop.f32.mrb[0].mxu0
        %v2150 = vpop.f32.mrb[0].mxu0
        %2151 = vdwg.mxu0
        %v2153 = vsel %vm2105, %v2098, 0
        %v2156 = vsel %vm2105, %v2102, 0
        %2158 = vmatprep.subr.bf16.mxu0 0
        %2159 = vmatpush1.bf16.xpose.msra.mxu0 %v2156
        %2160 = vmatprep.subr.bf16.mxu0 0
        %2161 = vmatpush1.bf16.xpose.msra.mxu0 0
        %2162 = vmatprep.subr.bf16.mxu0 0
        %2163 = vmatpush1.bf16.xpose.msra.mxu0 0
        %2164 = vmatprep.subr.bf16.mxu0 0
        %2165 = vmatpush1.bf16.xpose.msra.mxu0 0
        %2166 = vmatprep.subr.bf16.mxu0 0
        %2167 = vmatpush1.bf16.xpose.msra.mxu0 0
        %2168 = vmatprep.subr.bf16.mxu0 0
        %2169 = vmatpush1.bf16.xpose.msra.mxu0 0
        %2170 = vmatprep.subr.bf16.mxu0 0
        %2171 = vmatpush1.bf16.xpose.msra.mxu0 0
        %2172 = vmatprep.subr.bf16.mxu0 0
        %2173 = vmatpush1.bf16.xpose.msra.mxu0 0
        %2174 = vmatprep.subr.bf16.mxu0 0
        %2175 = vmatpush1.bf16.xpose.msra.mxu0 0
        %2176 = vmatprep.subr.bf16.mxu0 0
        %2177 = vmatpush1.bf16.xpose.msra.mxu0 0
        %2178 = vmatprep.subr.bf16.mxu0 0
        %2179 = vmatpush1.bf16.xpose.msra.mxu0 0
        %2180 = vmatprep.subr.bf16.mxu0 0
        %2181 = vmatpush1.bf16.xpose.msra.mxu0 0
        %2182 = vmatprep.subr.bf16.mxu0 0
        %2183 = vmatpush1.bf16.xpose.msra.mxu0 0
        %2184 = vmatprep.subr.bf16.mxu0 0
        %2185 = vmatpush1.bf16.xpose.msra.mxu0 0
        %2186 = vmatprep.subr.bf16.mxu0 0
        %2187 = vmatpush1.bf16.xpose.msra.mxu0 0
        %2188 = vmatprep.subr.bf16.mxu0 0
        %2189 = vmatpush1.bf16.xpose.msra.mxu0 0
        %2190 = vmatprep.mubr.bf16.mxu0 0
        %2191 = vmatmul.mubr.bf16.gmra.mrb[0].mxu0 %v2153
        %v2192 = vpop.f32.mrb[0].mxu0
        %v2193 = vadd.f32 0.0, %v2192
        %v2194 = vpop.f32.mrb[0].mxu0
        %v2195 = vpop.f32.mrb[0].mxu0
        %v2196 = vpop.f32.mrb[0].mxu0
        %2197 = vdwg.mxu0
        %v2199 = vsel %vm2105, %v2099, 0
        %v2202 = vsel %vm2105, %v2103, 0
        %2204 = vmatprep.subr.bf16.mxu0 0
        %2205 = vmatpush1.bf16.xpose.msra.mxu0 %v2202
        %2206 = vmatprep.subr.bf16.mxu0 0
        %2207 = vmatpush1.bf16.xpose.msra.mxu0 0
        %2208 = vmatprep.subr.bf16.mxu0 0
        %2209 = vmatpush1.bf16.xpose.msra.mxu0 0
        %2210 = vmatprep.subr.bf16.mxu0 0
        %2211 = vmatpush1.bf16.xpose.msra.mxu0 0
        %2212 = vmatprep.subr.bf16.mxu0 0
        %2213 = vmatpush1.bf16.xpose.msra.mxu0 0
        %2214 = vmatprep.subr.bf16.mxu0 0
        %2215 = vmatpush1.bf16.xpose.msra.mxu0 0
        %2216 = vmatprep.subr.bf16.mxu0 0
        %2217 = vmatpush1.bf16.xpose.msra.mxu0 0
        %2218 = vmatprep.subr.bf16.mxu0 0
        %2219 = vmatpush1.bf16.xpose.msra.mxu0 0
        %2220 = vmatprep.subr.bf16.mxu0 0
        %2221 = vmatpush1.bf16.xpose.msra.mxu0 0
        %2222 = vmatprep.subr.bf16.mxu0 0
        %2223 = vmatpush1.bf16.xpose.msra.mxu0 0
        %2224 = vmatprep.subr.bf16.mxu0 0
        %2225 = vmatpush1.bf16.xpose.msra.mxu0 0
        %2226 = vmatprep.subr.bf16.mxu0 0
        %2227 = vmatpush1.bf16.xpose.msra.mxu0 0
        %2228 = vmatprep.subr.bf16.mxu0 0
        %2229 = vmatpush1.bf16.xpose.msra.mxu0 0
        %2230 = vmatprep.subr.bf16.mxu0 0
        %2231 = vmatpush1.bf16.xpose.msra.mxu0 0
        %2232 = vmatprep.subr.bf16.mxu0 0
        %2233 = vmatpush1.bf16.xpose.msra.mxu0 0
        %2234 = vmatprep.subr.bf16.mxu0 0
        %2235 = vmatpush1.bf16.xpose.msra.mxu0 0
        %2236 = vmatprep.mubr.bf16.mxu0 0
        %2237 = vmatmul.mubr.bf16.gmra.mrb[0].mxu0 %v2199
        %v2238 = vpop.f32.mrb[0].mxu0
        %v2239 = vadd.f32 0.0, %v2238
        %v2240 = vpop.f32.mrb[0].mxu0
        %v2241 = vpop.f32.mrb[0].mxu0
        %v2242 = vpop.f32.mrb[0].mxu0
        %2243 = vdwg.mxu0
        %v2245 = vsel %vm2105, %v2100, 0
        %v2248 = vsel %vm2105, %v2104, 0
        %2250 = vmatprep.subr.bf16.mxu0 0
        %2251 = vmatpush1.bf16.xpose.msra.mxu0 %v2248
        %2252 = vmatprep.subr.bf16.mxu0 0
        %2253 = vmatpush1.bf16.xpose.msra.mxu0 0
        %2254 = vmatprep.subr.bf16.mxu0 0
        %2255 = vmatpush1.bf16.xpose.msra.mxu0 0
        %2256 = vmatprep.subr.bf16.mxu0 0
        %2257 = vmatpush1.bf16.xpose.msra.mxu0 0
        %2258 = vmatprep.subr.bf16.mxu0 0
        %2259 = vmatpush1.bf16.xpose.msra.mxu0 0
        %2260 = vmatprep.subr.bf16.mxu0 0
        %2261 = vmatpush1.bf16.xpose.msra.mxu0 0
        %2262 = vmatprep.subr.bf16.mxu0 0
        %2263 = vmatpush1.bf16.xpose.msra.mxu0 0
        %2264 = vmatprep.subr.bf16.mxu0 0
        %2265 = vmatpush1.bf16.xpose.msra.mxu0 0
        %2266 = vmatprep.subr.bf16.mxu0 0
        %2267 = vmatpush1.bf16.xpose.msra.mxu0 0
        %2268 = vmatprep.subr.bf16.mxu0 0
        %2269 = vmatpush1.bf16.xpose.msra.mxu0 0
        %2270 = vmatprep.subr.bf16.mxu0 0
        %2271 = vmatpush1.bf16.xpose.msra.mxu0 0
        %2272 = vmatprep.subr.bf16.mxu0 0
        %2273 = vmatpush1.bf16.xpose.msra.mxu0 0
        %2274 = vmatprep.subr.bf16.mxu0 0
        %2275 = vmatpush1.bf16.xpose.msra.mxu0 0
        %2276 = vmatprep.subr.bf16.mxu0 0
        %2277 = vmatpush1.bf16.xpose.msra.mxu0 0
        %2278 = vmatprep.subr.bf16.mxu0 0
        %2279 = vmatpush1.bf16.xpose.msra.mxu0 0
        %2280 = vmatprep.subr.bf16.mxu0 0
        %2281 = vmatpush1.bf16.xpose.msra.mxu0 0
        %2282 = vmatprep.mubr.bf16.mxu0 0
        %2283 = vmatmul.mubr.bf16.gmra.mrb[0].mxu0 %v2245
        %v2284 = vpop.f32.mrb[0].mxu0
        %v2285 = vadd.f32 0.0, %v2284
        %v2286 = vpop.f32.mrb[0].mxu0
        %v2287 = vpop.f32.mrb[0].mxu0
        %v2288 = vpop.f32.mrb[0].mxu0
        %2289 = vdwg.mxu0
        %v2290 = vsel %vm2105, %v2147, -inf
        %2291 = vmax.xlane.f32.xlu0 %v2290
        %v2292 = vpop.xlane.xlu0 %2291
        %v2293 = vsel %vm2105, %v2193, -inf
        %2294 = vmax.xlane.f32.xlu0 %v2293
        %v2295 = vpop.xlane.xlu0 %2294
        %v2296 = vsel %vm2105, %v2239, -inf
        %2297 = vmax.xlane.f32.xlu0 %v2296
        %v2298 = vpop.xlane.xlu0 %2297
        %v2299 = vsel %vm2105, %v2285, -inf
        %2300 = vmax.xlane.f32.xlu0 %v2299
        %v2301 = vpop.xlane.xlu0 %2300
        %v2302 = vsub.f32 %v2147, %v2292
        %v2303 = vsub.f32 %v2193, %v2295
        %v2304 = vsub.f32 %v2239, %v2298
        %v2305 = vsub.f32 %v2285, %v2301
        %v2306 = vmul.f32 %v2302, 1.442695
        %v2307 = vpow.pop %v2306
        %v2308 = vmul.f32 %v2303, 1.442695
        %v2309 = vpow.pop %v2308
        %v2310 = vmul.f32 %v2304, 1.442695
        %v2311 = vpow.pop %v2310
        %v2312 = vmul.f32 %v2305, 1.442695
        %v2313 = vpow.pop %v2312
        %v2314 = vsel %vm2105, %v2307, 0.0
        %2315 = vadd.xlane.f32.xlu0 %v2314
        %v2316 = vpop.xlane.xlu0 %2315
        %v2317 = vsel %vm2105, %v2309, 0.0
        %2318 = vadd.xlane.f32.xlu0 %v2317
        %v2319 = vpop.xlane.xlu0 %2318
        %v2320 = vsel %vm2105, %v2311, 0.0
        %2321 = vadd.xlane.f32.xlu0 %v2320
        %v2322 = vpop.xlane.xlu0 %2321
        %v2323 = vsel %vm2105, %v2313, 0.0
        %2324 = vadd.xlane.f32.xlu0 %v2323
        %v2325 = vpop.xlane.xlu0 %2324
        %v2326 = vrcp.pop %v2316
        %v2327 = vrcp.pop %v2319
        %v2328 = vrcp.pop %v2322
        %v2329 = vrcp.pop %v2325
        %v2330 = vmul.f32 %v2307, %v2326
        %v2331 = vmul.f32 %v2309, %v2327
        %v2332 = vmul.f32 %v2311, %v2328
        %v2333 = vmul.f32 %v2313, %v2329
        %v2334 = vpack.c.bf16 %v2330, %v2330
        %v2335 = vpack.c.bf16 %v2331, %v2331
        %v2336 = vpack.c.bf16 %v2332, %v2332
        %v2337 = vpack.c.bf16 %v2333, %v2333
        %v2338 = vpack.c.bf16 %v1936, %v1936
        %v2339 = vpack.c.bf16 %v1988, %v1988
        %v2340 = vpack.c.bf16 %v2040, %v2040
        %v2341 = vpack.c.bf16 %v2092, %v2092
        %v2343 = vsel %vm2105, %v2334, 0
        %vm2345 = vcmask 1043456
        %v2347 = vsel %vm2345, %v2338, 0
        %2349 = vmatprep.subr.bf16.mxu0 0
        %2350 = vmatpush1.bf16.msra.mxu0 %v2347
        %2351 = vmatprep.subr.bf16.mxu0 0
        %2352 = vmatpush1.bf16.msra.mxu0 0
        %2353 = vmatprep.subr.bf16.mxu0 0
        %2354 = vmatpush1.bf16.msra.mxu0 0
        %2355 = vmatprep.subr.bf16.mxu0 0
        %2356 = vmatpush1.bf16.msra.mxu0 0
        %2357 = vmatprep.subr.bf16.mxu0 0
        %2358 = vmatpush1.bf16.msra.mxu0 0
        %2359 = vmatprep.subr.bf16.mxu0 0
        %2360 = vmatpush1.bf16.msra.mxu0 0
        %2361 = vmatprep.subr.bf16.mxu0 0
        %2362 = vmatpush1.bf16.msra.mxu0 0
        %2363 = vmatprep.subr.bf16.mxu0 0
        %2364 = vmatpush1.bf16.msra.mxu0 0
        %2365 = vmatprep.subr.bf16.mxu0 0
        %2366 = vmatpush1.bf16.msra.mxu0 0
        %2367 = vmatprep.subr.bf16.mxu0 0
        %2368 = vmatpush1.bf16.msra.mxu0 0
        %2369 = vmatprep.subr.bf16.mxu0 0
        %2370 = vmatpush1.bf16.msra.mxu0 0
        %2371 = vmatprep.subr.bf16.mxu0 0
        %2372 = vmatpush1.bf16.msra.mxu0 0
        %2373 = vmatprep.subr.bf16.mxu0 0
        %2374 = vmatpush1.bf16.msra.mxu0 0
        %2375 = vmatprep.subr.bf16.mxu0 0
        %2376 = vmatpush1.bf16.msra.mxu0 0
        %2377 = vmatprep.subr.bf16.mxu0 0
        %2378 = vmatpush1.bf16.msra.mxu0 0
        %2379 = vmatprep.subr.bf16.mxu0 0
        %2380 = vmatpush1.bf16.msra.mxu0 0
        %2381 = vmatprep.mubr.bf16.mxu0 0
        %2382 = vmatmul.mubr.bf16.gmra.mrb[0].mxu0 %v2343
        %v2383 = vpop.f32.mrb[0].mxu0
        %v2384 = vadd.f32 0.0, %v2383
        %v2385 = vpop.f32.mrb[0].mxu0
        %v2386 = vpop.f32.mrb[0].mxu0
        %v2387 = vpop.f32.mrb[0].mxu0
        %2388 = vdwg.mxu0
        %v2390 = vsel %vm2105, %v2335, 0
        %v2393 = vsel %vm2345, %v2339, 0
        %2395 = vmatprep.subr.bf16.mxu0 0
        %2396 = vmatpush1.bf16.msra.mxu0 %v2393
        %2397 = vmatprep.subr.bf16.mxu0 0
        %2398 = vmatpush1.bf16.msra.mxu0 0
        %2399 = vmatprep.subr.bf16.mxu0 0
        %2400 = vmatpush1.bf16.msra.mxu0 0
        %2401 = vmatprep.subr.bf16.mxu0 0
        %2402 = vmatpush1.bf16.msra.mxu0 0
        %2403 = vmatprep.subr.bf16.mxu0 0
        %2404 = vmatpush1.bf16.msra.mxu0 0
        %2405 = vmatprep.subr.bf16.mxu0 0
        %2406 = vmatpush1.bf16.msra.mxu0 0
        %2407 = vmatprep.subr.bf16.mxu0 0
        %2408 = vmatpush1.bf16.msra.mxu0 0
        %2409 = vmatprep.subr.bf16.mxu0 0
        %2410 = vmatpush1.bf16.msra.mxu0 0
        %2411 = vmatprep.subr.bf16.mxu0 0
        %2412 = vmatpush1.bf16.msra.mxu0 0
        %2413 = vmatprep.subr.bf16.mxu0 0
        %2414 = vmatpush1.bf16.msra.mxu0 0
        %2415 = vmatprep.subr.bf16.mxu0 0
        %2416 = vmatpush1.bf16.msra.mxu0 0
        %2417 = vmatprep.subr.bf16.mxu0 0
        %2418 = vmatpush1.bf16.msra.mxu0 0
        %2419 = vmatprep.subr.bf16.mxu0 0
        %2420 = vmatpush1.bf16.msra.mxu0 0
        %2421 = vmatprep.subr.bf16.mxu0 0
        %2422 = vmatpush1.bf16.msra.mxu0 0
        %2423 = vmatprep.subr.bf16.mxu0 0
        %2424 = vmatpush1.bf16.msra.mxu0 0
        %2425 = vmatprep.subr.bf16.mxu0 0
        %2426 = vmatpush1.bf16.msra.mxu0 0
        %2427 = vmatprep.mubr.bf16.mxu0 0
        %2428 = vmatmul.mubr.bf16.gmra.mrb[0].mxu0 %v2390
        %v2429 = vpop.f32.mrb[0].mxu0
        %v2430 = vadd.f32 0.0, %v2429
        %v2431 = vpop.f32.mrb[0].mxu0
        %v2432 = vpop.f32.mrb[0].mxu0
        %v2433 = vpop.f32.mrb[0].mxu0
        %2434 = vdwg.mxu0
        %v2436 = vsel %vm2105, %v2336, 0
        %v2439 = vsel %vm2345, %v2340, 0
        %2441 = vmatprep.subr.bf16.mxu0 0
        %2442 = vmatpush1.bf16.msra.mxu0 %v2439
        %2443 = vmatprep.subr.bf16.mxu0 0
        %2444 = vmatpush1.bf16.msra.mxu0 0
        %2445 = vmatprep.subr.bf16.mxu0 0
        %2446 = vmatpush1.bf16.msra.mxu0 0
        %2447 = vmatprep.subr.bf16.mxu0 0
        %2448 = vmatpush1.bf16.msra.mxu0 0
        %2449 = vmatprep.subr.bf16.mxu0 0
        %2450 = vmatpush1.bf16.msra.mxu0 0
        %2451 = vmatprep.subr.bf16.mxu0 0
        %2452 = vmatpush1.bf16.msra.mxu0 0
        %2453 = vmatprep.subr.bf16.mxu0 0
        %2454 = vmatpush1.bf16.msra.mxu0 0
        %2455 = vmatprep.subr.bf16.mxu0 0
        %2456 = vmatpush1.bf16.msra.mxu0 0
        %2457 = vmatprep.subr.bf16.mxu0 0
        %2458 = vmatpush1.bf16.msra.mxu0 0
        %2459 = vmatprep.subr.bf16.mxu0 0
        %2460 = vmatpush1.bf16.msra.mxu0 0
        %2461 = vmatprep.subr.bf16.mxu0 0
        %2462 = vmatpush1.bf16.msra.mxu0 0
        %2463 = vmatprep.subr.bf16.mxu0 0
        %2464 = vmatpush1.bf16.msra.mxu0 0
        %2465 = vmatprep.subr.bf16.mxu0 0
        %2466 = vmatpush1.bf16.msra.mxu0 0
        %2467 = vmatprep.subr.bf16.mxu0 0
        %2468 = vmatpush1.bf16.msra.mxu0 0
        %2469 = vmatprep.subr.bf16.mxu0 0
        %2470 = vmatpush1.bf16.msra.mxu0 0
        %2471 = vmatprep.subr.bf16.mxu0 0
        %2472 = vmatpush1.bf16.msra.mxu0 0
        %2473 = vmatprep.mubr.bf16.mxu0 0
        %2474 = vmatmul.mubr.bf16.gmra.mrb[0].mxu0 %v2436
        %v2475 = vpop.f32.mrb[0].mxu0
        %v2476 = vadd.f32 0.0, %v2475
        %v2477 = vpop.f32.mrb[0].mxu0
        %v2478 = vpop.f32.mrb[0].mxu0
        %v2479 = vpop.f32.mrb[0].mxu0
        %2480 = vdwg.mxu0
        %v2482 = vsel %vm2105, %v2337, 0
        %v2485 = vsel %vm2345, %v2341, 0
        %2487 = vmatprep.subr.bf16.mxu0 0
        %2488 = vmatpush1.bf16.msra.mxu0 %v2485
        %2489 = vmatprep.subr.bf16.mxu0 0
        %2490 = vmatpush1.bf16.msra.mxu0 0
        %2491 = vmatprep.subr.bf16.mxu0 0
        %2492 = vmatpush1.bf16.msra.mxu0 0
        %2493 = vmatprep.subr.bf16.mxu0 0
        %2494 = vmatpush1.bf16.msra.mxu0 0
        %2495 = vmatprep.subr.bf16.mxu0 0
        %2496 = vmatpush1.bf16.msra.mxu0 0
        %2497 = vmatprep.subr.bf16.mxu0 0
        %2498 = vmatpush1.bf16.msra.mxu0 0
        %2499 = vmatprep.subr.bf16.mxu0 0
        %2500 = vmatpush1.bf16.msra.mxu0 0
        %2501 = vmatprep.subr.bf16.mxu0 0
        %2502 = vmatpush1.bf16.msra.mxu0 0
        %2503 = vmatprep.subr.bf16.mxu0 0
        %2504 = vmatpush1.bf16.msra.mxu0 0
        %2505 = vmatprep.subr.bf16.mxu0 0
        %2506 = vmatpush1.bf16.msra.mxu0 0
        %2507 = vmatprep.subr.bf16.mxu0 0
        %2508 = vmatpush1.bf16.msra.mxu0 0
        %2509 = vmatprep.subr.bf16.mxu0 0
        %2510 = vmatpush1.bf16.msra.mxu0 0
        %2511 = vmatprep.subr.bf16.mxu0 0
        %2512 = vmatpush1.bf16.msra.mxu0 0
        %2513 = vmatprep.subr.bf16.mxu0 0
        %2514 = vmatpush1.bf16.msra.mxu0 0
        %2515 = vmatprep.subr.bf16.mxu0 0
        %2516 = vmatpush1.bf16.msra.mxu0 0
        %2517 = vmatprep.subr.bf16.mxu0 0
        %2518 = vmatpush1.bf16.msra.mxu0 0
        %2519 = vmatprep.mubr.bf16.mxu0 0
        %2520 = vmatmul.mubr.bf16.gmra.mrb[0].mxu0 %v2482
        %v2521 = vpop.f32.mrb[0].mxu0
        %v2522 = vadd.f32 0.0, %v2521
        %v2523 = vpop.f32.mrb[0].mxu0
        %v2524 = vpop.f32.mrb[0].mxu0
        %v2525 = vpop.f32.mrb[0].mxu0
        %2526 = vdwg.mxu0
        %v2527 = vpack.c.bf16 %v2384, %v2384
        %v2528 = vpack.c.bf16 %v2430, %v2430
        %v2529 = vpack.c.bf16 %v2476, %v2476
        %v2530 = vpack.c.bf16 %v2522, %v2522
        %v2532 = vsel %vm2105, %v2527, 0
        %v2535 = vsel %vm2345, %v1392, 0
        %2537 = vmatprep.subr.bf16.mxu0 0
        %2538 = vmatpush1.bf16.msra.mxu0 %v2535
        %2539 = vmatprep.subr.bf16.mxu0 0
        %2540 = vmatpush1.bf16.msra.mxu0 0
        %2541 = vmatprep.subr.bf16.mxu0 0
        %2542 = vmatpush1.bf16.msra.mxu0 0
        %2543 = vmatprep.subr.bf16.mxu0 0
        %2544 = vmatpush1.bf16.msra.mxu0 0
        %2545 = vmatprep.subr.bf16.mxu0 0
        %2546 = vmatpush1.bf16.msra.mxu0 0
        %2547 = vmatprep.subr.bf16.mxu0 0
        %2548 = vmatpush1.bf16.msra.mxu0 0
        %2549 = vmatprep.subr.bf16.mxu0 0
        %2550 = vmatpush1.bf16.msra.mxu0 0
        %2551 = vmatprep.subr.bf16.mxu0 0
        %2552 = vmatpush1.bf16.msra.mxu0 0
        %2553 = vmatprep.subr.bf16.mxu0 0
        %2554 = vmatpush1.bf16.msra.mxu0 0
        %2555 = vmatprep.subr.bf16.mxu0 0
        %2556 = vmatpush1.bf16.msra.mxu0 0
        %2557 = vmatprep.subr.bf16.mxu0 0
        %2558 = vmatpush1.bf16.msra.mxu0 0
        %2559 = vmatprep.subr.bf16.mxu0 0
        %2560 = vmatpush1.bf16.msra.mxu0 0
        %2561 = vmatprep.subr.bf16.mxu0 0
        %2562 = vmatpush1.bf16.msra.mxu0 0
        %2563 = vmatprep.subr.bf16.mxu0 0
        %2564 = vmatpush1.bf16.msra.mxu0 0
        %2565 = vmatprep.subr.bf16.mxu0 0
        %2566 = vmatpush1.bf16.msra.mxu0 0
        %2567 = vmatprep.subr.bf16.mxu0 0
        %2568 = vmatpush1.bf16.msra.mxu0 0
        %2569 = vmatprep.mubr.bf16.mxu0 0
        %2570 = vmatmul.mubr.bf16.gmra.mrb[0].mxu0 %v2532
        %v2571 = vpop.f32.mrb[0].mxu0
        %v2572 = vadd.f32 0.0, %v2571
        %v2573 = vpop.f32.mrb[0].mxu0
        %v2574 = vpop.f32.mrb[0].mxu0
        %v2575 = vpop.f32.mrb[0].mxu0
        %2576 = vdwg.mxu0
        %v2578 = vsel %vm2105, %v2528, 0
        %v2581 = vsel %vm2345, %v1393, 0
        %2583 = vmatprep.subr.bf16.mxu0 0
        %2584 = vmatpush1.bf16.msra.mxu0 %v2581
        %2585 = vmatprep.subr.bf16.mxu0 0
        %2586 = vmatpush1.bf16.msra.mxu0 0
        %2587 = vmatprep.subr.bf16.mxu0 0
        %2588 = vmatpush1.bf16.msra.mxu0 0
        %2589 = vmatprep.subr.bf16.mxu0 0
        %2590 = vmatpush1.bf16.msra.mxu0 0
        %2591 = vmatprep.subr.bf16.mxu0 0
        %2592 = vmatpush1.bf16.msra.mxu0 0
        %2593 = vmatprep.subr.bf16.mxu0 0
        %2594 = vmatpush1.bf16.msra.mxu0 0
        %2595 = vmatprep.subr.bf16.mxu0 0
        %2596 = vmatpush1.bf16.msra.mxu0 0
        %2597 = vmatprep.subr.bf16.mxu0 0
        %2598 = vmatpush1.bf16.msra.mxu0 0
        %2599 = vmatprep.subr.bf16.mxu0 0
        %2600 = vmatpush1.bf16.msra.mxu0 0
        %2601 = vmatprep.subr.bf16.mxu0 0
        %2602 = vmatpush1.bf16.msra.mxu0 0
        %2603 = vmatprep.subr.bf16.mxu0 0
        %2604 = vmatpush1.bf16.msra.mxu0 0
        %2605 = vmatprep.subr.bf16.mxu0 0
        %2606 = vmatpush1.bf16.msra.mxu0 0
        %2607 = vmatprep.subr.bf16.mxu0 0
        %2608 = vmatpush1.bf16.msra.mxu0 0
        %2609 = vmatprep.subr.bf16.mxu0 0
        %2610 = vmatpush1.bf16.msra.mxu0 0
        %2611 = vmatprep.subr.bf16.mxu0 0
        %2612 = vmatpush1.bf16.msra.mxu0 0
        %2613 = vmatprep.subr.bf16.mxu0 0
        %2614 = vmatpush1.bf16.msra.mxu0 0
        %2615 = vmatprep.mubr.bf16.mxu0 0
        %2616 = vmatmul.mubr.bf16.gmra.mrb[0].mxu0 %v2578
        %v2617 = vpop.f32.mrb[0].mxu0
        %v2618 = vadd.f32 0.0, %v2617
        %v2619 = vpop.f32.mrb[0].mxu0
        %v2620 = vpop.f32.mrb[0].mxu0
        %v2621 = vpop.f32.mrb[0].mxu0
        %2622 = vdwg.mxu0
        %v2624 = vsel %vm2105, %v2529, 0
        %v2627 = vsel %vm2345, %v1394, 0
        %2629 = vmatprep.subr.bf16.mxu0 0
        %2630 = vmatpush1.bf16.msra.mxu0 %v2627
        %2631 = vmatprep.subr.bf16.mxu0 0
        %2632 = vmatpush1.bf16.msra.mxu0 0
        %2633 = vmatprep.subr.bf16.mxu0 0
        %2634 = vmatpush1.bf16.msra.mxu0 0
        %2635 = vmatprep.subr.bf16.mxu0 0
        %2636 = vmatpush1.bf16.msra.mxu0 0
        %2637 = vmatprep.subr.bf16.mxu0 0
        %2638 = vmatpush1.bf16.msra.mxu0 0
        %2639 = vmatprep.subr.bf16.mxu0 0
        %2640 = vmatpush1.bf16.msra.mxu0 0
        %2641 = vmatprep.subr.bf16.mxu0 0
        %2642 = vmatpush1.bf16.msra.mxu0 0
        %2643 = vmatprep.subr.bf16.mxu0 0
        %2644 = vmatpush1.bf16.msra.mxu0 0
        %2645 = vmatprep.subr.bf16.mxu0 0
        %2646 = vmatpush1.bf16.msra.mxu0 0
        %2647 = vmatprep.subr.bf16.mxu0 0
        %2648 = vmatpush1.bf16.msra.mxu0 0
        %2649 = vmatprep.subr.bf16.mxu0 0
        %2650 = vmatpush1.bf16.msra.mxu0 0
        %2651 = vmatprep.subr.bf16.mxu0 0
        %2652 = vmatpush1.bf16.msra.mxu0 0
        %2653 = vmatprep.subr.bf16.mxu0 0
        %2654 = vmatpush1.bf16.msra.mxu0 0
        %2655 = vmatprep.subr.bf16.mxu0 0
        %2656 = vmatpush1.bf16.msra.mxu0 0
        %2657 = vmatprep.subr.bf16.mxu0 0
        %2658 = vmatpush1.bf16.msra.mxu0 0
        %2659 = vmatprep.subr.bf16.mxu0 0
        %2660 = vmatpush1.bf16.msra.mxu0 0
        %2661 = vmatprep.mubr.bf16.mxu0 0
        %2662 = vmatmul.mubr.bf16.gmra.mrb[0].mxu0 %v2624
        %v2663 = vpop.f32.mrb[0].mxu0
        %v2664 = vadd.f32 0.0, %v2663
        %v2665 = vpop.f32.mrb[0].mxu0
        %v2666 = vpop.f32.mrb[0].mxu0
        %v2667 = vpop.f32.mrb[0].mxu0
        %2668 = vdwg.mxu0
        %v2670 = vsel %vm2105, %v2530, 0
        %v2673 = vsel %vm2345, %v1395, 0
        %2675 = vmatprep.subr.bf16.mxu0 0
        %2676 = vmatpush1.bf16.msra.mxu0 %v2673
        %2677 = vmatprep.subr.bf16.mxu0 0
        %2678 = vmatpush1.bf16.msra.mxu0 0
        %2679 = vmatprep.subr.bf16.mxu0 0
        %2680 = vmatpush1.bf16.msra.mxu0 0
        %2681 = vmatprep.subr.bf16.mxu0 0
        %2682 = vmatpush1.bf16.msra.mxu0 0
        %2683 = vmatprep.subr.bf16.mxu0 0
        %2684 = vmatpush1.bf16.msra.mxu0 0
        %2685 = vmatprep.subr.bf16.mxu0 0
        %2686 = vmatpush1.bf16.msra.mxu0 0
        %2687 = vmatprep.subr.bf16.mxu0 0
        %2688 = vmatpush1.bf16.msra.mxu0 0
        %2689 = vmatprep.subr.bf16.mxu0 0
        %2690 = vmatpush1.bf16.msra.mxu0 0
        %2691 = vmatprep.subr.bf16.mxu0 0
        %2692 = vmatpush1.bf16.msra.mxu0 0
        %2693 = vmatprep.subr.bf16.mxu0 0
        %2694 = vmatpush1.bf16.msra.mxu0 0
        %2695 = vmatprep.subr.bf16.mxu0 0
        %2696 = vmatpush1.bf16.msra.mxu0 0
        %2697 = vmatprep.subr.bf16.mxu0 0
        %2698 = vmatpush1.bf16.msra.mxu0 0
        %2699 = vmatprep.subr.bf16.mxu0 0
        %2700 = vmatpush1.bf16.msra.mxu0 0
        %2701 = vmatprep.subr.bf16.mxu0 0
        %2702 = vmatpush1.bf16.msra.mxu0 0
        %2703 = vmatprep.subr.bf16.mxu0 0
        %2704 = vmatpush1.bf16.msra.mxu0 0
        %2705 = vmatprep.subr.bf16.mxu0 0
        %2706 = vmatpush1.bf16.msra.mxu0 0
        %2707 = vmatprep.mubr.bf16.mxu0 0
        %2708 = vmatmul.mubr.bf16.gmra.mrb[0].mxu0 %v2670
        %v2709 = vpop.f32.mrb[0].mxu0
        %v2710 = vadd.f32 0.0, %v2709
        %v2711 = vpop.f32.mrb[0].mxu0
        %v2712 = vpop.f32.mrb[0].mxu0
        %v2713 = vpop.f32.mrb[0].mxu0
        %2714 = vdwg.mxu0
        %v2715 = vsel %vm1433, %v2572, 0.0
        %v2716 = vsel %vm1433, %v2618, 0.0
        %v2717 = vadd.f32 %v2715, %v2716
        %v2718 = vsel %vm1433, %v2664, 0.0
        %v2719 = vadd.f32 %v2717, %v2718
        %v2720 = vsel %vm1433, %v2710, 0.0
        %v2721 = vadd.f32 %v2719, %v2720
        %v2723 = vlaneseq
        %v2724 = vshrl.u32 %v2723, 7
        %v2725 = vsub.s32 0, %v2724
        %v2726 = vrot.slane %v1396, %v2725
        %v2728 = vadd.f32 %v2721, %v2726
        %v2729 = vld [vmem:[%s1296] sm:$0x1]
        %v2730 = vld [vmem:[%s1299] sm:$0x1]
        %v2731 = vadd.f32 %v1326, %v2728
        %v2732 = vsel %vm1433, %v2731, 0.0
        %2733 = vadd.xlane.f32.xlu0 %v2732
        %v2734 = vpop.xlane.xlu0 %2733
        %v2735 = vrcp.pop 32.0
        %v2736 = vmul.f32 %v2734, %v2735
        %v2737 = vsub.f32 %v2731, %v2736
        %v2738 = vmul.f32 %v2737, %v2737
        %v2739 = vsel %vm1433, %v2738, 0.0
        %2740 = vadd.xlane.f32.xlu0 %v2739
        %v2741 = vpop.xlane.xlu0 %2740
        %v2742 = vmul.f32 %v2741, %v2735
        %v2743 = vadd.f32 %v2742, 1e-05
        %v2744 = vrsqrt.pop %v2743
        %v2745 = vmul.f32 %v2737, %v2744
        %v2747 = vlaneseq
        %v2748 = vshrl.u32 %v2747, 7
        %v2749 = vsub.s32 0, %v2748
        %v2750 = vrot.slane %v2729, %v2749
        %v2752 = vmul.f32 %v2745, %v2750
        %v2754 = vlaneseq
        %v2755 = vshrl.u32 %v2754, 7
        %v2756 = vsub.s32 0, %v2755
        %v2757 = vrot.slane %v2730, %v2756
        %v2759 = vadd.f32 %v2752, %v2757
        %v2760 = vpack.c.bf16 %v2759, %v2759
        %v2761 = vld [vmem:[%s1247] sm:$0xf]
        %v2762 = vld [vmem:[%s1247 + $0x4] sm:$0xf]
        %v2763 = vld [vmem:[%s1247 + $0x8] sm:$0xf]
        %v2764 = vld [vmem:[%s1247 + $0xc] sm:$0xf]
        %v2765 = vld [vmem:[%s1247 + $0x10] sm:$0xf]
        %v2766 = vld [vmem:[%s1247 + $0x14] sm:$0xf]
        %v2767 = vld [vmem:[%s1247 + $0x18] sm:$0xf]
        %v2768 = vld [vmem:[%s1247 + $0x1c] sm:$0xf]
        %v2769 = vld [vmem:[%s1247 + $0x20] sm:$0xf]
        %v2770 = vld [vmem:[%s1247 + $0x24] sm:$0xf]
        %v2771 = vld [vmem:[%s1247 + $0x28] sm:$0xf]
        %v2772 = vld [vmem:[%s1247 + $0x2c] sm:$0xf]
        %v2773 = vld [vmem:[%s1247 + $0x30] sm:$0xf]
        %v2774 = vld [vmem:[%s1247 + $0x34] sm:$0xf]
        %v2775 = vld [vmem:[%s1247 + $0x38] sm:$0xf]
        %v2776 = vld [vmem:[%s1247 + $0x3c] sm:$0xf]
        %v2777 = vld [vmem:[%s1251] sm:$0x1]
        %v2778 = vld [vmem:[%s1251 + $0x1] sm:$0x1]
        %v2779 = vld [vmem:[%s1251 + $0x2] sm:$0x1]
        %v2780 = vld [vmem:[%s1251 + $0x3] sm:$0x1]
        %v2781 = vld [vmem:[%s1256] sm:$0xf]
        %v2782 = vld [vmem:[%s1256 + $0x4] sm:$0xf]
        %v2783 = vld [vmem:[%s1256 + $0x8] sm:$0xf]
        %v2784 = vld [vmem:[%s1256 + $0xc] sm:$0xf]
        %v2785 = vld [vmem:[%s1256 + $0x10] sm:$0xf]
        %v2786 = vld [vmem:[%s1256 + $0x14] sm:$0xf]
        %v2787 = vld [vmem:[%s1256 + $0x18] sm:$0xf]
        %v2788 = vld [vmem:[%s1256 + $0x1c] sm:$0xf]
        %v2789 = vld [vmem:[%s1256 + $0x20] sm:$0xf]
        %v2790 = vld [vmem:[%s1256 + $0x24] sm:$0xf]
        %v2791 = vld [vmem:[%s1256 + $0x28] sm:$0xf]
        %v2792 = vld [vmem:[%s1256 + $0x2c] sm:$0xf]
        %v2793 = vld [vmem:[%s1256 + $0x30] sm:$0xf]
        %v2794 = vld [vmem:[%s1256 + $0x34] sm:$0xf]
        %v2795 = vld [vmem:[%s1256 + $0x38] sm:$0xf]
        %v2796 = vld [vmem:[%s1256 + $0x3c] sm:$0xf]
        %v2797 = vld [vmem:[%s1260] sm:$0x1]
        %v2798 = vld [vmem:[%s1260 + $0x1] sm:$0x1]
        %v2799 = vld [vmem:[%s1260 + $0x2] sm:$0x1]
        %v2800 = vld [vmem:[%s1260 + $0x3] sm:$0x1]
        %v2801 = vld [vmem:[%s1265] sm:$0xf]
        %v2802 = vld [vmem:[%s1265 + $0x4] sm:$0xf]
        %v2803 = vld [vmem:[%s1265 + $0x8] sm:$0xf]
        %v2804 = vld [vmem:[%s1265 + $0xc] sm:$0xf]
        %v2805 = vld [vmem:[%s1265 + $0x10] sm:$0xf]
        %v2806 = vld [vmem:[%s1265 + $0x14] sm:$0xf]
        %v2807 = vld [vmem:[%s1265 + $0x18] sm:$0xf]
        %v2808 = vld [vmem:[%s1265 + $0x1c] sm:$0xf]
        %v2809 = vld [vmem:[%s1265 + $0x20] sm:$0xf]
        %v2810 = vld [vmem:[%s1265 + $0x24] sm:$0xf]
        %v2811 = vld [vmem:[%s1265 + $0x28] sm:$0xf]
        %v2812 = vld [vmem:[%s1265 + $0x2c] sm:$0xf]
        %v2813 = vld [vmem:[%s1265 + $0x30] sm:$0xf]
        %v2814 = vld [vmem:[%s1265 + $0x34] sm:$0xf]
        %v2815 = vld [vmem:[%s1265 + $0x38] sm:$0xf]
        %v2816 = vld [vmem:[%s1265 + $0x3c] sm:$0xf]
        %v2817 = vld [vmem:[%s1269] sm:$0x1]
        %v2818 = vld [vmem:[%s1269 + $0x1] sm:$0x1]
        %v2819 = vld [vmem:[%s1269 + $0x2] sm:$0x1]
        %v2820 = vld [vmem:[%s1269 + $0x3] sm:$0x1]
        %v2821 = vld [vmem:[%s1274] sm:$0xf]
        %v2822 = vld [vmem:[%s1274 + $0x4] sm:$0xf]
        %v2823 = vld [vmem:[%s1274 + $0x8] sm:$0xf]
        %v2824 = vld [vmem:[%s1274 + $0xc] sm:$0xf]
        %v2825 = vld [vmem:[%s1277] sm:$0x1]
        %v2830 = vlaneseq
        %v2831 = vshrl.u32 %v2830, 7
        %v2832 = vsub.s32 0, %v2831
        %v2833 = vrot.slane %v2777, %v2832
        %v2834 = vlaneseq
        %v2835 = vshrl.u32 %v2834, 7
        %v2836 = vsub.s32 0, %v2835
        %v2837 = vrot.slane %v2778, %v2836
        %v2838 = vlaneseq
        %v2839 = vshrl.u32 %v2838, 7
        %v2840 = vsub.s32 0, %v2839
        %v2841 = vrot.slane %v2779, %v2840
        %v2842 = vlaneseq
        %v2843 = vshrl.u32 %v2842, 7
        %v2844 = vsub.s32 0, %v2843
        %v2845 = vrot.slane %v2780, %v2844
        %v2854 = vunpack.c.l.b16 %v2761
        %v2855 = vunpack.c.l.b16 %v2762
        %v2856 = vunpack.c.l.b16 %v2763
        %v2857 = vunpack.c.l.b16 %v2764
        %v2858 = vpack.c.b16 %v2855, %v2854
        %v2859 = vpack.c.b16 %v2857, %v2856
        %v2863 = vsel %vm1433, %v2760, 0
        %2865 = vmatprep.subr.bf16.mxu0 0
        %2866 = vmatpush1.bf16.msra.mxu0 %v2858
        %2867 = vmatprep.subr.bf16.mxu0 0
        %2868 = vmatpush1.bf16.msra.mxu0 %v2859
        %2869 = vmatprep.subr.bf16.mxu0 0
        %2870 = vmatpush1.bf16.msra.mxu0 0
        %2871 = vmatprep.subr.bf16.mxu0 0
        %2872 = vmatpush1.bf16.msra.mxu0 0
        %2873 = vmatprep.subr.bf16.mxu0 0
        %2874 = vmatpush1.bf16.msra.mxu0 0
        %2875 = vmatprep.subr.bf16.mxu0 0
        %2876 = vmatpush1.bf16.msra.mxu0 0
        %2877 = vmatprep.subr.bf16.mxu0 0
        %2878 = vmatpush1.bf16.msra.mxu0 0
        %2879 = vmatprep.subr.bf16.mxu0 0
        %2880 = vmatpush1.bf16.msra.mxu0 0
        %2881 = vmatprep.subr.bf16.mxu0 0
        %2882 = vmatpush1.bf16.msra.mxu0 0
        %2883 = vmatprep.subr.bf16.mxu0 0
        %2884 = vmatpush1.bf16.msra.mxu0 0
        %2885 = vmatprep.subr.bf16.mxu0 0
        %2886 = vmatpush1.bf16.msra.mxu0 0
        %2887 = vmatprep.subr.bf16.mxu0 0
        %2888 = vmatpush1.bf16.msra.mxu0 0
        %2889 = vmatprep.subr.bf16.mxu0 0
        %2890 = vmatpush1.bf16.msra.mxu0 0
        %2891 = vmatprep.subr.bf16.mxu0 0
        %2892 = vmatpush1.bf16.msra.mxu0 0
        %2893 = vmatprep.subr.bf16.mxu0 0
        %2894 = vmatpush1.bf16.msra.mxu0 0
        %2895 = vmatprep.subr.bf16.mxu0 0
        %2896 = vmatpush1.bf16.msra.mxu0 0
        %2897 = vmatprep.mubr.bf16.mxu0 0
        %2898 = vmatmul.mubr.bf16.gmra.mrb[0].mxu0 %v2863
        %v2899 = vpop.f32.mrb[0].mxu0
        %v2900 = vadd.f32 %v2833, %v2899
        %v2901 = vpop.f32.mrb[0].mxu0
        %v2902 = vpop.f32.mrb[0].mxu0
        %v2903 = vpop.f32.mrb[0].mxu0
        %2904 = vdwg.mxu0
        %v2909 = vunpack.c.l.b16 %v2765
        %v2910 = vunpack.c.l.b16 %v2766
        %v2911 = vunpack.c.l.b16 %v2767
        %v2912 = vunpack.c.l.b16 %v2768
        %v2913 = vpack.c.b16 %v2910, %v2909
        %v2914 = vpack.c.b16 %v2912, %v2911
        %2917 = vmatprep.subr.bf16.mxu0 0
        %2918 = vmatpush1.bf16.msra.mxu0 %v2913
        %2919 = vmatprep.subr.bf16.mxu0 0
        %2920 = vmatpush1.bf16.msra.mxu0 %v2914
        %2921 = vmatprep.subr.bf16.mxu0 0
        %2922 = vmatpush1.bf16.msra.mxu0 0
        %2923 = vmatprep.subr.bf16.mxu0 0
        %2924 = vmatpush1.bf16.msra.mxu0 0
        %2925 = vmatprep.subr.bf16.mxu0 0
        %2926 = vmatpush1.bf16.msra.mxu0 0
        %2927 = vmatprep.subr.bf16.mxu0 0
        %2928 = vmatpush1.bf16.msra.mxu0 0
        %2929 = vmatprep.subr.bf16.mxu0 0
        %2930 = vmatpush1.bf16.msra.mxu0 0
        %2931 = vmatprep.subr.bf16.mxu0 0
        %2932 = vmatpush1.bf16.msra.mxu0 0
        %2933 = vmatprep.subr.bf16.mxu0 0
        %2934 = vmatpush1.bf16.msra.mxu0 0
        %2935 = vmatprep.subr.bf16.mxu0 0
        %2936 = vmatpush1.bf16.msra.mxu0 0
        %2937 = vmatprep.subr.bf16.mxu0 0
        %2938 = vmatpush1.bf16.msra.mxu0 0
        %2939 = vmatprep.subr.bf16.mxu0 0
        %2940 = vmatpush1.bf16.msra.mxu0 0
        %2941 = vmatprep.subr.bf16.mxu0 0
        %2942 = vmatpush1.bf16.msra.mxu0 0
        %2943 = vmatprep.subr.bf16.mxu0 0
        %2944 = vmatpush1.bf16.msra.mxu0 0
        %2945 = vmatprep.subr.bf16.mxu0 0
        %2946 = vmatpush1.bf16.msra.mxu0 0
        %2947 = vmatprep.subr.bf16.mxu0 0
        %2948 = vmatpush1.bf16.msra.mxu0 0
        %2949 = vmatprep.mubr.bf16.mxu0 0
        %2950 = vmatmul.mubr.bf16.gmra.mrb[0].mxu0 %v2863
        %v2951 = vpop.f32.mrb[0].mxu0
        %v2952 = vadd.f32 %v2837, %v2951
        %v2953 = vpop.f32.mrb[0].mxu0
        %v2954 = vpop.f32.mrb[0].mxu0
        %v2955 = vpop.f32.mrb[0].mxu0
        %2956 = vdwg.mxu0
        %v2961 = vunpack.c.l.b16 %v2769
        %v2962 = vunpack.c.l.b16 %v2770
        %v2963 = vunpack.c.l.b16 %v2771
        %v2964 = vunpack.c.l.b16 %v2772
        %v2965 = vpack.c.b16 %v2962, %v2961
        %v2966 = vpack.c.b16 %v2964, %v2963
        %2969 = vmatprep.subr.bf16.mxu0 0
        %2970 = vmatpush1.bf16.msra.mxu0 %v2965
        %2971 = vmatprep.subr.bf16.mxu0 0
        %2972 = vmatpush1.bf16.msra.mxu0 %v2966
        %2973 = vmatprep.subr.bf16.mxu0 0
        %2974 = vmatpush1.bf16.msra.mxu0 0
        %2975 = vmatprep.subr.bf16.mxu0 0
        %2976 = vmatpush1.bf16.msra.mxu0 0
        %2977 = vmatprep.subr.bf16.mxu0 0
        %2978 = vmatpush1.bf16.msra.mxu0 0
        %2979 = vmatprep.subr.bf16.mxu0 0
        %2980 = vmatpush1.bf16.msra.mxu0 0
        %2981 = vmatprep.subr.bf16.mxu0 0
        %2982 = vmatpush1.bf16.msra.mxu0 0
        %2983 = vmatprep.subr.bf16.mxu0 0
        %2984 = vmatpush1.bf16.msra.mxu0 0
        %2985 = vmatprep.subr.bf16.mxu0 0
        %2986 = vmatpush1.bf16.msra.mxu0 0
        %2987 = vmatprep.subr.bf16.mxu0 0
        %2988 = vmatpush1.bf16.msra.mxu0 0
        %2989 = vmatprep.subr.bf16.mxu0 0
        %2990 = vmatpush1.bf16.msra.mxu0 0
        %2991 = vmatprep.subr.bf16.mxu0 0
        %2992 = vmatpush1.bf16.msra.mxu0 0
        %2993 = vmatprep.subr.bf16.mxu0 0
        %2994 = vmatpush1.bf16.msra.mxu0 0
        %2995 = vmatprep.subr.bf16.mxu0 0
        %2996 = vmatpush1.bf16.msra.mxu0 0
        %2997 = vmatprep.subr.bf16.mxu0 0
        %2998 = vmatpush1.bf16.msra.mxu0 0
        %2999 = vmatprep.subr.bf16.mxu0 0
        %3000 = vmatpush1.bf16.msra.mxu0 0
        %3001 = vmatprep.mubr.bf16.mxu0 0
        %3002 = vmatmul.mubr.bf16.gmra.mrb[0].mxu0 %v2863
        %v3003 = vpop.f32.mrb[0].mxu0
        %v3004 = vadd.f32 %v2841, %v3003
        %v3005 = vpop.f32.mrb[0].mxu0
        %v3006 = vpop.f32.mrb[0].mxu0
        %v3007 = vpop.f32.mrb[0].mxu0
        %3008 = vdwg.mxu0
        %v3013 = vunpack.c.l.b16 %v2773
        %v3014 = vunpack.c.l.b16 %v2774
        %v3015 = vunpack.c.l.b16 %v2775
        %v3016 = vunpack.c.l.b16 %v2776
        %v3017 = vpack.c.b16 %v3014, %v3013
        %v3018 = vpack.c.b16 %v3016, %v3015
        %3021 = vmatprep.subr.bf16.mxu0 0
        %3022 = vmatpush1.bf16.msra.mxu0 %v3017
        %3023 = vmatprep.subr.bf16.mxu0 0
        %3024 = vmatpush1.bf16.msra.mxu0 %v3018
        %3025 = vmatprep.subr.bf16.mxu0 0
        %3026 = vmatpush1.bf16.msra.mxu0 0
        %3027 = vmatprep.subr.bf16.mxu0 0
        %3028 = vmatpush1.bf16.msra.mxu0 0
        %3029 = vmatprep.subr.bf16.mxu0 0
        %3030 = vmatpush1.bf16.msra.mxu0 0
        %3031 = vmatprep.subr.bf16.mxu0 0
        %3032 = vmatpush1.bf16.msra.mxu0 0
        %3033 = vmatprep.subr.bf16.mxu0 0
        %3034 = vmatpush1.bf16.msra.mxu0 0
        %3035 = vmatprep.subr.bf16.mxu0 0
        %3036 = vmatpush1.bf16.msra.mxu0 0
        %3037 = vmatprep.subr.bf16.mxu0 0
        %3038 = vmatpush1.bf16.msra.mxu0 0
        %3039 = vmatprep.subr.bf16.mxu0 0
        %3040 = vmatpush1.bf16.msra.mxu0 0
        %3041 = vmatprep.subr.bf16.mxu0 0
        %3042 = vmatpush1.bf16.msra.mxu0 0
        %3043 = vmatprep.subr.bf16.mxu0 0
        %3044 = vmatpush1.bf16.msra.mxu0 0
        %3045 = vmatprep.subr.bf16.mxu0 0
        %3046 = vmatpush1.bf16.msra.mxu0 0
        %3047 = vmatprep.subr.bf16.mxu0 0
        %3048 = vmatpush1.bf16.msra.mxu0 0
        %3049 = vmatprep.subr.bf16.mxu0 0
        %3050 = vmatpush1.bf16.msra.mxu0 0
        %3051 = vmatprep.subr.bf16.mxu0 0
        %3052 = vmatpush1.bf16.msra.mxu0 0
        %3053 = vmatprep.mubr.bf16.mxu0 0
        %3054 = vmatmul.mubr.bf16.gmra.mrb[0].mxu0 %v2863
        %v3055 = vpop.f32.mrb[0].mxu0
        %v3056 = vadd.f32 %v2845, %v3055
        %v3057 = vpop.f32.mrb[0].mxu0
        %v3058 = vpop.f32.mrb[0].mxu0
        %v3059 = vpop.f32.mrb[0].mxu0
        %3060 = vdwg.mxu0
        %v3065 = vlaneseq
        %v3066 = vshrl.u32 %v3065, 7
        %v3067 = vsub.s32 0, %v3066
        %v3068 = vrot.slane %v2797, %v3067
        %v3069 = vlaneseq
        %v3070 = vshrl.u32 %v3069, 7
        %v3071 = vsub.s32 0, %v3070
        %v3072 = vrot.slane %v2798, %v3071
        %v3073 = vlaneseq
        %v3074 = vshrl.u32 %v3073, 7
        %v3075 = vsub.s32 0, %v3074
        %v3076 = vrot.slane %v2799, %v3075
        %v3077 = vlaneseq
        %v3078 = vshrl.u32 %v3077, 7
        %v3079 = vsub.s32 0, %v3078
        %v3080 = vrot.slane %v2800, %v3079
        %v3089 = vunpack.c.l.b16 %v2781
        %v3090 = vunpack.c.l.b16 %v2782
        %v3091 = vunpack.c.l.b16 %v2783
        %v3092 = vunpack.c.l.b16 %v2784
        %v3093 = vpack.c.b16 %v3090, %v3089
        %v3094 = vpack.c.b16 %v3092, %v3091
        %v3098 = vsel %vm1433, %v1327, 0
        %3100 = vmatprep.subr.bf16.mxu0 0
        %3101 = vmatpush1.bf16.msra.mxu0 %v3093
        %3102 = vmatprep.subr.bf16.mxu0 0
        %3103 = vmatpush1.bf16.msra.mxu0 %v3094
        %3104 = vmatprep.subr.bf16.mxu0 0
        %3105 = vmatpush1.bf16.msra.mxu0 0
        %3106 = vmatprep.subr.bf16.mxu0 0
        %3107 = vmatpush1.bf16.msra.mxu0 0
        %3108 = vmatprep.subr.bf16.mxu0 0
        %3109 = vmatpush1.bf16.msra.mxu0 0
        %3110 = vmatprep.subr.bf16.mxu0 0
        %3111 = vmatpush1.bf16.msra.mxu0 0
        %3112 = vmatprep.subr.bf16.mxu0 0
        %3113 = vmatpush1.bf16.msra.mxu0 0
        %3114 = vmatprep.subr.bf16.mxu0 0
        %3115 = vmatpush1.bf16.msra.mxu0 0
        %3116 = vmatprep.subr.bf16.mxu0 0
        %3117 = vmatpush1.bf16.msra.mxu0 0
        %3118 = vmatprep.subr.bf16.mxu0 0
        %3119 = vmatpush1.bf16.msra.mxu0 0
        %3120 = vmatprep.subr.bf16.mxu0 0
        %3121 = vmatpush1.bf16.msra.mxu0 0
        %3122 = vmatprep.subr.bf16.mxu0 0
        %3123 = vmatpush1.bf16.msra.mxu0 0
        %3124 = vmatprep.subr.bf16.mxu0 0
        %3125 = vmatpush1.bf16.msra.mxu0 0
        %3126 = vmatprep.subr.bf16.mxu0 0
        %3127 = vmatpush1.bf16.msra.mxu0 0
        %3128 = vmatprep.subr.bf16.mxu0 0
        %3129 = vmatpush1.bf16.msra.mxu0 0
        %3130 = vmatprep.subr.bf16.mxu0 0
        %3131 = vmatpush1.bf16.msra.mxu0 0
        %3132 = vmatprep.mubr.bf16.mxu0 0
        %3133 = vmatmul.mubr.bf16.gmra.mrb[0].mxu0 %v3098
        %v3134 = vpop.f32.mrb[0].mxu0
        %v3135 = vadd.f32 %v3068, %v3134
        %v3136 = vpop.f32.mrb[0].mxu0
        %v3137 = vpop.f32.mrb[0].mxu0
        %v3138 = vpop.f32.mrb[0].mxu0
        %3139 = vdwg.mxu0
        %v3144 = vunpack.c.l.b16 %v2785
        %v3145 = vunpack.c.l.b16 %v2786
        %v3146 = vunpack.c.l.b16 %v2787
        %v3147 = vunpack.c.l.b16 %v2788
        %v3148 = vpack.c.b16 %v3145, %v3144
        %v3149 = vpack.c.b16 %v3147, %v3146
        %v3153 = vsel %vm1433, %v1328, 0
        %3155 = vmatprep.subr.bf16.mxu0 0
        %3156 = vmatpush1.bf16.msra.mxu0 %v3148
        %3157 = vmatprep.subr.bf16.mxu0 0
        %3158 = vmatpush1.bf16.msra.mxu0 %v3149
        %3159 = vmatprep.subr.bf16.mxu0 0
        %3160 = vmatpush1.bf16.msra.mxu0 0
        %3161 = vmatprep.subr.bf16.mxu0 0
        %3162 = vmatpush1.bf16.msra.mxu0 0
        %3163 = vmatprep.subr.bf16.mxu0 0
        %3164 = vmatpush1.bf16.msra.mxu0 0
        %3165 = vmatprep.subr.bf16.mxu0 0
        %3166 = vmatpush1.bf16.msra.mxu0 0
        %3167 = vmatprep.subr.bf16.mxu0 0
        %3168 = vmatpush1.bf16.msra.mxu0 0
        %3169 = vmatprep.subr.bf16.mxu0 0
        %3170 = vmatpush1.bf16.msra.mxu0 0
        %3171 = vmatprep.subr.bf16.mxu0 0
        %3172 = vmatpush1.bf16.msra.mxu0 0
        %3173 = vmatprep.subr.bf16.mxu0 0
        %3174 = vmatpush1.bf16.msra.mxu0 0
        %3175 = vmatprep.subr.bf16.mxu0 0
        %3176 = vmatpush1.bf16.msra.mxu0 0
        %3177 = vmatprep.subr.bf16.mxu0 0
        %3178 = vmatpush1.bf16.msra.mxu0 0
        %3179 = vmatprep.subr.bf16.mxu0 0
        %3180 = vmatpush1.bf16.msra.mxu0 0
        %3181 = vmatprep.subr.bf16.mxu0 0
        %3182 = vmatpush1.bf16.msra.mxu0 0
        %3183 = vmatprep.subr.bf16.mxu0 0
        %3184 = vmatpush1.bf16.msra.mxu0 0
        %3185 = vmatprep.subr.bf16.mxu0 0
        %3186 = vmatpush1.bf16.msra.mxu0 0
        %3187 = vmatprep.mubr.bf16.mxu0 0
        %3188 = vmatmul.mubr.bf16.gmra.mrb[0].mxu0 %v3153
        %v3189 = vpop.f32.mrb[0].mxu0
        %v3190 = vadd.f32 %v3072, %v3189
        %v3191 = vpop.f32.mrb[0].mxu0
        %v3192 = vpop.f32.mrb[0].mxu0
        %v3193 = vpop.f32.mrb[0].mxu0
        %3194 = vdwg.mxu0
        %v3199 = vunpack.c.l.b16 %v2789
        %v3200 = vunpack.c.l.b16 %v2790
        %v3201 = vunpack.c.l.b16 %v2791
        %v3202 = vunpack.c.l.b16 %v2792
        %v3203 = vpack.c.b16 %v3200, %v3199
        %v3204 = vpack.c.b16 %v3202, %v3201
        %v3208 = vsel %vm1433, %v1329, 0
        %3210 = vmatprep.subr.bf16.mxu0 0
        %3211 = vmatpush1.bf16.msra.mxu0 %v3203
        %3212 = vmatprep.subr.bf16.mxu0 0
        %3213 = vmatpush1.bf16.msra.mxu0 %v3204
        %3214 = vmatprep.subr.bf16.mxu0 0
        %3215 = vmatpush1.bf16.msra.mxu0 0
        %3216 = vmatprep.subr.bf16.mxu0 0
        %3217 = vmatpush1.bf16.msra.mxu0 0
        %3218 = vmatprep.subr.bf16.mxu0 0
        %3219 = vmatpush1.bf16.msra.mxu0 0
        %3220 = vmatprep.subr.bf16.mxu0 0
        %3221 = vmatpush1.bf16.msra.mxu0 0
        %3222 = vmatprep.subr.bf16.mxu0 0
        %3223 = vmatpush1.bf16.msra.mxu0 0
        %3224 = vmatprep.subr.bf16.mxu0 0
        %3225 = vmatpush1.bf16.msra.mxu0 0
        %3226 = vmatprep.subr.bf16.mxu0 0
        %3227 = vmatpush1.bf16.msra.mxu0 0
        %3228 = vmatprep.subr.bf16.mxu0 0
        %3229 = vmatpush1.bf16.msra.mxu0 0
        %3230 = vmatprep.subr.bf16.mxu0 0
        %3231 = vmatpush1.bf16.msra.mxu0 0
        %3232 = vmatprep.subr.bf16.mxu0 0
        %3233 = vmatpush1.bf16.msra.mxu0 0
        %3234 = vmatprep.subr.bf16.mxu0 0
        %3235 = vmatpush1.bf16.msra.mxu0 0
        %3236 = vmatprep.subr.bf16.mxu0 0
        %3237 = vmatpush1.bf16.msra.mxu0 0
        %3238 = vmatprep.subr.bf16.mxu0 0
        %3239 = vmatpush1.bf16.msra.mxu0 0
        %3240 = vmatprep.subr.bf16.mxu0 0
        %3241 = vmatpush1.bf16.msra.mxu0 0
        %3242 = vmatprep.mubr.bf16.mxu0 0
        %3243 = vmatmul.mubr.bf16.gmra.mrb[0].mxu0 %v3208
        %v3244 = vpop.f32.mrb[0].mxu0
        %v3245 = vadd.f32 %v3076, %v3244
        %v3246 = vpop.f32.mrb[0].mxu0
        %v3247 = vpop.f32.mrb[0].mxu0
        %v3248 = vpop.f32.mrb[0].mxu0
        %3249 = vdwg.mxu0
        %v3254 = vunpack.c.l.b16 %v2793
        %v3255 = vunpack.c.l.b16 %v2794
        %v3256 = vunpack.c.l.b16 %v2795
        %v3257 = vunpack.c.l.b16 %v2796
        %v3258 = vpack.c.b16 %v3255, %v3254
        %v3259 = vpack.c.b16 %v3257, %v3256
        %v3263 = vsel %vm1433, %v1330, 0
        %3265 = vmatprep.subr.bf16.mxu0 0
        %3266 = vmatpush1.bf16.msra.mxu0 %v3258
        %3267 = vmatprep.subr.bf16.mxu0 0
        %3268 = vmatpush1.bf16.msra.mxu0 %v3259
        %3269 = vmatprep.subr.bf16.mxu0 0
        %3270 = vmatpush1.bf16.msra.mxu0 0
        %3271 = vmatprep.subr.bf16.mxu0 0
        %3272 = vmatpush1.bf16.msra.mxu0 0
        %3273 = vmatprep.subr.bf16.mxu0 0
        %3274 = vmatpush1.bf16.msra.mxu0 0
        %3275 = vmatprep.subr.bf16.mxu0 0
        %3276 = vmatpush1.bf16.msra.mxu0 0
        %3277 = vmatprep.subr.bf16.mxu0 0
        %3278 = vmatpush1.bf16.msra.mxu0 0
        %3279 = vmatprep.subr.bf16.mxu0 0
        %3280 = vmatpush1.bf16.msra.mxu0 0
        %3281 = vmatprep.subr.bf16.mxu0 0
        %3282 = vmatpush1.bf16.msra.mxu0 0
        %3283 = vmatprep.subr.bf16.mxu0 0
        %3284 = vmatpush1.bf16.msra.mxu0 0
        %3285 = vmatprep.subr.bf16.mxu0 0
        %3286 = vmatpush1.bf16.msra.mxu0 0
        %3287 = vmatprep.subr.bf16.mxu0 0
        %3288 = vmatpush1.bf16.msra.mxu0 0
        %3289 = vmatprep.subr.bf16.mxu0 0
        %3290 = vmatpush1.bf16.msra.mxu0 0
        %3291 = vmatprep.subr.bf16.mxu0 0
        %3292 = vmatpush1.bf16.msra.mxu0 0
        %3293 = vmatprep.subr.bf16.mxu0 0
        %3294 = vmatpush1.bf16.msra.mxu0 0
        %3295 = vmatprep.subr.bf16.mxu0 0
        %3296 = vmatpush1.bf16.msra.mxu0 0
        %3297 = vmatprep.mubr.bf16.mxu0 0
        %3298 = vmatmul.mubr.bf16.gmra.mrb[0].mxu0 %v3263
        %v3299 = vpop.f32.mrb[0].mxu0
        %v3300 = vadd.f32 %v3080, %v3299
        %v3301 = vpop.f32.mrb[0].mxu0
        %v3302 = vpop.f32.mrb[0].mxu0
        %v3303 = vpop.f32.mrb[0].mxu0
        %3304 = vdwg.mxu0
        %v3309 = vlaneseq
        %v3310 = vshrl.u32 %v3309, 7
        %v3311 = vsub.s32 0, %v3310
        %v3312 = vrot.slane %v2817, %v3311
        %v3313 = vlaneseq
        %v3314 = vshrl.u32 %v3313, 7
        %v3315 = vsub.s32 0, %v3314
        %v3316 = vrot.slane %v2818, %v3315
        %v3317 = vlaneseq
        %v3318 = vshrl.u32 %v3317, 7
        %v3319 = vsub.s32 0, %v3318
        %v3320 = vrot.slane %v2819, %v3319
        %v3321 = vlaneseq
        %v3322 = vshrl.u32 %v3321, 7
        %v3323 = vsub.s32 0, %v3322
        %v3324 = vrot.slane %v2820, %v3323
        %v3333 = vunpack.c.l.b16 %v2801
        %v3334 = vunpack.c.l.b16 %v2802
        %v3335 = vunpack.c.l.b16 %v2803
        %v3336 = vunpack.c.l.b16 %v2804
        %v3337 = vpack.c.b16 %v3334, %v3333
        %v3338 = vpack.c.b16 %v3336, %v3335
        %3341 = vmatprep.subr.bf16.mxu0 0
        %3342 = vmatpush1.bf16.msra.mxu0 %v3337
        %3343 = vmatprep.subr.bf16.mxu0 0
        %3344 = vmatpush1.bf16.msra.mxu0 %v3338
        %3345 = vmatprep.subr.bf16.mxu0 0
        %3346 = vmatpush1.bf16.msra.mxu0 0
        %3347 = vmatprep.subr.bf16.mxu0 0
        %3348 = vmatpush1.bf16.msra.mxu0 0
        %3349 = vmatprep.subr.bf16.mxu0 0
        %3350 = vmatpush1.bf16.msra.mxu0 0
        %3351 = vmatprep.subr.bf16.mxu0 0
        %3352 = vmatpush1.bf16.msra.mxu0 0
        %3353 = vmatprep.subr.bf16.mxu0 0
        %3354 = vmatpush1.bf16.msra.mxu0 0
        %3355 = vmatprep.subr.bf16.mxu0 0
        %3356 = vmatpush1.bf16.msra.mxu0 0
        %3357 = vmatprep.subr.bf16.mxu0 0
        %3358 = vmatpush1.bf16.msra.mxu0 0
        %3359 = vmatprep.subr.bf16.mxu0 0
        %3360 = vmatpush1.bf16.msra.mxu0 0
        %3361 = vmatprep.subr.bf16.mxu0 0
        %3362 = vmatpush1.bf16.msra.mxu0 0
        %3363 = vmatprep.subr.bf16.mxu0 0
        %3364 = vmatpush1.bf16.msra.mxu0 0
        %3365 = vmatprep.subr.bf16.mxu0 0
        %3366 = vmatpush1.bf16.msra.mxu0 0
        %3367 = vmatprep.subr.bf16.mxu0 0
        %3368 = vmatpush1.bf16.msra.mxu0 0
        %3369 = vmatprep.subr.bf16.mxu0 0
        %3370 = vmatpush1.bf16.msra.mxu0 0
        %3371 = vmatprep.subr.bf16.mxu0 0
        %3372 = vmatpush1.bf16.msra.mxu0 0
        %3373 = vmatprep.mubr.bf16.mxu0 0
        %3374 = vmatmul.mubr.bf16.gmra.mrb[0].mxu0 %v3098
        %v3375 = vpop.f32.mrb[0].mxu0
        %v3376 = vadd.f32 %v3312, %v3375
        %v3377 = vpop.f32.mrb[0].mxu0
        %v3378 = vpop.f32.mrb[0].mxu0
        %v3379 = vpop.f32.mrb[0].mxu0
        %3380 = vdwg.mxu0
        %v3385 = vunpack.c.l.b16 %v2805
        %v3386 = vunpack.c.l.b16 %v2806
        %v3387 = vunpack.c.l.b16 %v2807
        %v3388 = vunpack.c.l.b16 %v2808
        %v3389 = vpack.c.b16 %v3386, %v3385
        %v3390 = vpack.c.b16 %v3388, %v3387
        %3393 = vmatprep.subr.bf16.mxu0 0
        %3394 = vmatpush1.bf16.msra.mxu0 %v3389
        %3395 = vmatprep.subr.bf16.mxu0 0
        %3396 = vmatpush1.bf16.msra.mxu0 %v3390
        %3397 = vmatprep.subr.bf16.mxu0 0
        %3398 = vmatpush1.bf16.msra.mxu0 0
        %3399 = vmatprep.subr.bf16.mxu0 0
        %3400 = vmatpush1.bf16.msra.mxu0 0
        %3401 = vmatprep.subr.bf16.mxu0 0
        %3402 = vmatpush1.bf16.msra.mxu0 0
        %3403 = vmatprep.subr.bf16.mxu0 0
        %3404 = vmatpush1.bf16.msra.mxu0 0
        %3405 = vmatprep.subr.bf16.mxu0 0
        %3406 = vmatpush1.bf16.msra.mxu0 0
        %3407 = vmatprep.subr.bf16.mxu0 0
        %3408 = vmatpush1.bf16.msra.mxu0 0
        %3409 = vmatprep.subr.bf16.mxu0 0
        %3410 = vmatpush1.bf16.msra.mxu0 0
        %3411 = vmatprep.subr.bf16.mxu0 0
        %3412 = vmatpush1.bf16.msra.mxu0 0
        %3413 = vmatprep.subr.bf16.mxu0 0
        %3414 = vmatpush1.bf16.msra.mxu0 0
        %3415 = vmatprep.subr.bf16.mxu0 0
        %3416 = vmatpush1.bf16.msra.mxu0 0
        %3417 = vmatprep.subr.bf16.mxu0 0
        %3418 = vmatpush1.bf16.msra.mxu0 0
        %3419 = vmatprep.subr.bf16.mxu0 0
        %3420 = vmatpush1.bf16.msra.mxu0 0
        %3421 = vmatprep.subr.bf16.mxu0 0
        %3422 = vmatpush1.bf16.msra.mxu0 0
        %3423 = vmatprep.subr.bf16.mxu0 0
        %3424 = vmatpush1.bf16.msra.mxu0 0
        %3425 = vmatprep.mubr.bf16.mxu0 0
        %3426 = vmatmul.mubr.bf16.gmra.mrb[0].mxu0 %v3153
        %v3427 = vpop.f32.mrb[0].mxu0
        %v3428 = vadd.f32 %v3316, %v3427
        %v3429 = vpop.f32.mrb[0].mxu0
        %v3430 = vpop.f32.mrb[0].mxu0
        %v3431 = vpop.f32.mrb[0].mxu0
        %3432 = vdwg.mxu0
        %v3437 = vunpack.c.l.b16 %v2809
        %v3438 = vunpack.c.l.b16 %v2810
        %v3439 = vunpack.c.l.b16 %v2811
        %v3440 = vunpack.c.l.b16 %v2812
        %v3441 = vpack.c.b16 %v3438, %v3437
        %v3442 = vpack.c.b16 %v3440, %v3439
        %3445 = vmatprep.subr.bf16.mxu0 0
        %3446 = vmatpush1.bf16.msra.mxu0 %v3441
        %3447 = vmatprep.subr.bf16.mxu0 0
        %3448 = vmatpush1.bf16.msra.mxu0 %v3442
        %3449 = vmatprep.subr.bf16.mxu0 0
        %3450 = vmatpush1.bf16.msra.mxu0 0
        %3451 = vmatprep.subr.bf16.mxu0 0
        %3452 = vmatpush1.bf16.msra.mxu0 0
        %3453 = vmatprep.subr.bf16.mxu0 0
        %3454 = vmatpush1.bf16.msra.mxu0 0
        %3455 = vmatprep.subr.bf16.mxu0 0
        %3456 = vmatpush1.bf16.msra.mxu0 0
        %3457 = vmatprep.subr.bf16.mxu0 0
        %3458 = vmatpush1.bf16.msra.mxu0 0
        %3459 = vmatprep.subr.bf16.mxu0 0
        %3460 = vmatpush1.bf16.msra.mxu0 0
        %3461 = vmatprep.subr.bf16.mxu0 0
        %3462 = vmatpush1.bf16.msra.mxu0 0
        %3463 = vmatprep.subr.bf16.mxu0 0
        %3464 = vmatpush1.bf16.msra.mxu0 0
        %3465 = vmatprep.subr.bf16.mxu0 0
        %3466 = vmatpush1.bf16.msra.mxu0 0
        %3467 = vmatprep.subr.bf16.mxu0 0
        %3468 = vmatpush1.bf16.msra.mxu0 0
        %3469 = vmatprep.subr.bf16.mxu0 0
        %3470 = vmatpush1.bf16.msra.mxu0 0
        %3471 = vmatprep.subr.bf16.mxu0 0
        %3472 = vmatpush1.bf16.msra.mxu0 0
        %3473 = vmatprep.subr.bf16.mxu0 0
        %3474 = vmatpush1.bf16.msra.mxu0 0
        %3475 = vmatprep.subr.bf16.mxu0 0
        %3476 = vmatpush1.bf16.msra.mxu0 0
        %3477 = vmatprep.mubr.bf16.mxu0 0
        %3478 = vmatmul.mubr.bf16.gmra.mrb[0].mxu0 %v3208
        %v3479 = vpop.f32.mrb[0].mxu0
        %v3480 = vadd.f32 %v3320, %v3479
        %v3481 = vpop.f32.mrb[0].mxu0
        %v3482 = vpop.f32.mrb[0].mxu0
        %v3483 = vpop.f32.mrb[0].mxu0
        %3484 = vdwg.mxu0
        %v3489 = vunpack.c.l.b16 %v2813
        %v3490 = vunpack.c.l.b16 %v2814
        %v3491 = vunpack.c.l.b16 %v2815
        %v3492 = vunpack.c.l.b16 %v2816
        %v3493 = vpack.c.b16 %v3490, %v3489
        %v3494 = vpack.c.b16 %v3492, %v3491
        %3497 = vmatprep.subr.bf16.mxu0 0
        %3498 = vmatpush1.bf16.msra.mxu0 %v3493
        %3499 = vmatprep.subr.bf16.mxu0 0
        %3500 = vmatpush1.bf16.msra.mxu0 %v3494
        %3501 = vmatprep.subr.bf16.mxu0 0
        %3502 = vmatpush1.bf16.msra.mxu0 0
        %3503 = vmatprep.subr.bf16.mxu0 0
        %3504 = vmatpush1.bf16.msra.mxu0 0
        %3505 = vmatprep.subr.bf16.mxu0 0
        %3506 = vmatpush1.bf16.msra.mxu0 0
        %3507 = vmatprep.subr.bf16.mxu0 0
        %3508 = vmatpush1.bf16.msra.mxu0 0
        %3509 = vmatprep.subr.bf16.mxu0 0
        %3510 = vmatpush1.bf16.msra.mxu0 0
        %3511 = vmatprep.subr.bf16.mxu0 0
        %3512 = vmatpush1.bf16.msra.mxu0 0
        %3513 = vmatprep.subr.bf16.mxu0 0
        %3514 = vmatpush1.bf16.msra.mxu0 0
        %3515 = vmatprep.subr.bf16.mxu0 0
        %3516 = vmatpush1.bf16.msra.mxu0 0
        %3517 = vmatprep.subr.bf16.mxu0 0
        %3518 = vmatpush1.bf16.msra.mxu0 0
        %3519 = vmatprep.subr.bf16.mxu0 0
        %3520 = vmatpush1.bf16.msra.mxu0 0
        %3521 = vmatprep.subr.bf16.mxu0 0
        %3522 = vmatpush1.bf16.msra.mxu0 0
        %3523 = vmatprep.subr.bf16.mxu0 0
        %3524 = vmatpush1.bf16.msra.mxu0 0
        %3525 = vmatprep.subr.bf16.mxu0 0
        %3526 = vmatpush1.bf16.msra.mxu0 0
        %3527 = vmatprep.subr.bf16.mxu0 0
        %3528 = vmatpush1.bf16.msra.mxu0 0
        %3529 = vmatprep.mubr.bf16.mxu0 0
        %3530 = vmatmul.mubr.bf16.gmra.mrb[0].mxu0 %v3263
        %v3531 = vpop.f32.mrb[0].mxu0
        %v3532 = vadd.f32 %v3324, %v3531
        %v3533 = vpop.f32.mrb[0].mxu0
        %v3534 = vpop.f32.mrb[0].mxu0
        %v3535 = vpop.f32.mrb[0].mxu0
        %3536 = vdwg.mxu0
        %v3537 = vpack.c.bf16 %v2900, %v2900
        %v3538 = vpack.c.bf16 %v2952, %v2952
        %v3539 = vpack.c.bf16 %v3004, %v3004
        %v3540 = vpack.c.bf16 %v3056, %v3056
        %v3541 = vpack.c.bf16 %v3135, %v3135
        %v3542 = vpack.c.bf16 %v3190, %v3190
        %v3543 = vpack.c.bf16 %v3245, %v3245
        %v3544 = vpack.c.bf16 %v3300, %v3300
        %v3546 = vsel %vm2105, %v3537, 0
        %v3549 = vsel %vm2105, %v3541, 0
        %3551 = vmatprep.subr.bf16.mxu0 0
        %3552 = vmatpush1.bf16.xpose.msra.mxu0 %v3549
        %3553 = vmatprep.subr.bf16.mxu0 0
        %3554 = vmatpush1.bf16.xpose.msra.mxu0 0
        %3555 = vmatprep.subr.bf16.mxu0 0
        %3556 = vmatpush1.bf16.xpose.msra.mxu0 0
        %3557 = vmatprep.subr.bf16.mxu0 0
        %3558 = vmatpush1.bf16.xpose.msra.mxu0 0
        %3559 = vmatprep.subr.bf16.mxu0 0
        %3560 = vmatpush1.bf16.xpose.msra.mxu0 0
        %3561 = vmatprep.subr.bf16.mxu0 0
        %3562 = vmatpush1.bf16.xpose.msra.mxu0 0
        %3563 = vmatprep.subr.bf16.mxu0 0
        %3564 = vmatpush1.bf16.xpose.msra.mxu0 0
        %3565 = vmatprep.subr.bf16.mxu0 0
        %3566 = vmatpush1.bf16.xpose.msra.mxu0 0
        %3567 = vmatprep.subr.bf16.mxu0 0
        %3568 = vmatpush1.bf16.xpose.msra.mxu0 0
        %3569 = vmatprep.subr.bf16.mxu0 0
        %3570 = vmatpush1.bf16.xpose.msra.mxu0 0
        %3571 = vmatprep.subr.bf16.mxu0 0
        %3572 = vmatpush1.bf16.xpose.msra.mxu0 0
        %3573 = vmatprep.subr.bf16.mxu0 0
        %3574 = vmatpush1.bf16.xpose.msra.mxu0 0
        %3575 = vmatprep.subr.bf16.mxu0 0
        %3576 = vmatpush1.bf16.xpose.msra.mxu0 0
        %3577 = vmatprep.subr.bf16.mxu0 0
        %3578 = vmatpush1.bf16.xpose.msra.mxu0 0
        %3579 = vmatprep.subr.bf16.mxu0 0
        %3580 = vmatpush1.bf16.xpose.msra.mxu0 0
        %3581 = vmatprep.subr.bf16.mxu0 0
        %3582 = vmatpush1.bf16.xpose.msra.mxu0 0
        %3583 = vmatprep.mubr.bf16.mxu0 0
        %3584 = vmatmul.mubr.bf16.gmra.mrb[0].mxu0 %v3546
        %v3585 = vpop.f32.mrb[0].mxu0
        %v3586 = vadd.f32 0.0, %v3585
        %v3587 = vpop.f32.mrb[0].mxu0
        %v3588 = vpop.f32.mrb[0].mxu0
        %v3589 = vpop.f32.mrb[0].mxu0
        %3590 = vdwg.mxu0
        %v3592 = vsel %vm2105, %v3538, 0
        %v3595 = vsel %vm2105, %v3542, 0
        %3597 = vmatprep.subr.bf16.mxu0 0
        %3598 = vmatpush1.bf16.xpose.msra.mxu0 %v3595
        %3599 = vmatprep.subr.bf16.mxu0 0
        %3600 = vmatpush1.bf16.xpose.msra.mxu0 0
        %3601 = vmatprep.subr.bf16.mxu0 0
        %3602 = vmatpush1.bf16.xpose.msra.mxu0 0
        %3603 = vmatprep.subr.bf16.mxu0 0
        %3604 = vmatpush1.bf16.xpose.msra.mxu0 0
        %3605 = vmatprep.subr.bf16.mxu0 0
        %3606 = vmatpush1.bf16.xpose.msra.mxu0 0
        %3607 = vmatprep.subr.bf16.mxu0 0
        %3608 = vmatpush1.bf16.xpose.msra.mxu0 0
        %3609 = vmatprep.subr.bf16.mxu0 0
        %3610 = vmatpush1.bf16.xpose.msra.mxu0 0
        %3611 = vmatprep.subr.bf16.mxu0 0
        %3612 = vmatpush1.bf16.xpose.msra.mxu0 0
        %3613 = vmatprep.subr.bf16.mxu0 0
        %3614 = vmatpush1.bf16.xpose.msra.mxu0 0
        %3615 = vmatprep.subr.bf16.mxu0 0
        %3616 = vmatpush1.bf16.xpose.msra.mxu0 0
        %3617 = vmatprep.subr.bf16.mxu0 0
        %3618 = vmatpush1.bf16.xpose.msra.mxu0 0
        %3619 = vmatprep.subr.bf16.mxu0 0
        %3620 = vmatpush1.bf16.xpose.msra.mxu0 0
        %3621 = vmatprep.subr.bf16.mxu0 0
        %3622 = vmatpush1.bf16.xpose.msra.mxu0 0
        %3623 = vmatprep.subr.bf16.mxu0 0
        %3624 = vmatpush1.bf16.xpose.msra.mxu0 0
        %3625 = vmatprep.subr.bf16.mxu0 0
        %3626 = vmatpush1.bf16.xpose.msra.mxu0 0
        %3627 = vmatprep.subr.bf16.mxu0 0
        %3628 = vmatpush1.bf16.xpose.msra.mxu0 0
        %3629 = vmatprep.mubr.bf16.mxu0 0
        %3630 = vmatmul.mubr.bf16.gmra.mrb[0].mxu0 %v3592
        %v3631 = vpop.f32.mrb[0].mxu0
        %v3632 = vadd.f32 0.0, %v3631
        %v3633 = vpop.f32.mrb[0].mxu0
        %v3634 = vpop.f32.mrb[0].mxu0
        %v3635 = vpop.f32.mrb[0].mxu0
        %3636 = vdwg.mxu0
        %v3638 = vsel %vm2105, %v3539, 0
        %v3641 = vsel %vm2105, %v3543, 0
        %3643 = vmatprep.subr.bf16.mxu0 0
        %3644 = vmatpush1.bf16.xpose.msra.mxu0 %v3641
        %3645 = vmatprep.subr.bf16.mxu0 0
        %3646 = vmatpush1.bf16.xpose.msra.mxu0 0
        %3647 = vmatprep.subr.bf16.mxu0 0
        %3648 = vmatpush1.bf16.xpose.msra.mxu0 0
        %3649 = vmatprep.subr.bf16.mxu0 0
        %3650 = vmatpush1.bf16.xpose.msra.mxu0 0
        %3651 = vmatprep.subr.bf16.mxu0 0
        %3652 = vmatpush1.bf16.xpose.msra.mxu0 0
        %3653 = vmatprep.subr.bf16.mxu0 0
        %3654 = vmatpush1.bf16.xpose.msra.mxu0 0
        %3655 = vmatprep.subr.bf16.mxu0 0
        %3656 = vmatpush1.bf16.xpose.msra.mxu0 0
        %3657 = vmatprep.subr.bf16.mxu0 0
        %3658 = vmatpush1.bf16.xpose.msra.mxu0 0
        %3659 = vmatprep.subr.bf16.mxu0 0
        %3660 = vmatpush1.bf16.xpose.msra.mxu0 0
        %3661 = vmatprep.subr.bf16.mxu0 0
        %3662 = vmatpush1.bf16.xpose.msra.mxu0 0
        %3663 = vmatprep.subr.bf16.mxu0 0
        %3664 = vmatpush1.bf16.xpose.msra.mxu0 0
        %3665 = vmatprep.subr.bf16.mxu0 0
        %3666 = vmatpush1.bf16.xpose.msra.mxu0 0
        %3667 = vmatprep.subr.bf16.mxu0 0
        %3668 = vmatpush1.bf16.xpose.msra.mxu0 0
        %3669 = vmatprep.subr.bf16.mxu0 0
        %3670 = vmatpush1.bf16.xpose.msra.mxu0 0
        %3671 = vmatprep.subr.bf16.mxu0 0
        %3672 = vmatpush1.bf16.xpose.msra.mxu0 0
        %3673 = vmatprep.subr.bf16.mxu0 0
        %3674 = vmatpush1.bf16.xpose.msra.mxu0 0
        %3675 = vmatprep.mubr.bf16.mxu0 0
        %3676 = vmatmul.mubr.bf16.gmra.mrb[0].mxu0 %v3638
        %v3677 = vpop.f32.mrb[0].mxu0
        %v3678 = vadd.f32 0.0, %v3677
        %v3679 = vpop.f32.mrb[0].mxu0
        %v3680 = vpop.f32.mrb[0].mxu0
        %v3681 = vpop.f32.mrb[0].mxu0
        %3682 = vdwg.mxu0
        %v3684 = vsel %vm2105, %v3540, 0
        %v3687 = vsel %vm2105, %v3544, 0
        %3689 = vmatprep.subr.bf16.mxu0 0
        %3690 = vmatpush1.bf16.xpose.msra.mxu0 %v3687
        %3691 = vmatprep.subr.bf16.mxu0 0
        %3692 = vmatpush1.bf16.xpose.msra.mxu0 0
        %3693 = vmatprep.subr.bf16.mxu0 0
        %3694 = vmatpush1.bf16.xpose.msra.mxu0 0
        %3695 = vmatprep.subr.bf16.mxu0 0
        %3696 = vmatpush1.bf16.xpose.msra.mxu0 0
        %3697 = vmatprep.subr.bf16.mxu0 0
        %3698 = vmatpush1.bf16.xpose.msra.mxu0 0
        %3699 = vmatprep.subr.bf16.mxu0 0
        %3700 = vmatpush1.bf16.xpose.msra.mxu0 0
        %3701 = vmatprep.subr.bf16.mxu0 0
        %3702 = vmatpush1.bf16.xpose.msra.mxu0 0
        %3703 = vmatprep.subr.bf16.mxu0 0
        %3704 = vmatpush1.bf16.xpose.msra.mxu0 0
        %3705 = vmatprep.subr.bf16.mxu0 0
        %3706 = vmatpush1.bf16.xpose.msra.mxu0 0
        %3707 = vmatprep.subr.bf16.mxu0 0
        %3708 = vmatpush1.bf16.xpose.msra.mxu0 0
        %3709 = vmatprep.subr.bf16.mxu0 0
        %3710 = vmatpush1.bf16.xpose.msra.mxu0 0
        %3711 = vmatprep.subr.bf16.mxu0 0
        %3712 = vmatpush1.bf16.xpose.msra.mxu0 0
        %3713 = vmatprep.subr.bf16.mxu0 0
        %3714 = vmatpush1.bf16.xpose.msra.mxu0 0
        %3715 = vmatprep.subr.bf16.mxu0 0
        %3716 = vmatpush1.bf16.xpose.msra.mxu0 0
        %3717 = vmatprep.subr.bf16.mxu0 0
        %3718 = vmatpush1.bf16.xpose.msra.mxu0 0
        %3719 = vmatprep.subr.bf16.mxu0 0
        %3720 = vmatpush1.bf16.xpose.msra.mxu0 0
        %3721 = vmatprep.mubr.bf16.mxu0 0
        %3722 = vmatmul.mubr.bf16.gmra.mrb[0].mxu0 %v3684
        %v3723 = vpop.f32.mrb[0].mxu0
        %v3724 = vadd.f32 0.0, %v3723
        %v3725 = vpop.f32.mrb[0].mxu0
        %v3726 = vpop.f32.mrb[0].mxu0
        %v3727 = vpop.f32.mrb[0].mxu0
        %3728 = vdwg.mxu0
        %v3729 = vsel %vm2105, %v3586, -inf
        %3730 = vmax.xlane.f32.xlu0 %v3729
        %v3731 = vpop.xlane.xlu0 %3730
        %v3732 = vsel %vm2105, %v3632, -inf
        %3733 = vmax.xlane.f32.xlu0 %v3732
        %v3734 = vpop.xlane.xlu0 %3733
        %v3735 = vsel %vm2105, %v3678, -inf
        %3736 = vmax.xlane.f32.xlu0 %v3735
        %v3737 = vpop.xlane.xlu0 %3736
        %v3738 = vsel %vm2105, %v3724, -inf
        %3739 = vmax.xlane.f32.xlu0 %v3738
        %v3740 = vpop.xlane.xlu0 %3739
        %v3741 = vsub.f32 %v3586, %v3731
        %v3742 = vsub.f32 %v3632, %v3734
        %v3743 = vsub.f32 %v3678, %v3737
        %v3744 = vsub.f32 %v3724, %v3740
        %v3745 = vmul.f32 %v3741, 1.442695
        %v3746 = vpow.pop %v3745
        %v3747 = vmul.f32 %v3742, 1.442695
        %v3748 = vpow.pop %v3747
        %v3749 = vmul.f32 %v3743, 1.442695
        %v3750 = vpow.pop %v3749
        %v3751 = vmul.f32 %v3744, 1.442695
        %v3752 = vpow.pop %v3751
        %v3753 = vsel %vm2105, %v3746, 0.0
        %3754 = vadd.xlane.f32.xlu0 %v3753
        %v3755 = vpop.xlane.xlu0 %3754
        %v3756 = vsel %vm2105, %v3748, 0.0
        %3757 = vadd.xlane.f32.xlu0 %v3756
        %v3758 = vpop.xlane.xlu0 %3757
        %v3759 = vsel %vm2105, %v3750, 0.0
        %3760 = vadd.xlane.f32.xlu0 %v3759
        %v3761 = vpop.xlane.xlu0 %3760
        %v3762 = vsel %vm2105, %v3752, 0.0
        %3763 = vadd.xlane.f32.xlu0 %v3762
        %v3764 = vpop.xlane.xlu0 %3763
        %v3765 = vrcp.pop %v3755
        %v3766 = vrcp.pop %v3758
        %v3767 = vrcp.pop %v3761
        %v3768 = vrcp.pop %v3764
        %v3769 = vmul.f32 %v3746, %v3765
        %v3770 = vmul.f32 %v3748, %v3766
        %v3771 = vmul.f32 %v3750, %v3767
        %v3772 = vmul.f32 %v3752, %v3768
        %v3773 = vpack.c.bf16 %v3769, %v3769
        %v3774 = vpack.c.bf16 %v3770, %v3770
        %v3775 = vpack.c.bf16 %v3771, %v3771
        %v3776 = vpack.c.bf16 %v3772, %v3772
        %v3777 = vpack.c.bf16 %v3376, %v3376
        %v3778 = vpack.c.bf16 %v3428, %v3428
        %v3779 = vpack.c.bf16 %v3480, %v3480
        %v3780 = vpack.c.bf16 %v3532, %v3532
        %v3782 = vsel %vm2105, %v3773, 0
        %v3785 = vsel %vm2345, %v3777, 0
        %3787 = vmatprep.subr.bf16.mxu0 0
        %3788 = vmatpush1.bf16.msra.mxu0 %v3785
        %3789 = vmatprep.subr.bf16.mxu0 0
        %3790 = vmatpush1.bf16.msra.mxu0 0
        %3791 = vmatprep.subr.bf16.mxu0 0
        %3792 = vmatpush1.bf16.msra.mxu0 0
        %3793 = vmatprep.subr.bf16.mxu0 0
        %3794 = vmatpush1.bf16.msra.mxu0 0
        %3795 = vmatprep.subr.bf16.mxu0 0
        %3796 = vmatpush1.bf16.msra.mxu0 0
        %3797 = vmatprep.subr.bf16.mxu0 0
        %3798 = vmatpush1.bf16.msra.mxu0 0
        %3799 = vmatprep.subr.bf16.mxu0 0
        %3800 = vmatpush1.bf16.msra.mxu0 0
        %3801 = vmatprep.subr.bf16.mxu0 0
        %3802 = vmatpush1.bf16.msra.mxu0 0
        %3803 = vmatprep.subr.bf16.mxu0 0
        %3804 = vmatpush1.bf16.msra.mxu0 0
        %3805 = vmatprep.subr.bf16.mxu0 0
        %3806 = vmatpush1.bf16.msra.mxu0 0
        %3807 = vmatprep.subr.bf16.mxu0 0
        %3808 = vmatpush1.bf16.msra.mxu0 0
        %3809 = vmatprep.subr.bf16.mxu0 0
        %3810 = vmatpush1.bf16.msra.mxu0 0
        %3811 = vmatprep.subr.bf16.mxu0 0
        %3812 = vmatpush1.bf16.msra.mxu0 0
        %3813 = vmatprep.subr.bf16.mxu0 0
        %3814 = vmatpush1.bf16.msra.mxu0 0
        %3815 = vmatprep.subr.bf16.mxu0 0
        %3816 = vmatpush1.bf16.msra.mxu0 0
        %3817 = vmatprep.subr.bf16.mxu0 0
        %3818 = vmatpush1.bf16.msra.mxu0 0
        %3819 = vmatprep.mubr.bf16.mxu0 0
        %3820 = vmatmul.mubr.bf16.gmra.mrb[0].mxu0 %v3782
        %v3821 = vpop.f32.mrb[0].mxu0
        %v3822 = vadd.f32 0.0, %v3821
        %v3823 = vpop.f32.mrb[0].mxu0
        %v3824 = vpop.f32.mrb[0].mxu0
        %v3825 = vpop.f32.mrb[0].mxu0
        %3826 = vdwg.mxu0
        %v3828 = vsel %vm2105, %v3774, 0
        %v3831 = vsel %vm2345, %v3778, 0
        %3833 = vmatprep.subr.bf16.mxu0 0
        %3834 = vmatpush1.bf16.msra.mxu0 %v3831
        %3835 = vmatprep.subr.bf16.mxu0 0
        %3836 = vmatpush1.bf16.msra.mxu0 0
        %3837 = vmatprep.subr.bf16.mxu0 0
        %3838 = vmatpush1.bf16.msra.mxu0 0
        %3839 = vmatprep.subr.bf16.mxu0 0
        %3840 = vmatpush1.bf16.msra.mxu0 0
        %3841 = vmatprep.subr.bf16.mxu0 0
        %3842 = vmatpush1.bf16.msra.mxu0 0
        %3843 = vmatprep.subr.bf16.mxu0 0
        %3844 = vmatpush1.bf16.msra.mxu0 0
        %3845 = vmatprep.subr.bf16.mxu0 0
        %3846 = vmatpush1.bf16.msra.mxu0 0
        %3847 = vmatprep.subr.bf16.mxu0 0
        %3848 = vmatpush1.bf16.msra.mxu0 0
        %3849 = vmatprep.subr.bf16.mxu0 0
        %3850 = vmatpush1.bf16.msra.mxu0 0
        %3851 = vmatprep.subr.bf16.mxu0 0
        %3852 = vmatpush1.bf16.msra.mxu0 0
        %3853 = vmatprep.subr.bf16.mxu0 0
        %3854 = vmatpush1.bf16.msra.mxu0 0
        %3855 = vmatprep.subr.bf16.mxu0 0
        %3856 = vmatpush1.bf16.msra.mxu0 0
        %3857 = vmatprep.subr.bf16.mxu0 0
        %3858 = vmatpush1.bf16.msra.mxu0 0
        %3859 = vmatprep.subr.bf16.mxu0 0
        %3860 = vmatpush1.bf16.msra.mxu0 0
        %3861 = vmatprep.subr.bf16.mxu0 0
        %3862 = vmatpush1.bf16.msra.mxu0 0
        %3863 = vmatprep.subr.bf16.mxu0 0
        %3864 = vmatpush1.bf16.msra.mxu0 0
        %3865 = vmatprep.mubr.bf16.mxu0 0
        %3866 = vmatmul.mubr.bf16.gmra.mrb[0].mxu0 %v3828
        %v3867 = vpop.f32.mrb[0].mxu0
        %v3868 = vadd.f32 0.0, %v3867
        %v3869 = vpop.f32.mrb[0].mxu0
        %v3870 = vpop.f32.mrb[0].mxu0
        %v3871 = vpop.f32.mrb[0].mxu0
        %3872 = vdwg.mxu0
        %v3874 = vsel %vm2105, %v3775, 0
        %v3877 = vsel %vm2345, %v3779, 0
        %3879 = vmatprep.subr.bf16.mxu0 0
        %3880 = vmatpush1.bf16.msra.mxu0 %v3877
        %3881 = vmatprep.subr.bf16.mxu0 0
        %3882 = vmatpush1.bf16.msra.mxu0 0
        %3883 = vmatprep.subr.bf16.mxu0 0
        %3884 = vmatpush1.bf16.msra.mxu0 0
        %3885 = vmatprep.subr.bf16.mxu0 0
        %3886 = vmatpush1.bf16.msra.mxu0 0
        %3887 = vmatprep.subr.bf16.mxu0 0
        %3888 = vmatpush1.bf16.msra.mxu0 0
        %3889 = vmatprep.subr.bf16.mxu0 0
        %3890 = vmatpush1.bf16.msra.mxu0 0
        %3891 = vmatprep.subr.bf16.mxu0 0
        %3892 = vmatpush1.bf16.msra.mxu0 0
        %3893 = vmatprep.subr.bf16.mxu0 0
        %3894 = vmatpush1.bf16.msra.mxu0 0
        %3895 = vmatprep.subr.bf16.mxu0 0
        %3896 = vmatpush1.bf16.msra.mxu0 0
        %3897 = vmatprep.subr.bf16.mxu0 0
        %3898 = vmatpush1.bf16.msra.mxu0 0
        %3899 = vmatprep.subr.bf16.mxu0 0
        %3900 = vmatpush1.bf16.msra.mxu0 0
        %3901 = vmatprep.subr.bf16.mxu0 0
        %3902 = vmatpush1.bf16.msra.mxu0 0
        %3903 = vmatprep.subr.bf16.mxu0 0
        %3904 = vmatpush1.bf16.msra.mxu0 0
        %3905 = vmatprep.subr.bf16.mxu0 0
        %3906 = vmatpush1.bf16.msra.mxu0 0
        %3907 = vmatprep.subr.bf16.mxu0 0
        %3908 = vmatpush1.bf16.msra.mxu0 0
        %3909 = vmatprep.subr.bf16.mxu0 0
        %3910 = vmatpush1.bf16.msra.mxu0 0
        %3911 = vmatprep.mubr.bf16.mxu0 0
        %3912 = vmatmul.mubr.bf16.gmra.mrb[0].mxu0 %v3874
        %v3913 = vpop.f32.mrb[0].mxu0
        %v3914 = vadd.f32 0.0, %v3913
        %v3915 = vpop.f32.mrb[0].mxu0
        %v3916 = vpop.f32.mrb[0].mxu0
        %v3917 = vpop.f32.mrb[0].mxu0
        %3918 = vdwg.mxu0
        %v3920 = vsel %vm2105, %v3776, 0
        %v3923 = vsel %vm2345, %v3780, 0
        %3925 = vmatprep.subr.bf16.mxu0 0
        %3926 = vmatpush1.bf16.msra.mxu0 %v3923
        %3927 = vmatprep.subr.bf16.mxu0 0
        %3928 = vmatpush1.bf16.msra.mxu0 0
        %3929 = vmatprep.subr.bf16.mxu0 0
        %3930 = vmatpush1.bf16.msra.mxu0 0
        %3931 = vmatprep.subr.bf16.mxu0 0
        %3932 = vmatpush1.bf16.msra.mxu0 0
        %3933 = vmatprep.subr.bf16.mxu0 0
        %3934 = vmatpush1.bf16.msra.mxu0 0
        %3935 = vmatprep.subr.bf16.mxu0 0
        %3936 = vmatpush1.bf16.msra.mxu0 0
        %3937 = vmatprep.subr.bf16.mxu0 0
        %3938 = vmatpush1.bf16.msra.mxu0 0
        %3939 = vmatprep.subr.bf16.mxu0 0
        %3940 = vmatpush1.bf16.msra.mxu0 0
        %3941 = vmatprep.subr.bf16.mxu0 0
        %3942 = vmatpush1.bf16.msra.mxu0 0
        %3943 = vmatprep.subr.bf16.mxu0 0
        %3944 = vmatpush1.bf16.msra.mxu0 0
        %3945 = vmatprep.subr.bf16.mxu0 0
        %3946 = vmatpush1.bf16.msra.mxu0 0
        %3947 = vmatprep.subr.bf16.mxu0 0
        %3948 = vmatpush1.bf16.msra.mxu0 0
        %3949 = vmatprep.subr.bf16.mxu0 0
        %3950 = vmatpush1.bf16.msra.mxu0 0
        %3951 = vmatprep.subr.bf16.mxu0 0
        %3952 = vmatpush1.bf16.msra.mxu0 0
        %3953 = vmatprep.subr.bf16.mxu0 0
        %3954 = vmatpush1.bf16.msra.mxu0 0
        %3955 = vmatprep.subr.bf16.mxu0 0
        %3956 = vmatpush1.bf16.msra.mxu0 0
        %3957 = vmatprep.mubr.bf16.mxu0 0
        %3958 = vmatmul.mubr.bf16.gmra.mrb[0].mxu0 %v3920
        %v3959 = vpop.f32.mrb[0].mxu0
        %v3960 = vadd.f32 0.0, %v3959
        %v3961 = vpop.f32.mrb[0].mxu0
        %v3962 = vpop.f32.mrb[0].mxu0
        %v3963 = vpop.f32.mrb[0].mxu0
        %3964 = vdwg.mxu0
        %v3965 = vpack.c.bf16 %v3822, %v3822
        %v3966 = vpack.c.bf16 %v3868, %v3868
        %v3967 = vpack.c.bf16 %v3914, %v3914
        %v3968 = vpack.c.bf16 %v3960, %v3960
        %v3970 = vsel %vm2105, %v3965, 0
        %v3973 = vsel %vm2345, %v2821, 0
        %3975 = vmatprep.subr.bf16.mxu0 0
        %3976 = vmatpush1.bf16.msra.mxu0 %v3973
        %3977 = vmatprep.subr.bf16.mxu0 0
        %3978 = vmatpush1.bf16.msra.mxu0 0
        %3979 = vmatprep.subr.bf16.mxu0 0
        %3980 = vmatpush1.bf16.msra.mxu0 0
        %3981 = vmatprep.subr.bf16.mxu0 0
        %3982 = vmatpush1.bf16.msra.mxu0 0
        %3983 = vmatprep.subr.bf16.mxu0 0
        %3984 = vmatpush1.bf16.msra.mxu0 0
        %3985 = vmatprep.subr.bf16.mxu0 0
        %3986 = vmatpush1.bf16.msra.mxu0 0
        %3987 = vmatprep.subr.bf16.mxu0 0
        %3988 = vmatpush1.bf16.msra.mxu0 0
        %3989 = vmatprep.subr.bf16.mxu0 0
        %3990 = vmatpush1.bf16.msra.mxu0 0
        %3991 = vmatprep.subr.bf16.mxu0 0
        %3992 = vmatpush1.bf16.msra.mxu0 0
        %3993 = vmatprep.subr.bf16.mxu0 0
        %3994 = vmatpush1.bf16.msra.mxu0 0
        %3995 = vmatprep.subr.bf16.mxu0 0
        %3996 = vmatpush1.bf16.msra.mxu0 0
        %3997 = vmatprep.subr.bf16.mxu0 0
        %3998 = vmatpush1.bf16.msra.mxu0 0
        %3999 = vmatprep.subr.bf16.mxu0 0
        %4000 = vmatpush1.bf16.msra.mxu0 0
        %4001 = vmatprep.subr.bf16.mxu0 0
        %4002 = vmatpush1.bf16.msra.mxu0 0
        %4003 = vmatprep.subr.bf16.mxu0 0
        %4004 = vmatpush1.bf16.msra.mxu0 0
        %4005 = vmatprep.subr.bf16.mxu0 0
        %4006 = vmatpush1.bf16.msra.mxu0 0
        %4007 = vmatprep.mubr.bf16.mxu0 0
        %4008 = vmatmul.mubr.bf16.gmra.mrb[0].mxu0 %v3970
        %v4009 = vpop.f32.mrb[0].mxu0
        %v4010 = vadd.f32 0.0, %v4009
        %v4011 = vpop.f32.mrb[0].mxu0
        %v4012 = vpop.f32.mrb[0].mxu0
        %v4013 = vpop.f32.mrb[0].mxu0
        %4014 = vdwg.mxu0
        %v4016 = vsel %vm2105, %v3966, 0
        %v4019 = vsel %vm2345, %v2822, 0
        %4021 = vmatprep.subr.bf16.mxu0 0
        %4022 = vmatpush1.bf16.msra.mxu0 %v4019
        %4023 = vmatprep.subr.bf16.mxu0 0
        %4024 = vmatpush1.bf16.msra.mxu0 0
        %4025 = vmatprep.subr.bf16.mxu0 0
        %4026 = vmatpush1.bf16.msra.mxu0 0
        %4027 = vmatprep.subr.bf16.mxu0 0
        %4028 = vmatpush1.bf16.msra.mxu0 0
        %4029 = vmatprep.subr.bf16.mxu0 0
        %4030 = vmatpush1.bf16.msra.mxu0 0
        %4031 = vmatprep.subr.bf16.mxu0 0
        %4032 = vmatpush1.bf16.msra.mxu0 0
        %4033 = vmatprep.subr.bf16.mxu0 0
        %4034 = vmatpush1.bf16.msra.mxu0 0
        %4035 = vmatprep.subr.bf16.mxu0 0
        %4036 = vmatpush1.bf16.msra.mxu0 0
        %4037 = vmatprep.subr.bf16.mxu0 0
        %4038 = vmatpush1.bf16.msra.mxu0 0
        %4039 = vmatprep.subr.bf16.mxu0 0
        %4040 = vmatpush1.bf16.msra.mxu0 0
        %4041 = vmatprep.subr.bf16.mxu0 0
        %4042 = vmatpush1.bf16.msra.mxu0 0
        %4043 = vmatprep.subr.bf16.mxu0 0
        %4044 = vmatpush1.bf16.msra.mxu0 0
        %4045 = vmatprep.subr.bf16.mxu0 0
        %4046 = vmatpush1.bf16.msra.mxu0 0
        %4047 = vmatprep.subr.bf16.mxu0 0
        %4048 = vmatpush1.bf16.msra.mxu0 0
        %4049 = vmatprep.subr.bf16.mxu0 0
        %4050 = vmatpush1.bf16.msra.mxu0 0
        %4051 = vmatprep.subr.bf16.mxu0 0
        %4052 = vmatpush1.bf16.msra.mxu0 0
        %4053 = vmatprep.mubr.bf16.mxu0 0
        %4054 = vmatmul.mubr.bf16.gmra.mrb[0].mxu0 %v4016
        %v4055 = vpop.f32.mrb[0].mxu0
        %v4056 = vadd.f32 0.0, %v4055
        %v4057 = vpop.f32.mrb[0].mxu0
        %v4058 = vpop.f32.mrb[0].mxu0
        %v4059 = vpop.f32.mrb[0].mxu0
        %4060 = vdwg.mxu0
        %v4062 = vsel %vm2105, %v3967, 0
        %v4065 = vsel %vm2345, %v2823, 0
        %4067 = vmatprep.subr.bf16.mxu0 0
        %4068 = vmatpush1.bf16.msra.mxu0 %v4065
        %4069 = vmatprep.subr.bf16.mxu0 0
        %4070 = vmatpush1.bf16.msra.mxu0 0
        %4071 = vmatprep.subr.bf16.mxu0 0
        %4072 = vmatpush1.bf16.msra.mxu0 0
        %4073 = vmatprep.subr.bf16.mxu0 0
        %4074 = vmatpush1.bf16.msra.mxu0 0
        %4075 = vmatprep.subr.bf16.mxu0 0
        %4076 = vmatpush1.bf16.msra.mxu0 0
        %4077 = vmatprep.subr.bf16.mxu0 0
        %4078 = vmatpush1.bf16.msra.mxu0 0
        %4079 = vmatprep.subr.bf16.mxu0 0
        %4080 = vmatpush1.bf16.msra.mxu0 0
        %4081 = vmatprep.subr.bf16.mxu0 0
        %4082 = vmatpush1.bf16.msra.mxu0 0
        %4083 = vmatprep.subr.bf16.mxu0 0
        %4084 = vmatpush1.bf16.msra.mxu0 0
        %4085 = vmatprep.subr.bf16.mxu0 0
        %4086 = vmatpush1.bf16.msra.mxu0 0
        %4087 = vmatprep.subr.bf16.mxu0 0
        %4088 = vmatpush1.bf16.msra.mxu0 0
        %4089 = vmatprep.subr.bf16.mxu0 0
        %4090 = vmatpush1.bf16.msra.mxu0 0
        %4091 = vmatprep.subr.bf16.mxu0 0
        %4092 = vmatpush1.bf16.msra.mxu0 0
        %4093 = vmatprep.subr.bf16.mxu0 0
        %4094 = vmatpush1.bf16.msra.mxu0 0
        %4095 = vmatprep.subr.bf16.mxu0 0
        %4096 = vmatpush1.bf16.msra.mxu0 0
        %4097 = vmatprep.subr.bf16.mxu0 0
        %4098 = vmatpush1.bf16.msra.mxu0 0
        %4099 = vmatprep.mubr.bf16.mxu0 0
        %4100 = vmatmul.mubr.bf16.gmra.mrb[0].mxu0 %v4062
        %v4101 = vpop.f32.mrb[0].mxu0
        %v4102 = vadd.f32 0.0, %v4101
        %v4103 = vpop.f32.mrb[0].mxu0
        %v4104 = vpop.f32.mrb[0].mxu0
        %v4105 = vpop.f32.mrb[0].mxu0
        %4106 = vdwg.mxu0
        %v4108 = vsel %vm2105, %v3968, 0
        %v4111 = vsel %vm2345, %v2824, 0
        %4113 = vmatprep.subr.bf16.mxu0 0
        %4114 = vmatpush1.bf16.msra.mxu0 %v4111
        %4115 = vmatprep.subr.bf16.mxu0 0
        %4116 = vmatpush1.bf16.msra.mxu0 0
        %4117 = vmatprep.subr.bf16.mxu0 0
        %4118 = vmatpush1.bf16.msra.mxu0 0
        %4119 = vmatprep.subr.bf16.mxu0 0
        %4120 = vmatpush1.bf16.msra.mxu0 0
        %4121 = vmatprep.subr.bf16.mxu0 0
        %4122 = vmatpush1.bf16.msra.mxu0 0
        %4123 = vmatprep.subr.bf16.mxu0 0
        %4124 = vmatpush1.bf16.msra.mxu0 0
        %4125 = vmatprep.subr.bf16.mxu0 0
        %4126 = vmatpush1.bf16.msra.mxu0 0
        %4127 = vmatprep.subr.bf16.mxu0 0
        %4128 = vmatpush1.bf16.msra.mxu0 0
        %4129 = vmatprep.subr.bf16.mxu0 0
        %4130 = vmatpush1.bf16.msra.mxu0 0
        %4131 = vmatprep.subr.bf16.mxu0 0
        %4132 = vmatpush1.bf16.msra.mxu0 0
        %4133 = vmatprep.subr.bf16.mxu0 0
        %4134 = vmatpush1.bf16.msra.mxu0 0
        %4135 = vmatprep.subr.bf16.mxu0 0
        %4136 = vmatpush1.bf16.msra.mxu0 0
        %4137 = vmatprep.subr.bf16.mxu0 0
        %4138 = vmatpush1.bf16.msra.mxu0 0
        %4139 = vmatprep.subr.bf16.mxu0 0
        %4140 = vmatpush1.bf16.msra.mxu0 0
        %4141 = vmatprep.subr.bf16.mxu0 0
        %4142 = vmatpush1.bf16.msra.mxu0 0
        %4143 = vmatprep.subr.bf16.mxu0 0
        %4144 = vmatpush1.bf16.msra.mxu0 0
        %4145 = vmatprep.mubr.bf16.mxu0 0
        %4146 = vmatmul.mubr.bf16.gmra.mrb[0].mxu0 %v4108
        %v4147 = vpop.f32.mrb[0].mxu0
        %v4148 = vadd.f32 0.0, %v4147
        %v4149 = vpop.f32.mrb[0].mxu0
        %v4150 = vpop.f32.mrb[0].mxu0
        %v4151 = vpop.f32.mrb[0].mxu0
        %4152 = vdwg.mxu0
        %v4153 = vsel %vm1433, %v4010, 0.0
        %v4154 = vsel %vm1433, %v4056, 0.0
        %v4155 = vadd.f32 %v4153, %v4154
        %v4156 = vsel %vm1433, %v4102, 0.0
        %v4157 = vadd.f32 %v4155, %v4156
        %v4158 = vsel %vm1433, %v4148, 0.0
        %v4159 = vadd.f32 %v4157, %v4158
        %v4161 = vlaneseq
        %v4162 = vshrl.u32 %v4161, 7
        %v4163 = vsub.s32 0, %v4162
        %v4164 = vrot.slane %v2825, %v4163
        %v4166 = vadd.f32 %v4159, %v4164
        %v4167 = vld [vmem:[%s1302] sm:$0x1]
        %v4168 = vld [vmem:[%s1305] sm:$0x1]
        %v4169 = vadd.f32 %v2759, %v4166
        %v4170 = vsel %vm1433, %v4169, 0.0
        %4171 = vadd.xlane.f32.xlu0 %v4170
        %v4172 = vpop.xlane.xlu0 %4171
        %v4173 = vmul.f32 %v4172, %v2735
        %v4174 = vsub.f32 %v4169, %v4173
        %v4175 = vmul.f32 %v4174, %v4174
        %v4176 = vsel %vm1433, %v4175, 0.0
        %4177 = vadd.xlane.f32.xlu0 %v4176
        %v4178 = vpop.xlane.xlu0 %4177
        %v4179 = vmul.f32 %v4178, %v2735
        %v4180 = vadd.f32 %v4179, 1e-05
        %v4181 = vrsqrt.pop %v4180
        %v4182 = vmul.f32 %v4174, %v4181
        %v4184 = vlaneseq
        %v4185 = vshrl.u32 %v4184, 7
        %v4186 = vsub.s32 0, %v4185
        %v4187 = vrot.slane %v4167, %v4186
        %v4189 = vmul.f32 %v4182, %v4187
        %v4191 = vlaneseq
        %v4192 = vshrl.u32 %v4191, 7
        %v4193 = vsub.s32 0, %v4192
        %v4194 = vrot.slane %v4168, %v4193
        %v4196 = vadd.f32 %v4189, %v4194
        %v4197 = vpack.c.bf16 %v4196, %v4196
        %v4198 = vld [vmem:[%s1282] sm:$0xf]
        %v4199 = vld [vmem:[%s1282 + $0x4] sm:$0xf]
        %v4200 = vld [vmem:[%s1282 + $0x8] sm:$0xf]
        %v4201 = vld [vmem:[%s1282 + $0xc] sm:$0xf]
        %v4202 = vld [vmem:[%s1285] sm:$0x1]
        %v4203 = vld [vmem:[%s1290] sm:$0xf]
        %v4204 = vld [vmem:[%s1290 + $0x4] sm:$0xf]
        %v4205 = vld [vmem:[%s1290 + $0x8] sm:$0xf]
        %v4206 = vld [vmem:[%s1290 + $0xc] sm:$0xf]
        %v4207 = vld [vmem:[%s1290 + $0x10] sm:$0xf]
        %v4208 = vld [vmem:[%s1290 + $0x14] sm:$0xf]
        %v4209 = vld [vmem:[%s1290 + $0x18] sm:$0xf]
        %v4210 = vld [vmem:[%s1290 + $0x1c] sm:$0xf]
        %v4211 = vld [vmem:[%s1293] sm:$0x1]
        %v4213 = vlaneseq
        %v4214 = vshrl.u32 %v4213, 7
        %v4215 = vsub.s32 0, %v4214
        %v4216 = vrot.slane %v4202, %v4215
        %v4222 = vunpack.c.l.b16 %v4198
        %v4223 = vunpack.c.l.b16 %v4199
        %v4224 = vunpack.c.l.b16 %v4200
        %v4225 = vunpack.c.l.b16 %v4201
        %v4226 = vpack.c.b16 %v4223, %v4222
        %v4227 = vpack.c.b16 %v4225, %v4224
        %v4231 = vsel %vm1433, %v4197, 0
        %4233 = vmatprep.subr.bf16.mxu0 0
        %4234 = vmatpush1.bf16.msra.mxu0 %v4226
        %4235 = vmatprep.subr.bf16.mxu0 0
        %4236 = vmatpush1.bf16.msra.mxu0 %v4227
        %4237 = vmatprep.subr.bf16.mxu0 0
        %4238 = vmatpush1.bf16.msra.mxu0 0
        %4239 = vmatprep.subr.bf16.mxu0 0
        %4240 = vmatpush1.bf16.msra.mxu0 0
        %4241 = vmatprep.subr.bf16.mxu0 0
        %4242 = vmatpush1.bf16.msra.mxu0 0
        %4243 = vmatprep.subr.bf16.mxu0 0
        %4244 = vmatpush1.bf16.msra.mxu0 0
        %4245 = vmatprep.subr.bf16.mxu0 0
        %4246 = vmatpush1.bf16.msra.mxu0 0
        %4247 = vmatprep.subr.bf16.mxu0 0
        %4248 = vmatpush1.bf16.msra.mxu0 0
        %4249 = vmatprep.subr.bf16.mxu0 0
        %4250 = vmatpush1.bf16.msra.mxu0 0
        %4251 = vmatprep.subr.bf16.mxu0 0
        %4252 = vmatpush1.bf16.msra.mxu0 0
        %4253 = vmatprep.subr.bf16.mxu0 0
        %4254 = vmatpush1.bf16.msra.mxu0 0
        %4255 = vmatprep.subr.bf16.mxu0 0
        %4256 = vmatpush1.bf16.msra.mxu0 0
        %4257 = vmatprep.subr.bf16.mxu0 0
        %4258 = vmatpush1.bf16.msra.mxu0 0
        %4259 = vmatprep.subr.bf16.mxu0 0
        %4260 = vmatpush1.bf16.msra.mxu0 0
        %4261 = vmatprep.subr.bf16.mxu0 0
        %4262 = vmatpush1.bf16.msra.mxu0 0
        %4263 = vmatprep.subr.bf16.mxu0 0
        %4264 = vmatpush1.bf16.msra.mxu0 0
        %4265 = vmatprep.mubr.bf16.mxu0 0
        %4266 = vmatmul.mubr.bf16.gmra.mrb[0].mxu0 %v4231
        %v4267 = vpop.f32.mrb[0].mxu0
        %v4268 = vadd.f32 %v4216, %v4267
        %v4269 = vpop.f32.mrb[0].mxu0
        %v4270 = vpop.f32.mrb[0].mxu0
        %v4271 = vpop.f32.mrb[0].mxu0
        %4272 = vdwg.mxu0
        %v4273 = vmax.f32 %v4268, 0.0
        %v4274 = vpack.c.bf16 %v4273, %v4273
        %v4276 = vlaneseq
        %v4277 = vshrl.u32 %v4276, 7
        %v4278 = vsub.s32 0, %v4277
        %v4279 = vrot.slane %v4211, %v4278
        %v4289 = vunpack.c.l.b16 %v4203
        %v4290 = vunpack.c.l.b16 %v4204
        %v4291 = vunpack.c.l.b16 %v4205
        %v4292 = vunpack.c.l.b16 %v4206
        %v4293 = vunpack.c.l.b16 %v4207
        %v4294 = vunpack.c.l.b16 %v4208
        %v4295 = vunpack.c.l.b16 %v4209
        %v4296 = vunpack.c.l.b16 %v4210
        %v4297 = vpack.c.b16 %v4290, %v4289
        %v4298 = vpack.c.b16 %v4292, %v4291
        %v4299 = vpack.c.b16 %v4294, %v4293
        %v4300 = vpack.c.b16 %v4296, %v4295
        %vm4305 = vcmask 523264
        %v4307 = vsel %vm4305, %v4274, 0
        %4309 = vmatprep.subr.bf16.mxu0 0
        %4310 = vmatpush1.bf16.msra.mxu0 %v4297
        %4311 = vmatprep.subr.bf16.mxu0 0
        %4312 = vmatpush1.bf16.msra.mxu0 %v4298
        %4313 = vmatprep.subr.bf16.mxu0 0
        %4314 = vmatpush1.bf16.msra.mxu0 %v4299
        %4315 = vmatprep.subr.bf16.mxu0 0
        %4316 = vmatpush1.bf16.msra.mxu0 %v4300
        %4317 = vmatprep.subr.bf16.mxu0 0
        %4318 = vmatpush1.bf16.msra.mxu0 0
        %4319 = vmatprep.subr.bf16.mxu0 0
        %4320 = vmatpush1.bf16.msra.mxu0 0
        %4321 = vmatprep.subr.bf16.mxu0 0
        %4322 = vmatpush1.bf16.msra.mxu0 0
        %4323 = vmatprep.subr.bf16.mxu0 0
        %4324 = vmatpush1.bf16.msra.mxu0 0
        %4325 = vmatprep.subr.bf16.mxu0 0
        %4326 = vmatpush1.bf16.msra.mxu0 0
        %4327 = vmatprep.subr.bf16.mxu0 0
        %4328 = vmatpush1.bf16.msra.mxu0 0
        %4329 = vmatprep.subr.bf16.mxu0 0
        %4330 = vmatpush1.bf16.msra.mxu0 0
        %4331 = vmatprep.subr.bf16.mxu0 0
        %4332 = vmatpush1.bf16.msra.mxu0 0
        %4333 = vmatprep.subr.bf16.mxu0 0
        %4334 = vmatpush1.bf16.msra.mxu0 0
        %4335 = vmatprep.subr.bf16.mxu0 0
        %4336 = vmatpush1.bf16.msra.mxu0 0
        %4337 = vmatprep.subr.bf16.mxu0 0
        %4338 = vmatpush1.bf16.msra.mxu0 0
        %4339 = vmatprep.subr.bf16.mxu0 0
        %4340 = vmatpush1.bf16.msra.mxu0 0
        %4341 = vmatprep.mubr.bf16.mxu0 0
        %4342 = vmatmul.mubr.bf16.gmra.mrb[0].mxu0 %v4307
        %v4343 = vpop.f32.mrb[0].mxu0
        %v4344 = vadd.f32 %v4279, %v4343
        %v4345 = vpop.f32.mrb[0].mxu0
        %v4346 = vpop.f32.mrb[0].mxu0
        %v4347 = vpop.f32.mrb[0].mxu0
        %4348 = vdwg.mxu0
        %v4349 = vld [vmem:[%s1308] sm:$0x1]
        %v4350 = vld [vmem:[%s1311] sm:$0x1]
        %v4351 = vadd.f32 %v4196, %v4344
        %v4352 = vsel %vm1433, %v4351, 0.0
        %4353 = vadd.xlane.f32.xlu0 %v4352
        %v4354 = vpop.xlane.xlu0 %4353
        %v4355 = vmul.f32 %v4354, %v2735
        %v4356 = vsub.f32 %v4351, %v4355
        %v4357 = vmul.f32 %v4356, %v4356
        %v4358 = vsel %vm1433, %v4357, 0.0
        %4359 = vadd.xlane.f32.xlu0 %v4358
        %v4360 = vpop.xlane.xlu0 %4359
        %v4361 = vmul.f32 %v4360, %v2735
        %v4362 = vadd.f32 %v4361, 1e-05
        %v4363 = vrsqrt.pop %v4362
        %v4364 = vmul.f32 %v4356, %v4363
        %v4366 = vlaneseq
        %v4367 = vshrl.u32 %v4366, 7
        %v4368 = vsub.s32 0, %v4367
        %v4369 = vrot.slane %v4349, %v4368
        %v4371 = vmul.f32 %v4364, %v4369
        %v4373 = vlaneseq
        %v4374 = vshrl.u32 %v4373, 7
        %v4375 = vsub.s32 0, %v4374
        %v4376 = vrot.slane %v4350, %v4375
        %v4378 = vadd.f32 %v4371, %v4376
        %4379 = vst.msk [vmem:[#allocation2] sm:$0xff] %vm1433, %v4378
        %p4380 = scmp.eq.s32.totalorder %s47, 1
        // Predicated region
        $region137: #{tpu_custom_call.1} parent=131 // pred_check
          %p4381 = pneg %p4380
        $region138: #{tpu_custom_call.1} parent=131 // pred_check_branch
          %4383 = sbr.rel (%p4381) target = $region140
        $region139: #{tpu_custom_call.1} parent=131 // pred_region
          %v4384 = vpack.c.bf16 %v4378, %v4378
          %vm4385 = vcmask 257024
          %4386 = vst.msk [vmem:[%s1199] sm:$0xf] %vm4385, %v4384
        $region140: #{tpu_custom_call.1} parent=131 // pred_fallthru
          _
        %s4387 = sand.u32 %s790, 1
        %s4388 = scalar_lea.sflag [#allocation5], %s4387
        %s4389 = sand.u32 %s790, 1
        %s4390 = smul.addr %s4389, 4
        %s4391 = scalar_lea.vmem [#allocation4], %s4390
        // Predicated region
        $region141: #{tpu_custom_call.1} parent=131 // pred_check
          %p4392 = pneg %p800
        $region142: #{tpu_custom_call.1} parent=131 // pred_check_branch
          %4394 = sbr.rel (%p4392) target = $region144
        $region143: #{tpu_custom_call.1} parent=131 // pred_region
          %s4396 = ssub.s32 64, 64
          %4397 = vsyncadd %s4388, %s4396
          %s4398 = smul.addr %s46, 64
          %s4399 = scalar_lea.hbm %s28, %s4398
          %s4401 = sshll.u32 %s4391, 4
          %s4402 = int_to_ptr.vmem [resolvable:$true] %s4401
          %4404 = dma.vmem_to_hbm [thread:$0]  %s4402, 64, %s4399, %s4388
        $region144: #{tpu_custom_call.1} parent=131 // pred_fallthru
          _
      $region132: #{tpu_custom_call.1} parent=5 // pred_fallthru
        _
      %p4405 = scmp.le.s32.totalorder 2, %s37
      // Predicated region
      $region145: #{tpu_custom_call.1} parent=5 // pred_check
        %p4406 = pneg %p4405
      $region146: #{tpu_custom_call.1} parent=5 // pred_check_branch
        %4408 = sbr.rel (%p4406) target = $region148
      $region147: #{tpu_custom_call.1} parent=5 // pred_region
        %s4409 = ssub.s32 %s37, 2
        // Predicated region
        $region149: #{tpu_custom_call.1} parent=147 // pred_check
          %p4410 = pneg %p806
        $region150: #{tpu_custom_call.1} parent=147 // pred_check_branch
          %4412 = sbr.rel (%p4410) target = $region152
        $region151: #{tpu_custom_call.1} parent=147 // pred_region
          %s4413 = sand.u32 %s791, 1
          %s4414 = scalar_lea.sflag [#allocation5], %s4413
          %s4415 = sand.u32 %s791, 1
          %s4416 = smul.addr %s4415, 4
          %s4417 = scalar_lea.vmem [#allocation4], %s4416
          %4418 = dma.done %s4414, 64
        $region152: #{tpu_custom_call.1} parent=147 // pred_fallthru
          _
      $region148: #{tpu_custom_call.1} parent=5 // pred_fallthru
        _
    $region6: #{tpu_custom_call.1} parent=1 // loop_footer
      %s41 = sadd.s32 1, %s37
    $region7: #{tpu_custom_call.1} parent=1 // loop_footer_branch
      %36 = sbr.rel target = $region3
    $region8: #{tpu_custom_call.1} parent=1 // loop_exit
      _
    %4419 = vsyncpa [#allocation5], 1
    %s4420 = scalar_lea.sflag [#allocation5], 1
    %4421 = vsyncpa %s4420, 1

</llo_original>
